<compile_context>
chip_gen: v7x
topology: tpu7x:2x2x1
jax: 0.10.0
libtpu: 0.0.40
codegen_flags: <defaults>
</compile_context>

<pallas_src>
import jax
import jax.numpy as jnp
from jax.experimental import pallas as pl
from jax.experimental.pallas import tpu as pltpu

# ----------------------------- config (small, synthetic) -----------------------------
NUM_LAYERS = 2
BATCH = 2
N_VARS = 4          # channels
NUM_PATCHES = 8
D_MODEL = 32
EXPANSION = 2
LN_EPS = 1e-5

_PARAM_ORDER = ("ln1_g", "ln1_b",
                "pw1", "pb1", "pw2", "pb2", "pgw", "pgb",
                "ln2_g", "ln2_b",
                "fw1", "fb1", "fw2", "fb2", "fgw", "fgb")


# ----------------------------- shared math helpers -----------------------------
def _layernorm(x, g, b, eps=LN_EPS):
    mu = jnp.mean(x, axis=-1, keepdims=True)
    var = jnp.mean((x - mu) ** 2, axis=-1, keepdims=True)
    return (x - mu) * jax.lax.rsqrt(var + eps) * g + b


def _gelu_exact(x):
    # PyTorch F.gelu default = exact (erf) gelu.
    return 0.5 * x * (1.0 + jax.lax.erf(x * (1.0 / jnp.sqrt(2.0).astype(x.dtype))))


def _softmax_last_ref(x):
    m = jnp.max(x, axis=-1, keepdims=True)
    e = jnp.exp(x - m)
    return e / jnp.sum(e, axis=-1, keepdims=True)


def _softmax_last_kernel(x):
    m = jnp.max(x, axis=-1, keepdims=True)
    e = jnp.exp(x - m)
    # exact reciprocal (approx=True could violate the 2e-4 tolerance)
    return e * pl.reciprocal(jnp.sum(e, axis=-1, keepdims=True), approx=False)


# ----------------------------- Pallas kernel: full contrast block -----------------------------
def fused_contrast_block_kernel(x_ref,
                                ln1_g, ln1_b, pw1, pb1, pw2, pb2, pgw, pgb,
                                ln2_g, ln2_b, fw1, fb1, fw2, fb2, fgw, fgb,
                                hs_ref):
    bblk, n, d = x_ref.shape
    num_layers = pw1.shape[0]

    # Activation stays in VMEM / vregs for the whole block.
    x = x_ref[...].astype(jnp.float32).reshape(bblk * n, d)        # (BC/2*N, D)

    for l in range(num_layers):                                    # static unroll
        # ---------------- patch mixer (mix across num_patches) ----------------
        res = x
        h = _layernorm(x, ln1_g[l], ln1_b[l])                      # LN over d_model
        # one batched relayout for the whole half-block: (bblk,N,D) -> (bblk*D, N)
        ht = jnp.swapaxes(h.reshape(bblk, n, d), 1, 2).reshape(bblk * d, n)
        ht = jnp.dot(ht, pw1[l], preferred_element_type=jnp.float32) + pb1[l]
        ht = _gelu_exact(ht)
        ht = jnp.dot(ht, pw2[l], preferred_element_type=jnp.float32) + pb2[l]
        gate = _softmax_last_kernel(
            jnp.dot(ht, pgw[l], preferred_element_type=jnp.float32) + pgb[l])
        ht = ht * gate
        x = jnp.swapaxes(ht.reshape(bblk, d, n), 1, 2).reshape(bblk * n, d) + res

        # ---------------- feature mixer (mix across d_model) ----------------
        res = x
        h = _layernorm(x, ln2_g[l], ln2_b[l])
        h = jnp.dot(h, fw1[l], preferred_element_type=jnp.float32) + fb1[l]
        h = _gelu_exact(h)
        h = jnp.dot(h, fw2[l], preferred_element_type=jnp.float32) + fb2[l]
        gate = _softmax_last_kernel(
            jnp.dot(h, fgw[l], preferred_element_type=jnp.float32) + fgb[l])
        x = h * gate + res

        # ---------------- contrast-block L2 normalize over last dim ----------------
        x = x * jax.lax.rsqrt(jnp.sum(x * x, axis=-1, keepdims=True) + 1e-4)

        # store per-layer hidden state (last one is the embedding)
        hs_ref[l] = x.reshape(bblk, n, d).astype(hs_ref.dtype)


def contrast_block_pallas(h, stacked_params):
    """h: (BC, N, D) f32; stacked_params: dict of (L, r, c) f32 arrays.
    Returns all per-layer hidden states, shape (L, BC, N, D)."""
    bc, n, d = h.shape
    weights = [stacked_params[k] for k in _PARAM_ORDER]
    num_layers = weights[0].shape[0]

    # Two "parallel" halves so a v7x chip can use both TensorCores; on
    # single-TC chips (v5e/v6e) this is just 2 cheap grid steps.
    n_splits = 2 if bc % 2 == 0 else 1
    bblk = bc // n_splits

    in_specs = [pl.BlockSpec((bblk, n, d), lambda i: (i, 0, 0))]
    in_specs += [pl.BlockSpec(w.shape, lambda i: (0, 0, 0)) for w in weights]
    out_spec = pl.BlockSpec((num_layers, bblk, n, d), lambda i: (0, i, 0, 0))

    return pl.pallas_call(
        fused_contrast_block_kernel,
        out_shape=jax.ShapeDtypeStruct((num_layers, bc, n, d), jnp.float32),
        grid=(n_splits,),
        in_specs=in_specs,
        out_specs=out_spec,
        compiler_params=pltpu.CompilerParams(
            dimension_semantics=("parallel",)),
    )(h, *weights)


# ----------------------------- wrapper: PatchTSMixerContrastBlock.forward -----------------------------
def contrast_block_forward(hidden_state, params_list, output_hidden_states=False):
    """hidden_state: (B, C, N, D). Returns (embedding, all_hidden_states|None)."""
    b, c, n, d = hidden_state.shape
    h = hidden_state.reshape(b * c, n, d).astype(jnp.float32)
    stacked = {k: jnp.stack([p[k] for p in params_list]) for k in _PARAM_ORDER}
    hs = contrast_block_pallas(h, stacked)            # (L, B*C, N, D), fused kernel
    embedding = hs[-1].reshape(b, c, n, d)
    if output_hidden_states:
        all_hidden_states = [hs[l].reshape(b, c, n, d) for l in range(hs.shape[0])]
        return embedding, all_hidden_states
    return embedding, None


# ----------------------------- pure-JAX reference (for verification) -----------------------------
def _ref_layer(x, p):
    res = x
    h = _layernorm(x, p["ln1_g"], p["ln1_b"])
    ht = jnp.swapaxes(h, -1, -2)
    ht = _gelu_exact(ht @ p["pw1"] + p["pb1"]) @ p["pw2"] + p["pb2"]
    ht = ht * _softmax_last_ref(ht @ p["pgw"] + p["pgb"])
    x = jnp.swapaxes(ht, -1, -2) + res

    res = x
    h = _layernorm(x, p["ln2_g"], p["ln2_b"])
    h = _gelu_exact(h @ p["fw1"] + p["fb1"]) @ p["fw2"] + p["fb2"]
    h = h * _softmax_last_ref(h @ p["fgw"] + p["fgb"])
    x = h + res

    return x * jax.lax.rsqrt(jnp.sum(x * x, axis=-1, keepdims=True) + 1e-4)


def contrast_block_reference(hidden_state, params_list):
    h = hidden_state.astype(jnp.float32)
    for p in params_list:
        h = _ref_layer(h, p)
    return h


# ----------------------------- deterministic parameter init -----------------------------
def _linear(key, fan_in, fan_out):
    kw, kb = jax.random.split(key)
    bound = 1.0 / jnp.sqrt(float(fan_in))
    w = jax.random.uniform(kw, (fan_in, fan_out), jnp.float32, -bound, bound)
    b = jax.random.uniform(kb, (1, fan_out), jnp.float32, -bound, bound)
    return w, b


def make_layer_params(key, n, d, ef):
    keys = jax.random.split(key, 6)
    p = {}
    p["ln1_g"] = jnp.ones((1, d), jnp.float32)
    p["ln1_b"] = jnp.zeros((1, d), jnp.float32)
    p["pw1"], p["pb1"] = _linear(keys[0], n, n * ef)
    p["pw2"], p["pb2"] = _linear(keys[1], n * ef, n)
    p["pgw"], p["pgb"] = _linear(keys[2], n, n)
    p["ln2_g"] = jnp.ones((1, d), jnp.float32)
    p["ln2_b"] = jnp.zeros((1, d), jnp.float32)
    p["fw1"], p["fb1"] = _linear(keys[3], d, d * ef)
    p["fw2"], p["fb2"] = _linear(keys[4], d * ef, d)
    p["fgw"], p["fgb"] = _linear(keys[5], d, d)
    return p


# ----------------------------- main -----------------------------
if __name__ == "__main__":
    root = jax.random.PRNGKey(0)
    kx, kp = jax.random.split(root)

    hidden_state = jax.random.normal(
        kx, (BATCH, N_VARS, NUM_PATCHES, D_MODEL), jnp.float32)

    layer_keys = jax.random.split(kp, NUM_LAYERS)
    params_list = [make_layer_params(layer_keys[i], NUM_PATCHES, D_MODEL, EXPANSION)
                   for i in range(NUM_LAYERS)]

    emb, hidden_states = contrast_block_forward(hidden_state, params_list,
                                                output_hidden_states=True)
    emb = jax.block_until_ready(emb)

    ref = jax.block_until_ready(contrast_block_reference(hidden_state, params_list))

    assert emb.shape == hidden_state.shape
    assert len(hidden_states) == NUM_LAYERS
    assert bool(jnp.all(jnp.isfinite(emb)))
    assert bool(jnp.allclose(hidden_states[-1], emb))
    assert bool(jnp.allclose(emb, ref, rtol=2e-4, atol=2e-4)), \
        f"max abs diff {float(jnp.max(jnp.abs(emb - ref)))}"

    print("KERNEL_OK")
</pallas_src>

<mosaic_0001>
module attributes {stable_mosaic.version = 11 : i64} {
  func.func @fused_contrast_block_kernel(%arg0: i32, %arg1: memref<4x8x32xf32, #tpu.memory_space<vmem>>, %arg2: memref<2x1x32xf32, #tpu.memory_space<vmem>>, %arg3: memref<2x1x32xf32, #tpu.memory_space<vmem>>, %arg4: memref<2x8x16xf32, #tpu.memory_space<vmem>>, %arg5: memref<2x1x16xf32, #tpu.memory_space<vmem>>, %arg6: memref<2x16x8xf32, #tpu.memory_space<vmem>>, %arg7: memref<2x1x8xf32, #tpu.memory_space<vmem>>, %arg8: memref<2x8x8xf32, #tpu.memory_space<vmem>>, %arg9: memref<2x1x8xf32, #tpu.memory_space<vmem>>, %arg10: memref<2x1x32xf32, #tpu.memory_space<vmem>>, %arg11: memref<2x1x32xf32, #tpu.memory_space<vmem>>, %arg12: memref<2x32x64xf32, #tpu.memory_space<vmem>>, %arg13: memref<2x1x64xf32, #tpu.memory_space<vmem>>, %arg14: memref<2x64x32xf32, #tpu.memory_space<vmem>>, %arg15: memref<2x1x32xf32, #tpu.memory_space<vmem>>, %arg16: memref<2x32x32xf32, #tpu.memory_space<vmem>>, %arg17: memref<2x1x32xf32, #tpu.memory_space<vmem>>, %arg18: memref<2x4x8x32xf32, #tpu.memory_space<vmem>>) attributes {dimension_semantics = [#tpu.dimension_semantics<parallel>], iteration_bounds = array<i64: 2>, scalar_prefetch = 0 : i64, scratch_operands = 0 : i64, tpu.core_type = #tpu.core_type<tc>, window_params = [{transform_indices = @transform_0, window_bounds = array<i64: 4, 8, 32>}, {pipeline_mode = #tpu.pipeline_mode<synchronous>, transform_indices = @transform_1, window_bounds = array<i64: 2, 1, 32>}, {pipeline_mode = #tpu.pipeline_mode<synchronous>, transform_indices = @transform_2, window_bounds = array<i64: 2, 1, 32>}, {pipeline_mode = #tpu.pipeline_mode<synchronous>, transform_indices = @transform_3, window_bounds = array<i64: 2, 8, 16>}, {pipeline_mode = #tpu.pipeline_mode<synchronous>, transform_indices = @transform_4, window_bounds = array<i64: 2, 1, 16>}, {pipeline_mode = #tpu.pipeline_mode<synchronous>, transform_indices = @transform_5, window_bounds = array<i64: 2, 16, 8>}, {pipeline_mode = #tpu.pipeline_mode<synchronous>, transform_indices = @transform_6, window_bounds = array<i64: 2, 1, 8>}, {pipeline_mode = #tpu.pipeline_mode<synchronous>, transform_indices = @transform_7, window_bounds = array<i64: 2, 8, 8>}, {pipeline_mode = #tpu.pipeline_mode<synchronous>, transform_indices = @transform_8, window_bounds = array<i64: 2, 1, 8>}, {pipeline_mode = #tpu.pipeline_mode<synchronous>, transform_indices = @transform_9, window_bounds = array<i64: 2, 1, 32>}, {pipeline_mode = #tpu.pipeline_mode<synchronous>, transform_indices = @transform_10, window_bounds = array<i64: 2, 1, 32>}, {pipeline_mode = #tpu.pipeline_mode<synchronous>, transform_indices = @transform_11, window_bounds = array<i64: 2, 32, 64>}, {pipeline_mode = #tpu.pipeline_mode<synchronous>, transform_indices = @transform_12, window_bounds = array<i64: 2, 1, 64>}, {pipeline_mode = #tpu.pipeline_mode<synchronous>, transform_indices = @transform_13, window_bounds = array<i64: 2, 64, 32>}, {pipeline_mode = #tpu.pipeline_mode<synchronous>, transform_indices = @transform_14, window_bounds = array<i64: 2, 1, 32>}, {pipeline_mode = #tpu.pipeline_mode<synchronous>, transform_indices = @transform_15, window_bounds = array<i64: 2, 32, 32>}, {pipeline_mode = #tpu.pipeline_mode<synchronous>, transform_indices = @transform_16, window_bounds = array<i64: 2, 1, 32>}, {transform_indices = @transform_17, window_bounds = array<i64: 2, 4, 8, 32>}]} {
    %c0 = arith.constant 0 : index
    %c0_0 = arith.constant 0 : index
    %c0_1 = arith.constant 0 : index
    %0 = vector.load %arg1[%c0, %c0_0, %c0_1] : memref<4x8x32xf32, #tpu.memory_space<vmem>>, vector<4x8x32xf32>
    %1 = vector.shape_cast %0 : vector<4x8x32xf32> to vector<32x32xf32>
    %c0_2 = arith.constant 0 : index
    %c0_3 = arith.constant 0 : index
    %c0_4 = arith.constant 0 : index
    %2 = vector.load %arg2[%c0_2, %c0_3, %c0_4] : memref<2x1x32xf32, #tpu.memory_space<vmem>>, vector<1x1x32xf32>
    %3 = vector.shape_cast %2 : vector<1x1x32xf32> to vector<1x32xf32>
    %c0_5 = arith.constant 0 : index
    %c0_6 = arith.constant 0 : index
    %c0_7 = arith.constant 0 : index
    %4 = vector.load %arg3[%c0_5, %c0_6, %c0_7] : memref<2x1x32xf32, #tpu.memory_space<vmem>>, vector<1x1x32xf32>
    %5 = vector.shape_cast %4 : vector<1x1x32xf32> to vector<1x32xf32>
    %cst = arith.constant dense<0.000000e+00> : vector<32xf32>
    %6 = vector.multi_reduction <add>, %1, %cst [1] : vector<32x32xf32> to vector<32xf32>
    %7 = vector.shape_cast %6 : vector<32xf32> to vector<32x1xf32>
    %cst_8 = arith.constant 3.200000e+01 : f32
    %8 = vector.broadcast %cst_8 : f32 to vector<32x1xf32>
    %9 = arith.divf %7, %8 : vector<32x1xf32>
    %10 = vector.broadcast %9 : vector<32x1xf32> to vector<32x32xf32>
    %11 = arith.subf %1, %10 : vector<32x32xf32>
    %12 = arith.mulf %11, %11 : vector<32x32xf32>
    %cst_9 = arith.constant dense<0.000000e+00> : vector<32xf32>
    %13 = vector.multi_reduction <add>, %12, %cst_9 [1] : vector<32x32xf32> to vector<32xf32>
    %14 = vector.shape_cast %13 : vector<32xf32> to vector<32x1xf32>
    %cst_10 = arith.constant 3.200000e+01 : f32
    %15 = vector.broadcast %cst_10 : f32 to vector<32x1xf32>
    %16 = arith.divf %14, %15 : vector<32x1xf32>
    %17 = vector.broadcast %9 : vector<32x1xf32> to vector<32x32xf32>
    %18 = arith.subf %1, %17 : vector<32x32xf32>
    %cst_11 = arith.constant 9.99999974E-6 : f32
    %19 = vector.broadcast %cst_11 : f32 to vector<32x1xf32>
    %20 = arith.addf %16, %19 : vector<32x1xf32>
    %21 = math.rsqrt %20 : vector<32x1xf32>
    %22 = vector.broadcast %21 : vector<32x1xf32> to vector<32x32xf32>
    %23 = arith.mulf %18, %22 : vector<32x32xf32>
    %24 = vector.broadcast %3 : vector<1x32xf32> to vector<32x32xf32>
    %25 = arith.mulf %23, %24 : vector<32x32xf32>
    %26 = vector.broadcast %5 : vector<1x32xf32> to vector<32x32xf32>
    %27 = arith.addf %25, %26 : vector<32x32xf32>
    %28 = vector.shape_cast %27 : vector<32x32xf32> to vector<4x8x32xf32>
    %29 = tpu.transpose %28, [0, 2, 1] : vector<4x8x32xf32> -> vector<4x32x8xf32>
    %30 = vector.shape_cast %29 : vector<4x32x8xf32> to vector<128x8xf32>
    %c0_12 = arith.constant 0 : index
    %c0_13 = arith.constant 0 : index
    %c0_14 = arith.constant 0 : index
    %31 = vector.load %arg4[%c0_12, %c0_13, %c0_14] : memref<2x8x16xf32, #tpu.memory_space<vmem>>, vector<1x8x16xf32>
    %32 = vector.shape_cast %31 : vector<1x8x16xf32> to vector<8x16xf32>
    %cst_15 = arith.constant dense<0.000000e+00> : vector<128x16xf32>
    %33 = tpu.matmul %30, %32, %cst_15 {dimension_numbers = #tpu.dot_dimension_numbers<[1], [0], [0], [1], [0, 0, 1, 1], [], []>} : vector<128x8xf32>, vector<8x16xf32>, vector<128x16xf32> -> vector<128x16xf32>
    %c0_16 = arith.constant 0 : index
    %c0_17 = arith.constant 0 : index
    %c0_18 = arith.constant 0 : index
    %34 = vector.load %arg5[%c0_16, %c0_17, %c0_18] : memref<2x1x16xf32, #tpu.memory_space<vmem>>, vector<1x1x16xf32>
    %35 = vector.shape_cast %34 : vector<1x1x16xf32> to vector<1x16xf32>
    %36 = vector.broadcast %35 : vector<1x16xf32> to vector<128x16xf32>
    %37 = arith.addf %33, %36 : vector<128x16xf32>
    %cst_19 = arith.constant 5.000000e-01 : f32
    %38 = vector.broadcast %cst_19 : f32 to vector<128x16xf32>
    %39 = arith.mulf %38, %37 : vector<128x16xf32>
    %cst_20 = arith.constant 2.000000e+00 : f32
    %40 = math.sqrt %cst_20 : f32
    %cst_21 = arith.constant 1.000000e+00 : f32
    %41 = arith.divf %cst_21, %40 : f32
    %42 = vector.broadcast %41 : f32 to vector<128x16xf32>
    %43 = arith.mulf %37, %42 : vector<128x16xf32>
    %44 = math.erf %43 : vector<128x16xf32>
    %cst_22 = arith.constant 1.000000e+00 : f32
    %45 = vector.broadcast %cst_22 : f32 to vector<128x16xf32>
    %46 = arith.addf %45, %44 : vector<128x16xf32>
    %47 = arith.mulf %39, %46 : vector<128x16xf32>
    %c0_23 = arith.constant 0 : index
    %c0_24 = arith.constant 0 : index
    %c0_25 = arith.constant 0 : index
    %48 = vector.load %arg6[%c0_23, %c0_24, %c0_25] : memref<2x16x8xf32, #tpu.memory_space<vmem>>, vector<1x16x8xf32>
    %49 = vector.shape_cast %48 : vector<1x16x8xf32> to vector<16x8xf32>
    %cst_26 = arith.constant dense<0.000000e+00> : vector<128x8xf32>
    %50 = tpu.matmul %47, %49, %cst_26 {dimension_numbers = #tpu.dot_dimension_numbers<[1], [0], [0], [1], [0, 0, 1, 1], [], []>} : vector<128x16xf32>, vector<16x8xf32>, vector<128x8xf32> -> vector<128x8xf32>
    %c0_27 = arith.constant 0 : index
    %c0_28 = arith.constant 0 : index
    %c0_29 = arith.constant 0 : index
    %51 = vector.load %arg7[%c0_27, %c0_28, %c0_29] : memref<2x1x8xf32, #tpu.memory_space<vmem>>, vector<1x1x8xf32>
    %52 = vector.shape_cast %51 : vector<1x1x8xf32> to vector<1x8xf32>
    %53 = vector.broadcast %52 : vector<1x8xf32> to vector<128x8xf32>
    %54 = arith.addf %50, %53 : vector<128x8xf32>
    %c0_30 = arith.constant 0 : index
    %c0_31 = arith.constant 0 : index
    %c0_32 = arith.constant 0 : index
    %55 = vector.load %arg8[%c0_30, %c0_31, %c0_32] : memref<2x8x8xf32, #tpu.memory_space<vmem>>, vector<1x8x8xf32>
    %56 = vector.shape_cast %55 : vector<1x8x8xf32> to vector<8x8xf32>
    %cst_33 = arith.constant dense<0.000000e+00> : vector<128x8xf32>
    %57 = tpu.matmul %54, %56, %cst_33 {dimension_numbers = #tpu.dot_dimension_numbers<[1], [0], [0], [1], [0, 0, 1, 1], [], []>} : vector<128x8xf32>, vector<8x8xf32>, vector<128x8xf32> -> vector<128x8xf32>
    %c0_34 = arith.constant 0 : index
    %c0_35 = arith.constant 0 : index
    %c0_36 = arith.constant 0 : index
    %58 = vector.load %arg9[%c0_34, %c0_35, %c0_36] : memref<2x1x8xf32, #tpu.memory_space<vmem>>, vector<1x1x8xf32>
    %59 = vector.shape_cast %58 : vector<1x1x8xf32> to vector<1x8xf32>
    %60 = vector.broadcast %59 : vector<1x8xf32> to vector<128x8xf32>
    %61 = arith.addf %57, %60 : vector<128x8xf32>
    %cst_37 = arith.constant dense<0xFF800000> : vector<128xf32>
    %62 = vector.multi_reduction <maximumf>, %61, %cst_37 [1] : vector<128x8xf32> to vector<128xf32>
    %63 = vector.shape_cast %62 : vector<128xf32> to vector<128x1xf32>
    %64 = vector.broadcast %63 : vector<128x1xf32> to vector<128x8xf32>
    %65 = arith.subf %61, %64 : vector<128x8xf32>
    %66 = math.exp %65 : vector<128x8xf32>
    %cst_38 = arith.constant dense<0.000000e+00> : vector<128xf32>
    %67 = vector.multi_reduction <add>, %66, %cst_38 [1] : vector<128x8xf32> to vector<128xf32>
    %68 = vector.shape_cast %67 : vector<128xf32> to vector<128x1xf32>
    %69 = tpu.reciprocal %68 : vector<128x1xf32> -> vector<128x1xf32>
    %70 = vector.broadcast %69 : vector<128x1xf32> to vector<128x8xf32>
    %71 = arith.mulf %66, %70 : vector<128x8xf32>
    %72 = arith.mulf %54, %71 : vector<128x8xf32>
    %73 = vector.shape_cast %72 : vector<128x8xf32> to vector<4x32x8xf32>
    %74 = tpu.transpose %73, [0, 2, 1] : vector<4x32x8xf32> -> vector<4x8x32xf32>
    %75 = vector.shape_cast %74 : vector<4x8x32xf32> to vector<32x32xf32>
    %76 = arith.addf %75, %1 : vector<32x32xf32>
    %c0_39 = arith.constant 0 : index
    %c0_40 = arith.constant 0 : index
    %c0_41 = arith.constant 0 : index
    %77 = vector.load %arg10[%c0_39, %c0_40, %c0_41] : memref<2x1x32xf32, #tpu.memory_space<vmem>>, vector<1x1x32xf32>
    %78 = vector.shape_cast %77 : vector<1x1x32xf32> to vector<1x32xf32>
    %c0_42 = arith.constant 0 : index
    %c0_43 = arith.constant 0 : index
    %c0_44 = arith.constant 0 : index
    %79 = vector.load %arg11[%c0_42, %c0_43, %c0_44] : memref<2x1x32xf32, #tpu.memory_space<vmem>>, vector<1x1x32xf32>
    %80 = vector.shape_cast %79 : vector<1x1x32xf32> to vector<1x32xf32>
    %cst_45 = arith.constant dense<0.000000e+00> : vector<32xf32>
    %81 = vector.multi_reduction <add>, %76, %cst_45 [1] : vector<32x32xf32> to vector<32xf32>
    %82 = vector.shape_cast %81 : vector<32xf32> to vector<32x1xf32>
    %cst_46 = arith.constant 3.200000e+01 : f32
    %83 = vector.broadcast %cst_46 : f32 to vector<32x1xf32>
    %84 = arith.divf %82, %83 : vector<32x1xf32>
    %85 = vector.broadcast %84 : vector<32x1xf32> to vector<32x32xf32>
    %86 = arith.subf %76, %85 : vector<32x32xf32>
    %87 = arith.mulf %86, %86 : vector<32x32xf32>
    %cst_47 = arith.constant dense<0.000000e+00> : vector<32xf32>
    %88 = vector.multi_reduction <add>, %87, %cst_47 [1] : vector<32x32xf32> to vector<32xf32>
    %89 = vector.shape_cast %88 : vector<32xf32> to vector<32x1xf32>
    %cst_48 = arith.constant 3.200000e+01 : f32
    %90 = vector.broadcast %cst_48 : f32 to vector<32x1xf32>
    %91 = arith.divf %89, %90 : vector<32x1xf32>
    %92 = vector.broadcast %84 : vector<32x1xf32> to vector<32x32xf32>
    %93 = arith.subf %76, %92 : vector<32x32xf32>
    %cst_49 = arith.constant 9.99999974E-6 : f32
    %94 = vector.broadcast %cst_49 : f32 to vector<32x1xf32>
    %95 = arith.addf %91, %94 : vector<32x1xf32>
    %96 = math.rsqrt %95 : vector<32x1xf32>
    %97 = vector.broadcast %96 : vector<32x1xf32> to vector<32x32xf32>
    %98 = arith.mulf %93, %97 : vector<32x32xf32>
    %99 = vector.broadcast %78 : vector<1x32xf32> to vector<32x32xf32>
    %100 = arith.mulf %98, %99 : vector<32x32xf32>
    %101 = vector.broadcast %80 : vector<1x32xf32> to vector<32x32xf32>
    %102 = arith.addf %100, %101 : vector<32x32xf32>
    %c0_50 = arith.constant 0 : index
    %c0_51 = arith.constant 0 : index
    %c0_52 = arith.constant 0 : index
    %103 = vector.load %arg12[%c0_50, %c0_51, %c0_52] : memref<2x32x64xf32, #tpu.memory_space<vmem>>, vector<1x32x64xf32>
    %104 = vector.shape_cast %103 : vector<1x32x64xf32> to vector<32x64xf32>
    %cst_53 = arith.constant dense<0.000000e+00> : vector<32x64xf32>
    %105 = tpu.matmul %102, %104, %cst_53 {dimension_numbers = #tpu.dot_dimension_numbers<[1], [0], [0], [1], [0, 0, 1, 1], [], []>} : vector<32x32xf32>, vector<32x64xf32>, vector<32x64xf32> -> vector<32x64xf32>
    %c0_54 = arith.constant 0 : index
    %c0_55 = arith.constant 0 : index
    %c0_56 = arith.constant 0 : index
    %106 = vector.load %arg13[%c0_54, %c0_55, %c0_56] : memref<2x1x64xf32, #tpu.memory_space<vmem>>, vector<1x1x64xf32>
    %107 = vector.shape_cast %106 : vector<1x1x64xf32> to vector<1x64xf32>
    %108 = vector.broadcast %107 : vector<1x64xf32> to vector<32x64xf32>
    %109 = arith.addf %105, %108 : vector<32x64xf32>
    %cst_57 = arith.constant 5.000000e-01 : f32
    %110 = vector.broadcast %cst_57 : f32 to vector<32x64xf32>
    %111 = arith.mulf %110, %109 : vector<32x64xf32>
    %cst_58 = arith.constant 2.000000e+00 : f32
    %112 = math.sqrt %cst_58 : f32
    %cst_59 = arith.constant 1.000000e+00 : f32
    %113 = arith.divf %cst_59, %112 : f32
    %114 = vector.broadcast %113 : f32 to vector<32x64xf32>
    %115 = arith.mulf %109, %114 : vector<32x64xf32>
    %116 = math.erf %115 : vector<32x64xf32>
    %cst_60 = arith.constant 1.000000e+00 : f32
    %117 = vector.broadcast %cst_60 : f32 to vector<32x64xf32>
    %118 = arith.addf %117, %116 : vector<32x64xf32>
    %119 = arith.mulf %111, %118 : vector<32x64xf32>
    %c0_61 = arith.constant 0 : index
    %c0_62 = arith.constant 0 : index
    %c0_63 = arith.constant 0 : index
    %120 = vector.load %arg14[%c0_61, %c0_62, %c0_63] : memref<2x64x32xf32, #tpu.memory_space<vmem>>, vector<1x64x32xf32>
    %121 = vector.shape_cast %120 : vector<1x64x32xf32> to vector<64x32xf32>
    %cst_64 = arith.constant dense<0.000000e+00> : vector<32x32xf32>
    %122 = tpu.matmul %119, %121, %cst_64 {dimension_numbers = #tpu.dot_dimension_numbers<[1], [0], [0], [1], [0, 0, 1, 1], [], []>} : vector<32x64xf32>, vector<64x32xf32>, vector<32x32xf32> -> vector<32x32xf32>
    %c0_65 = arith.constant 0 : index
    %c0_66 = arith.constant 0 : index
    %c0_67 = arith.constant 0 : index
    %123 = vector.load %arg15[%c0_65, %c0_66, %c0_67] : memref<2x1x32xf32, #tpu.memory_space<vmem>>, vector<1x1x32xf32>
    %124 = vector.shape_cast %123 : vector<1x1x32xf32> to vector<1x32xf32>
    %125 = vector.broadcast %124 : vector<1x32xf32> to vector<32x32xf32>
    %126 = arith.addf %122, %125 : vector<32x32xf32>
    %c0_68 = arith.constant 0 : index
    %c0_69 = arith.constant 0 : index
    %c0_70 = arith.constant 0 : index
    %127 = vector.load %arg16[%c0_68, %c0_69, %c0_70] : memref<2x32x32xf32, #tpu.memory_space<vmem>>, vector<1x32x32xf32>
    %128 = vector.shape_cast %127 : vector<1x32x32xf32> to vector<32x32xf32>
    %cst_71 = arith.constant dense<0.000000e+00> : vector<32x32xf32>
    %129 = tpu.matmul %126, %128, %cst_71 {dimension_numbers = #tpu.dot_dimension_numbers<[1], [0], [0], [1], [0, 0, 1, 1], [], []>} : vector<32x32xf32>, vector<32x32xf32>, vector<32x32xf32> -> vector<32x32xf32>
    %c0_72 = arith.constant 0 : index
    %c0_73 = arith.constant 0 : index
    %c0_74 = arith.constant 0 : index
    %130 = vector.load %arg17[%c0_72, %c0_73, %c0_74] : memref<2x1x32xf32, #tpu.memory_space<vmem>>, vector<1x1x32xf32>
    %131 = vector.shape_cast %130 : vector<1x1x32xf32> to vector<1x32xf32>
    %132 = vector.broadcast %131 : vector<1x32xf32> to vector<32x32xf32>
    %133 = arith.addf %129, %132 : vector<32x32xf32>
    %cst_75 = arith.constant dense<0xFF800000> : vector<32xf32>
    %134 = vector.multi_reduction <maximumf>, %133, %cst_75 [1] : vector<32x32xf32> to vector<32xf32>
    %135 = vector.shape_cast %134 : vector<32xf32> to vector<32x1xf32>
    %136 = vector.broadcast %135 : vector<32x1xf32> to vector<32x32xf32>
    %137 = arith.subf %133, %136 : vector<32x32xf32>
    %138 = math.exp %137 : vector<32x32xf32>
    %cst_76 = arith.constant dense<0.000000e+00> : vector<32xf32>
    %139 = vector.multi_reduction <add>, %138, %cst_76 [1] : vector<32x32xf32> to vector<32xf32>
    %140 = vector.shape_cast %139 : vector<32xf32> to vector<32x1xf32>
    %141 = tpu.reciprocal %140 : vector<32x1xf32> -> vector<32x1xf32>
    %142 = vector.broadcast %141 : vector<32x1xf32> to vector<32x32xf32>
    %143 = arith.mulf %138, %142 : vector<32x32xf32>
    %144 = arith.mulf %126, %143 : vector<32x32xf32>
    %145 = arith.addf %144, %76 : vector<32x32xf32>
    %146 = arith.mulf %145, %145 : vector<32x32xf32>
    %cst_77 = arith.constant dense<0.000000e+00> : vector<32xf32>
    %147 = vector.multi_reduction <add>, %146, %cst_77 [1] : vector<32x32xf32> to vector<32xf32>
    %148 = vector.shape_cast %147 : vector<32xf32> to vector<32x1xf32>
    %cst_78 = arith.constant 9.99999974E-5 : f32
    %149 = vector.broadcast %cst_78 : f32 to vector<32x1xf32>
    %150 = arith.addf %148, %149 : vector<32x1xf32>
    %151 = math.rsqrt %150 : vector<32x1xf32>
    %152 = vector.broadcast %151 : vector<32x1xf32> to vector<32x32xf32>
    %153 = arith.mulf %145, %152 : vector<32x32xf32>
    %154 = vector.shape_cast %153 : vector<32x32xf32> to vector<4x8x32xf32>
    %c0_79 = arith.constant 0 : index
    %c0_80 = arith.constant 0 : index
    %c0_81 = arith.constant 0 : index
    %c0_82 = arith.constant 0 : index
    %155 = vector.load %arg18[%c0_79, %c0_80, %c0_81, %c0_82] : memref<2x4x8x32xf32, #tpu.memory_space<vmem>>, vector<1x4x8x32xf32>
    %156 = vector.shape_cast %155 : vector<1x4x8x32xf32> to vector<4x8x32xf32>
    %157 = vector.shape_cast %154 : vector<4x8x32xf32> to vector<1x4x8x32xf32>
    tpu.vector_store %arg18[%c0_79, %c0_80, %c0_81, %c0_82], %157 {strides = array<i32>} : memref<2x4x8x32xf32, #tpu.memory_space<vmem>>, vector<1x4x8x32xf32>,
    %c1 = arith.constant 1 : index
    %c0_83 = arith.constant 0 : index
    %c0_84 = arith.constant 0 : index
    %158 = vector.load %arg2[%c1, %c0_83, %c0_84] : memref<2x1x32xf32, #tpu.memory_space<vmem>>, vector<1x1x32xf32>
    %159 = vector.shape_cast %158 : vector<1x1x32xf32> to vector<1x32xf32>
    %c1_85 = arith.constant 1 : index
    %c0_86 = arith.constant 0 : index
    %c0_87 = arith.constant 0 : index
    %160 = vector.load %arg3[%c1_85, %c0_86, %c0_87] : memref<2x1x32xf32, #tpu.memory_space<vmem>>, vector<1x1x32xf32>
    %161 = vector.shape_cast %160 : vector<1x1x32xf32> to vector<1x32xf32>
    %cst_88 = arith.constant dense<0.000000e+00> : vector<32xf32>
    %162 = vector.multi_reduction <add>, %153, %cst_88 [1] : vector<32x32xf32> to vector<32xf32>
    %163 = vector.shape_cast %162 : vector<32xf32> to vector<32x1xf32>
    %cst_89 = arith.constant 3.200000e+01 : f32
    %164 = vector.broadcast %cst_89 : f32 to vector<32x1xf32>
    %165 = arith.divf %163, %164 : vector<32x1xf32>
    %166 = vector.broadcast %165 : vector<32x1xf32> to vector<32x32xf32>
    %167 = arith.subf %153, %166 : vector<32x32xf32>
    %168 = arith.mulf %167, %167 : vector<32x32xf32>
    %cst_90 = arith.constant dense<0.000000e+00> : vector<32xf32>
    %169 = vector.multi_reduction <add>, %168, %cst_90 [1] : vector<32x32xf32> to vector<32xf32>
    %170 = vector.shape_cast %169 : vector<32xf32> to vector<32x1xf32>
    %cst_91 = arith.constant 3.200000e+01 : f32
    %171 = vector.broadcast %cst_91 : f32 to vector<32x1xf32>
    %172 = arith.divf %170, %171 : vector<32x1xf32>
    %173 = vector.broadcast %165 : vector<32x1xf32> to vector<32x32xf32>
    %174 = arith.subf %153, %173 : vector<32x32xf32>
    %cst_92 = arith.constant 9.99999974E-6 : f32
    %175 = vector.broadcast %cst_92 : f32 to vector<32x1xf32>
    %176 = arith.addf %172, %175 : vector<32x1xf32>
    %177 = math.rsqrt %176 : vector<32x1xf32>
    %178 = vector.broadcast %177 : vector<32x1xf32> to vector<32x32xf32>
    %179 = arith.mulf %174, %178 : vector<32x32xf32>
    %180 = vector.broadcast %159 : vector<1x32xf32> to vector<32x32xf32>
    %181 = arith.mulf %179, %180 : vector<32x32xf32>
    %182 = vector.broadcast %161 : vector<1x32xf32> to vector<32x32xf32>
    %183 = arith.addf %181, %182 : vector<32x32xf32>
    %184 = vector.shape_cast %183 : vector<32x32xf32> to vector<4x8x32xf32>
    %185 = tpu.transpose %184, [0, 2, 1] : vector<4x8x32xf32> -> vector<4x32x8xf32>
    %186 = vector.shape_cast %185 : vector<4x32x8xf32> to vector<128x8xf32>
    %c1_93 = arith.constant 1 : index
    %c0_94 = arith.constant 0 : index
    %c0_95 = arith.constant 0 : index
    %187 = vector.load %arg4[%c1_93, %c0_94, %c0_95] : memref<2x8x16xf32, #tpu.memory_space<vmem>>, vector<1x8x16xf32>
    %188 = vector.shape_cast %187 : vector<1x8x16xf32> to vector<8x16xf32>
    %cst_96 = arith.constant dense<0.000000e+00> : vector<128x16xf32>
    %189 = tpu.matmul %186, %188, %cst_96 {dimension_numbers = #tpu.dot_dimension_numbers<[1], [0], [0], [1], [0, 0, 1, 1], [], []>} : vector<128x8xf32>, vector<8x16xf32>, vector<128x16xf32> -> vector<128x16xf32>
    %c1_97 = arith.constant 1 : index
    %c0_98 = arith.constant 0 : index
    %c0_99 = arith.constant 0 : index
    %190 = vector.load %arg5[%c1_97, %c0_98, %c0_99] : memref<2x1x16xf32, #tpu.memory_space<vmem>>, vector<1x1x16xf32>
    %191 = vector.shape_cast %190 : vector<1x1x16xf32> to vector<1x16xf32>
    %192 = vector.broadcast %191 : vector<1x16xf32> to vector<128x16xf32>
    %193 = arith.addf %189, %192 : vector<128x16xf32>
    %cst_100 = arith.constant 5.000000e-01 : f32
    %194 = vector.broadcast %cst_100 : f32 to vector<128x16xf32>
    %195 = arith.mulf %194, %193 : vector<128x16xf32>
    %cst_101 = arith.constant 2.000000e+00 : f32
    %196 = math.sqrt %cst_101 : f32
    %cst_102 = arith.constant 1.000000e+00 : f32
    %197 = arith.divf %cst_102, %196 : f32
    %198 = vector.broadcast %197 : f32 to vector<128x16xf32>
    %199 = arith.mulf %193, %198 : vector<128x16xf32>
    %200 = math.erf %199 : vector<128x16xf32>
    %cst_103 = arith.constant 1.000000e+00 : f32
    %201 = vector.broadcast %cst_103 : f32 to vector<128x16xf32>
    %202 = arith.addf %201, %200 : vector<128x16xf32>
    %203 = arith.mulf %195, %202 : vector<128x16xf32>
    %c1_104 = arith.constant 1 : index
    %c0_105 = arith.constant 0 : index
    %c0_106 = arith.constant 0 : index
    %204 = vector.load %arg6[%c1_104, %c0_105, %c0_106] : memref<2x16x8xf32, #tpu.memory_space<vmem>>, vector<1x16x8xf32>
    %205 = vector.shape_cast %204 : vector<1x16x8xf32> to vector<16x8xf32>
    %cst_107 = arith.constant dense<0.000000e+00> : vector<128x8xf32>
    %206 = tpu.matmul %203, %205, %cst_107 {dimension_numbers = #tpu.dot_dimension_numbers<[1], [0], [0], [1], [0, 0, 1, 1], [], []>} : vector<128x16xf32>, vector<16x8xf32>, vector<128x8xf32> -> vector<128x8xf32>
    %c1_108 = arith.constant 1 : index
    %c0_109 = arith.constant 0 : index
    %c0_110 = arith.constant 0 : index
    %207 = vector.load %arg7[%c1_108, %c0_109, %c0_110] : memref<2x1x8xf32, #tpu.memory_space<vmem>>, vector<1x1x8xf32>
    %208 = vector.shape_cast %207 : vector<1x1x8xf32> to vector<1x8xf32>
    %209 = vector.broadcast %208 : vector<1x8xf32> to vector<128x8xf32>
    %210 = arith.addf %206, %209 : vector<128x8xf32>
    %c1_111 = arith.constant 1 : index
    %c0_112 = arith.constant 0 : index
    %c0_113 = arith.constant 0 : index
    %211 = vector.load %arg8[%c1_111, %c0_112, %c0_113] : memref<2x8x8xf32, #tpu.memory_space<vmem>>, vector<1x8x8xf32>
    %212 = vector.shape_cast %211 : vector<1x8x8xf32> to vector<8x8xf32>
    %cst_114 = arith.constant dense<0.000000e+00> : vector<128x8xf32>
    %213 = tpu.matmul %210, %212, %cst_114 {dimension_numbers = #tpu.dot_dimension_numbers<[1], [0], [0], [1], [0, 0, 1, 1], [], []>} : vector<128x8xf32>, vector<8x8xf32>, vector<128x8xf32> -> vector<128x8xf32>
    %c1_115 = arith.constant 1 : index
    %c0_116 = arith.constant 0 : index
    %c0_117 = arith.constant 0 : index
    %214 = vector.load %arg9[%c1_115, %c0_116, %c0_117] : memref<2x1x8xf32, #tpu.memory_space<vmem>>, vector<1x1x8xf32>
    %215 = vector.shape_cast %214 : vector<1x1x8xf32> to vector<1x8xf32>
    %216 = vector.broadcast %215 : vector<1x8xf32> to vector<128x8xf32>
    %217 = arith.addf %213, %216 : vector<128x8xf32>
    %cst_118 = arith.constant dense<0xFF800000> : vector<128xf32>
    %218 = vector.multi_reduction <maximumf>, %217, %cst_118 [1] : vector<128x8xf32> to vector<128xf32>
    %219 = vector.shape_cast %218 : vector<128xf32> to vector<128x1xf32>
    %220 = vector.broadcast %219 : vector<128x1xf32> to vector<128x8xf32>
    %221 = arith.subf %217, %220 : vector<128x8xf32>
    %222 = math.exp %221 : vector<128x8xf32>
    %cst_119 = arith.constant dense<0.000000e+00> : vector<128xf32>
    %223 = vector.multi_reduction <add>, %222, %cst_119 [1] : vector<128x8xf32> to vector<128xf32>
    %224 = vector.shape_cast %223 : vector<128xf32> to vector<128x1xf32>
    %225 = tpu.reciprocal %224 : vector<128x1xf32> -> vector<128x1xf32>
    %226 = vector.broadcast %225 : vector<128x1xf32> to vector<128x8xf32>
    %227 = arith.mulf %222, %226 : vector<128x8xf32>
    %228 = arith.mulf %210, %227 : vector<128x8xf32>
    %229 = vector.shape_cast %228 : vector<128x8xf32> to vector<4x32x8xf32>
    %230 = tpu.transpose %229, [0, 2, 1] : vector<4x32x8xf32> -> vector<4x8x32xf32>
    %231 = vector.shape_cast %230 : vector<4x8x32xf32> to vector<32x32xf32>
    %232 = arith.addf %231, %153 : vector<32x32xf32>
    %c1_120 = arith.constant 1 : index
    %c0_121 = arith.constant 0 : index
    %c0_122 = arith.constant 0 : index
    %233 = vector.load %arg10[%c1_120, %c0_121, %c0_122] : memref<2x1x32xf32, #tpu.memory_space<vmem>>, vector<1x1x32xf32>
    %234 = vector.shape_cast %233 : vector<1x1x32xf32> to vector<1x32xf32>
    %c1_123 = arith.constant 1 : index
    %c0_124 = arith.constant 0 : index
    %c0_125 = arith.constant 0 : index
    %235 = vector.load %arg11[%c1_123, %c0_124, %c0_125] : memref<2x1x32xf32, #tpu.memory_space<vmem>>, vector<1x1x32xf32>
    %236 = vector.shape_cast %235 : vector<1x1x32xf32> to vector<1x32xf32>
    %cst_126 = arith.constant dense<0.000000e+00> : vector<32xf32>
    %237 = vector.multi_reduction <add>, %232, %cst_126 [1] : vector<32x32xf32> to vector<32xf32>
    %238 = vector.shape_cast %237 : vector<32xf32> to vector<32x1xf32>
    %cst_127 = arith.constant 3.200000e+01 : f32
    %239 = vector.broadcast %cst_127 : f32 to vector<32x1xf32>
    %240 = arith.divf %238, %239 : vector<32x1xf32>
    %241 = vector.broadcast %240 : vector<32x1xf32> to vector<32x32xf32>
    %242 = arith.subf %232, %241 : vector<32x32xf32>
    %243 = arith.mulf %242, %242 : vector<32x32xf32>
    %cst_128 = arith.constant dense<0.000000e+00> : vector<32xf32>
    %244 = vector.multi_reduction <add>, %243, %cst_128 [1] : vector<32x32xf32> to vector<32xf32>
    %245 = vector.shape_cast %244 : vector<32xf32> to vector<32x1xf32>
    %cst_129 = arith.constant 3.200000e+01 : f32
    %246 = vector.broadcast %cst_129 : f32 to vector<32x1xf32>
    %247 = arith.divf %245, %246 : vector<32x1xf32>
    %248 = vector.broadcast %240 : vector<32x1xf32> to vector<32x32xf32>
    %249 = arith.subf %232, %248 : vector<32x32xf32>
    %cst_130 = arith.constant 9.99999974E-6 : f32
    %250 = vector.broadcast %cst_130 : f32 to vector<32x1xf32>
    %251 = arith.addf %247, %250 : vector<32x1xf32>
    %252 = math.rsqrt %251 : vector<32x1xf32>
    %253 = vector.broadcast %252 : vector<32x1xf32> to vector<32x32xf32>
    %254 = arith.mulf %249, %253 : vector<32x32xf32>
    %255 = vector.broadcast %234 : vector<1x32xf32> to vector<32x32xf32>
    %256 = arith.mulf %254, %255 : vector<32x32xf32>
    %257 = vector.broadcast %236 : vector<1x32xf32> to vector<32x32xf32>
    %258 = arith.addf %256, %257 : vector<32x32xf32>
    %c1_131 = arith.constant 1 : index
    %c0_132 = arith.constant 0 : index
    %c0_133 = arith.constant 0 : index
    %259 = vector.load %arg12[%c1_131, %c0_132, %c0_133] : memref<2x32x64xf32, #tpu.memory_space<vmem>>, vector<1x32x64xf32>
    %260 = vector.shape_cast %259 : vector<1x32x64xf32> to vector<32x64xf32>
    %cst_134 = arith.constant dense<0.000000e+00> : vector<32x64xf32>
    %261 = tpu.matmul %258, %260, %cst_134 {dimension_numbers = #tpu.dot_dimension_numbers<[1], [0], [0], [1], [0, 0, 1, 1], [], []>} : vector<32x32xf32>, vector<32x64xf32>, vector<32x64xf32> -> vector<32x64xf32>
    %c1_135 = arith.constant 1 : index
    %c0_136 = arith.constant 0 : index
    %c0_137 = arith.constant 0 : index
    %262 = vector.load %arg13[%c1_135, %c0_136, %c0_137] : memref<2x1x64xf32, #tpu.memory_space<vmem>>, vector<1x1x64xf32>
    %263 = vector.shape_cast %262 : vector<1x1x64xf32> to vector<1x64xf32>
    %264 = vector.broadcast %263 : vector<1x64xf32> to vector<32x64xf32>
    %265 = arith.addf %261, %264 : vector<32x64xf32>
    %cst_138 = arith.constant 5.000000e-01 : f32
    %266 = vector.broadcast %cst_138 : f32 to vector<32x64xf32>
    %267 = arith.mulf %266, %265 : vector<32x64xf32>
    %cst_139 = arith.constant 2.000000e+00 : f32
    %268 = math.sqrt %cst_139 : f32
    %cst_140 = arith.constant 1.000000e+00 : f32
    %269 = arith.divf %cst_140, %268 : f32
    %270 = vector.broadcast %269 : f32 to vector<32x64xf32>
    %271 = arith.mulf %265, %270 : vector<32x64xf32>
    %272 = math.erf %271 : vector<32x64xf32>
    %cst_141 = arith.constant 1.000000e+00 : f32
    %273 = vector.broadcast %cst_141 : f32 to vector<32x64xf32>
    %274 = arith.addf %273, %272 : vector<32x64xf32>
    %275 = arith.mulf %267, %274 : vector<32x64xf32>
    %c1_142 = arith.constant 1 : index
    %c0_143 = arith.constant 0 : index
    %c0_144 = arith.constant 0 : index
    %276 = vector.load %arg14[%c1_142, %c0_143, %c0_144] : memref<2x64x32xf32, #tpu.memory_space<vmem>>, vector<1x64x32xf32>
    %277 = vector.shape_cast %276 : vector<1x64x32xf32> to vector<64x32xf32>
    %cst_145 = arith.constant dense<0.000000e+00> : vector<32x32xf32>
    %278 = tpu.matmul %275, %277, %cst_145 {dimension_numbers = #tpu.dot_dimension_numbers<[1], [0], [0], [1], [0, 0, 1, 1], [], []>} : vector<32x64xf32>, vector<64x32xf32>, vector<32x32xf32> -> vector<32x32xf32>
    %c1_146 = arith.constant 1 : index
    %c0_147 = arith.constant 0 : index
    %c0_148 = arith.constant 0 : index
    %279 = vector.load %arg15[%c1_146, %c0_147, %c0_148] : memref<2x1x32xf32, #tpu.memory_space<vmem>>, vector<1x1x32xf32>
    %280 = vector.shape_cast %279 : vector<1x1x32xf32> to vector<1x32xf32>
    %281 = vector.broadcast %280 : vector<1x32xf32> to vector<32x32xf32>
    %282 = arith.addf %278, %281 : vector<32x32xf32>
    %c1_149 = arith.constant 1 : index
    %c0_150 = arith.constant 0 : index
    %c0_151 = arith.constant 0 : index
    %283 = vector.load %arg16[%c1_149, %c0_150, %c0_151] : memref<2x32x32xf32, #tpu.memory_space<vmem>>, vector<1x32x32xf32>
    %284 = vector.shape_cast %283 : vector<1x32x32xf32> to vector<32x32xf32>
    %cst_152 = arith.constant dense<0.000000e+00> : vector<32x32xf32>
    %285 = tpu.matmul %282, %284, %cst_152 {dimension_numbers = #tpu.dot_dimension_numbers<[1], [0], [0], [1], [0, 0, 1, 1], [], []>} : vector<32x32xf32>, vector<32x32xf32>, vector<32x32xf32> -> vector<32x32xf32>
    %c1_153 = arith.constant 1 : index
    %c0_154 = arith.constant 0 : index
    %c0_155 = arith.constant 0 : index
    %286 = vector.load %arg17[%c1_153, %c0_154, %c0_155] : memref<2x1x32xf32, #tpu.memory_space<vmem>>, vector<1x1x32xf32>
    %287 = vector.shape_cast %286 : vector<1x1x32xf32> to vector<1x32xf32>
    %288 = vector.broadcast %287 : vector<1x32xf32> to vector<32x32xf32>
    %289 = arith.addf %285, %288 : vector<32x32xf32>
    %cst_156 = arith.constant dense<0xFF800000> : vector<32xf32>
    %290 = vector.multi_reduction <maximumf>, %289, %cst_156 [1] : vector<32x32xf32> to vector<32xf32>
    %291 = vector.shape_cast %290 : vector<32xf32> to vector<32x1xf32>
    %292 = vector.broadcast %291 : vector<32x1xf32> to vector<32x32xf32>
    %293 = arith.subf %289, %292 : vector<32x32xf32>
    %294 = math.exp %293 : vector<32x32xf32>
    %cst_157 = arith.constant dense<0.000000e+00> : vector<32xf32>
    %295 = vector.multi_reduction <add>, %294, %cst_157 [1] : vector<32x32xf32> to vector<32xf32>
    %296 = vector.shape_cast %295 : vector<32xf32> to vector<32x1xf32>
    %297 = tpu.reciprocal %296 : vector<32x1xf32> -> vector<32x1xf32>
    %298 = vector.broadcast %297 : vector<32x1xf32> to vector<32x32xf32>
    %299 = arith.mulf %294, %298 : vector<32x32xf32>
    %300 = arith.mulf %282, %299 : vector<32x32xf32>
    %301 = arith.addf %300, %232 : vector<32x32xf32>
    %302 = arith.mulf %301, %301 : vector<32x32xf32>
    %cst_158 = arith.constant dense<0.000000e+00> : vector<32xf32>
    %303 = vector.multi_reduction <add>, %302, %cst_158 [1] : vector<32x32xf32> to vector<32xf32>
    %304 = vector.shape_cast %303 : vector<32xf32> to vector<32x1xf32>
    %cst_159 = arith.constant 9.99999974E-5 : f32
    %305 = vector.broadcast %cst_159 : f32 to vector<32x1xf32>
    %306 = arith.addf %304, %305 : vector<32x1xf32>
    %307 = math.rsqrt %306 : vector<32x1xf32>
    %308 = vector.broadcast %307 : vector<32x1xf32> to vector<32x32xf32>
    %309 = arith.mulf %301, %308 : vector<32x32xf32>
    %310 = vector.shape_cast %309 : vector<32x32xf32> to vector<4x8x32xf32>
    %c1_160 = arith.constant 1 : index
    %c0_161 = arith.constant 0 : index
    %c0_162 = arith.constant 0 : index
    %c0_163 = arith.constant 0 : index
    %311 = vector.load %arg18[%c1_160, %c0_161, %c0_162, %c0_163] : memref<2x4x8x32xf32, #tpu.memory_space<vmem>>, vector<1x4x8x32xf32>
    %312 = vector.shape_cast %311 : vector<1x4x8x32xf32> to vector<4x8x32xf32>
    %313 = vector.shape_cast %310 : vector<4x8x32xf32> to vector<1x4x8x32xf32>
    tpu.vector_store %arg18[%c1_160, %c0_161, %c0_162, %c0_163], %313 {strides = array<i32>} : memref<2x4x8x32xf32, #tpu.memory_space<vmem>>, vector<1x4x8x32xf32>,
    return
  }
  func.func @transform_0(%arg0: i32) -> (i32, i32, i32) {
    %c0_i32 = arith.constant 0 : i32
    %c0_i32_0 = arith.constant 0 : i32
    %c0_i32_1 = arith.constant 0 : i32
    return %arg0, %c0_i32, %c0_i32_0 : i32, i32, i32
  }
  func.func @transform_1(%arg0: i32) -> (i32, i32, i32) {
    %c0_i32 = arith.constant 0 : i32
    %c0_i32_0 = arith.constant 0 : i32
    %c0_i32_1 = arith.constant 0 : i32
    %c0_i32_2 = arith.constant 0 : i32
    return %c0_i32, %c0_i32_0, %c0_i32_1 : i32, i32, i32
  }
  func.func @transform_2(%arg0: i32) -> (i32, i32, i32) {
    %c0_i32 = arith.constant 0 : i32
    %c0_i32_0 = arith.constant 0 : i32
    %c0_i32_1 = arith.constant 0 : i32
    %c0_i32_2 = arith.constant 0 : i32
    return %c0_i32, %c0_i32_0, %c0_i32_1 : i32, i32, i32
  }
  func.func @transform_3(%arg0: i32) -> (i32, i32, i32) {
    %c0_i32 = arith.constant 0 : i32
    %c0_i32_0 = arith.constant 0 : i32
    %c0_i32_1 = arith.constant 0 : i32
    %c0_i32_2 = arith.constant 0 : i32
    return %c0_i32, %c0_i32_0, %c0_i32_1 : i32, i32, i32
  }
  func.func @transform_4(%arg0: i32) -> (i32, i32, i32) {
    %c0_i32 = arith.constant 0 : i32
    %c0_i32_0 = arith.constant 0 : i32
    %c0_i32_1 = arith.constant 0 : i32
    %c0_i32_2 = arith.constant 0 : i32
    return %c0_i32, %c0_i32_0, %c0_i32_1 : i32, i32, i32
  }
  func.func @transform_5(%arg0: i32) -> (i32, i32, i32) {
    %c0_i32 = arith.constant 0 : i32
    %c0_i32_0 = arith.constant 0 : i32
    %c0_i32_1 = arith.constant 0 : i32
    %c0_i32_2 = arith.constant 0 : i32
    return %c0_i32, %c0_i32_0, %c0_i32_1 : i32, i32, i32
  }
  func.func @transform_6(%arg0: i32) -> (i32, i32, i32) {
    %c0_i32 = arith.constant 0 : i32
    %c0_i32_0 = arith.constant 0 : i32
    %c0_i32_1 = arith.constant 0 : i32
    %c0_i32_2 = arith.constant 0 : i32
    return %c0_i32, %c0_i32_0, %c0_i32_1 : i32, i32, i32
  }
  func.func @transform_7(%arg0: i32) -> (i32, i32, i32) {
    %c0_i32 = arith.constant 0 : i32
    %c0_i32_0 = arith.constant 0 : i32
    %c0_i32_1 = arith.constant 0 : i32
    %c0_i32_2 = arith.constant 0 : i32
    return %c0_i32, %c0_i32_0, %c0_i32_1 : i32, i32, i32
  }
  func.func @transform_8(%arg0: i32) -> (i32, i32, i32) {
    %c0_i32 = arith.constant 0 : i32
    %c0_i32_0 = arith.constant 0 : i32
    %c0_i32_1 = arith.constant 0 : i32
    %c0_i32_2 = arith.constant 0 : i32
    return %c0_i32, %c0_i32_0, %c0_i32_1 : i32, i32, i32
  }
  func.func @transform_9(%arg0: i32) -> (i32, i32, i32) {
    %c0_i32 = arith.constant 0 : i32
    %c0_i32_0 = arith.constant 0 : i32
    %c0_i32_1 = arith.constant 0 : i32
    %c0_i32_2 = arith.constant 0 : i32
    return %c0_i32, %c0_i32_0, %c0_i32_1 : i32, i32, i32
  }
  func.func @transform_10(%arg0: i32) -> (i32, i32, i32) {
    %c0_i32 = arith.constant 0 : i32
    %c0_i32_0 = arith.constant 0 : i32
    %c0_i32_1 = arith.constant 0 : i32
    %c0_i32_2 = arith.constant 0 : i32
    return %c0_i32, %c0_i32_0, %c0_i32_1 : i32, i32, i32
  }
  func.func @transform_11(%arg0: i32) -> (i32, i32, i32) {
    %c0_i32 = arith.constant 0 : i32
    %c0_i32_0 = arith.constant 0 : i32
    %c0_i32_1 = arith.constant 0 : i32
    %c0_i32_2 = arith.constant 0 : i32
    return %c0_i32, %c0_i32_0, %c0_i32_1 : i32, i32, i32
  }
  func.func @transform_12(%arg0: i32) -> (i32, i32, i32) {
    %c0_i32 = arith.constant 0 : i32
    %c0_i32_0 = arith.constant 0 : i32
    %c0_i32_1 = arith.constant 0 : i32
    %c0_i32_2 = arith.constant 0 : i32
    return %c0_i32, %c0_i32_0, %c0_i32_1 : i32, i32, i32
  }
  func.func @transform_13(%arg0: i32) -> (i32, i32, i32) {
    %c0_i32 = arith.constant 0 : i32
    %c0_i32_0 = arith.constant 0 : i32
    %c0_i32_1 = arith.constant 0 : i32
    %c0_i32_2 = arith.constant 0 : i32
    return %c0_i32, %c0_i32_0, %c0_i32_1 : i32, i32, i32
  }
  func.func @transform_14(%arg0: i32) -> (i32, i32, i32) {
    %c0_i32 = arith.constant 0 : i32
    %c0_i32_0 = arith.constant 0 : i32
    %c0_i32_1 = arith.constant 0 : i32
    %c0_i32_2 = arith.constant 0 : i32
    return %c0_i32, %c0_i32_0, %c0_i32_1 : i32, i32, i32
  }
  func.func @transform_15(%arg0: i32) -> (i32, i32, i32) {
    %c0_i32 = arith.constant 0 : i32
    %c0_i32_0 = arith.constant 0 : i32
    %c0_i32_1 = arith.constant 0 : i32
    %c0_i32_2 = arith.constant 0 : i32
    return %c0_i32, %c0_i32_0, %c0_i32_1 : i32, i32, i32
  }
  func.func @transform_16(%arg0: i32) -> (i32, i32, i32) {
    %c0_i32 = arith.constant 0 : i32
    %c0_i32_0 = arith.constant 0 : i32
    %c0_i32_1 = arith.constant 0 : i32
    %c0_i32_2 = arith.constant 0 : i32
    return %c0_i32, %c0_i32_0, %c0_i32_1 : i32, i32, i32
  }
  func.func @transform_17(%arg0: i32) -> (i32, i32, i32, i32) {
    %c0_i32 = arith.constant 0 : i32
    %c0_i32_0 = arith.constant 0 : i32
    %c0_i32_1 = arith.constant 0 : i32
    %c0_i32_2 = arith.constant 0 : i32
    return %c0_i32, %arg0, %c0_i32_0, %c0_i32_1 : i32, i32, i32, i32
  }
}

</mosaic_0001>

<llo_original>
// kernel: tpu_custom_call.1
$region0: #{tpu_custom_call.1}
  #allocation0 [shape = 'u32[]', space=smem, size = 0x4, offset = 0x4, fixed_abs, tag = 'smem constant byte address 0x4 - core index']
  #allocation1 [shape = 'u32[144,128]{1,0:T(1,128)}', space=vmem, size = 0x12000, scoped, tag = 'internal scratch']
  #allocation17 [shape = 's32[]', space=sflag, size = 0x4, offset = 0, fixed_abs, tag = 'sflag constant byte address 0x0 - dummy sync flag']
  %s0 = inlined_call_operand.vmem [shape: f32[8,8,32], index: 0, kind: input, shape index: {}]
  %s1 = inlined_call_operand.hbm [shape: f32[2,1,32], index: 1, kind: input, shape index: {}]
  %s2 = inlined_call_operand.hbm [shape: f32[2,1,32], index: 2, kind: input, shape index: {}]
  %s3 = inlined_call_operand.vmem [shape: f32[2,8,16], index: 3, kind: input, shape index: {}]
  %s4 = inlined_call_operand.hbm [shape: f32[2,1,16], index: 4, kind: input, shape index: {}]
  %s5 = inlined_call_operand.vmem [shape: f32[2,16,8], index: 5, kind: input, shape index: {}]
  %s6 = inlined_call_operand.hbm [shape: f32[2,1,8], index: 6, kind: input, shape index: {}]
  %s7 = inlined_call_operand.vmem [shape: f32[2,8,8], index: 7, kind: input, shape index: {}]
  %s8 = inlined_call_operand.hbm [shape: f32[2,1,8], index: 8, kind: input, shape index: {}]
  %s9 = inlined_call_operand.hbm [shape: f32[2,1,32], index: 9, kind: input, shape index: {}]
  %s10 = inlined_call_operand.hbm [shape: f32[2,1,32], index: 10, kind: input, shape index: {}]
  %s11 = inlined_call_operand.vmem [shape: f32[2,32,64], index: 11, kind: input, shape index: {}]
  %s12 = inlined_call_operand.hbm [shape: f32[2,1,64], index: 12, kind: input, shape index: {}]
  %s13 = inlined_call_operand.vmem [shape: f32[2,64,32], index: 13, kind: input, shape index: {}]
  %s14 = inlined_call_operand.vmem [shape: f32[2,1,32], index: 14, kind: input, shape index: {}]
  %s15 = inlined_call_operand.vmem [shape: f32[2,32,32], index: 15, kind: input, shape index: {}]
  %s16 = inlined_call_operand.vmem [shape: f32[2,1,32], index: 16, kind: input, shape index: {}]
  %s17 = inlined_call_operand.hbm [shape: f32[2,8,8,32], index: 17, kind: output, shape index: {}]
  %s18 = sld [smem:[#allocation0]]
  $region133: #{tpu_custom_call.1} parent=0
    _
  %s20 = ssub.s32 1, %s18
  %s21 = scalar_select 0, %s20, %s18
  $region1: #{tpu_custom_call.1} parent=0
    #allocation2 [shape = 'u8[1024]{0}', space=vmem, size = 0x400, scoped, tag = 'input window, operand 1, single buffered']
    #allocation3 [shape = 's32[2]{0}', space=sflag, size = 0x8, scoped, tag = 'scoped memory for tpu_custom_call.1']
    #allocation4 [shape = 's32[2]{0}', space=sflag, size = 0x8, scoped, tag = 'scoped memory for tpu_custom_call.1']
    #allocation5 [shape = 'u8[1024]{0}', space=vmem, size = 0x400, scoped, tag = 'input window, operand 2, single buffered']
    #allocation6 [shape = 's32[1]{0}', space=sflag, size = 0x4, scoped, tag = 'scoped memory for tpu_custom_call.1']
    #allocation7 [shape = 'u8[1024]{0}', space=vmem, size = 0x400, scoped, tag = 'input window, operand 4, single buffered']
    #allocation8 [shape = 'u8[1024]{0}', space=vmem, size = 0x400, scoped, tag = 'input window, operand 6, single buffered']
    #allocation9 [shape = 's32[1]{0}', space=sflag, size = 0x4, scoped, tag = 'scoped memory for tpu_custom_call.1']
    #allocation10 [shape = 'u8[1024]{0}', space=vmem, size = 0x400, scoped, tag = 'input window, operand 8, single buffered']
    #allocation11 [shape = 'u8[1024]{0}', space=vmem, size = 0x400, scoped, tag = 'input window, operand 9, single buffered']
    #allocation12 [shape = 's32[1]{0}', space=sflag, size = 0x4, scoped, tag = 'scoped memory for tpu_custom_call.1']
    #allocation13 [shape = 'u8[1024]{0}', space=vmem, size = 0x400, scoped, tag = 'input window, operand 10, single buffered']
    #allocation14 [shape = 'u8[1024]{0}', space=vmem, size = 0x400, scoped, tag = 'input window, operand 12, single buffered']
    #allocation15 [shape = 's32[1]{0}', space=sflag, size = 0x4, scoped, tag = 'scoped memory for tpu_custom_call.1']
    #allocation16 [shape = 'u8[65536]{0}', space=vmem, size = 0x10000, scoped, tag = 'output window, operand 0']
    %22 = vsyncpa [#allocation3], 0
    %23 = vsyncpa [#allocation6], 0
    %24 = vsyncpa [#allocation9], 0
    %25 = vsyncpa [#allocation12], 0
    %26 = vsyncpa [#allocation15], 0
    %27 = vsyncpa [#allocation4], 0
    %s28 = scalar_lea.sflag [#allocation4], 1
    %29 = vsyncpa %s28, 0
    loop: start=0, step=1, limit=4
    $region2: #{tpu_custom_call.1} parent=1 // loop_pre_header
      _
    $region3: #{tpu_custom_call.1} parent=1 // loop_header
      %s31 = sphi 0, %s35
      %p32 = scmp.ge.s32.totalorder %s31, 4
      %s41 = sphi 0, %s43
      %s44 = sphi 0, %s41
      %s45 = sphi 0, %s44
      %s61 = sphi 0, %s45
      %s65 = sphi 0, %s65
      %s67 = sphi 0, %s65
      %s68 = sphi 0, %s67
      %s82 = sphi 0, %s68
      %s86 = sphi 0, %s86
      %s88 = sphi 0, %s86
      %s89 = sphi 0, %s88
      %s103 = sphi 0, %s89
      %s107 = sphi 0, %s107
      %s109 = sphi 0, %s107
      %s110 = sphi 0, %s109
      %s124 = sphi 0, %s110
      %s128 = sphi 0, %s128
      %s130 = sphi 0, %s128
      %s131 = sphi 0, %s130
      %s145 = sphi 0, %s131
      %s149 = sphi 0, %s149
      %s151 = sphi 0, %s149
      %s152 = sphi 0, %s151
      %s166 = sphi 0, %s152
      %s170 = sphi 0, %s170
      %s172 = sphi 0, %s170
      %s173 = sphi 0, %s172
      %s187 = sphi 0, %s173
      %s191 = sphi 0, %s191
      %s193 = sphi 0, %s191
      %s194 = sphi 0, %s193
      %s208 = sphi 0, %s194
      %s212 = sphi 0, %s212
      %s214 = sphi 0, %s212
      %s215 = sphi 0, %s214
      %s229 = sphi 0, %s215
      %s233 = sphi 0, %s233
      %s235 = sphi 0, %s233
      %s236 = sphi 0, %s235
      %s250 = sphi 0, %s236
      %s254 = sphi 0, %s254
      %s256 = sphi 0, %s254
      %s257 = sphi 0, %s256
      %s271 = sphi 0, %s257
      %s275 = sphi 0, %s275
      %s277 = sphi 0, %s275
      %s278 = sphi 0, %s277
      %s292 = sphi 0, %s278
      %s296 = sphi 0, %s296
      %s298 = sphi 0, %s296
      %s299 = sphi 0, %s298
      %s313 = sphi 0, %s299
      %s317 = sphi 0, %s317
      %s319 = sphi 0, %s317
      %s320 = sphi 0, %s319
      %s334 = sphi 0, %s320
      %s338 = sphi 0, %s338
      %s340 = sphi 0, %s338
      %s341 = sphi 0, %s340
      %s355 = sphi 0, %s341
      %s359 = sphi 0, %s359
      %s361 = sphi 0, %s359
      %s362 = sphi 0, %s361
      %s376 = sphi 0, %s362
      %s380 = sphi 0, %s380
      %s382 = sphi 0, %s380
      %s383 = sphi 0, %s382
      %s397 = sphi 0, %s383
      %s403 = sphi 0, %s405
      %s406 = sphi 0, %s403
      %s407 = sphi 0, %s406
      %s423 = sphi 0, %s407
    $region4: #{tpu_custom_call.1} parent=1 // loop_header_branch
      %34 = sbr.rel (%p32) target = $region8
    $region5: #{tpu_custom_call.1} parent=1 // loop_body
      %s36 = ssub.s32 %s31, 1
      %s37 = ssub.s32 %s31, 2
      %s38 = sadd.s32 %s31, 1
      %s39 = ssub.s32 %s31, %s38
      %p40 = scmp.eq.s32.totalorder %s39, 0
      %s42 = sadd.s32 %s41, 1
      %s43 = scalar_select %p40, %s41, %s42
      %p46 = pneg %p40
      %p47 = scmp.eq.s32.totalorder %s31, 1
      %p48 = por %p46, %p47
      %p49 = scmp.ne.s32.totalorder %s41, %s44
      %p50 = scmp.eq.s32.totalorder %s31, 0
      %p51 = por %p49, %p50
      %p52 = scmp.ne.s32.totalorder %s41, %s44
      %p53 = scmp.eq.s32.totalorder %s36, 1
      %p54 = por %p52, %p53
      %p55 = scmp.ne.s32.totalorder %s44, %s45
      %p56 = scmp.eq.s32.totalorder %s36, 0
      %p57 = por %p55, %p56
      %p58 = scmp.ne.s32.totalorder %s44, %s45
      %p59 = scmp.eq.s32.totalorder %s37, 1
      %p60 = por %p58, %p59
      %p62 = scmp.ne.s32.totalorder %s45, %s61
      %p63 = scmp.eq.s32.totalorder %s37, 0
      %p64 = por %p62, %p63
      %s66 = sadd.s32 %s65, 1
      %p69 = scmp.eq.s32.totalorder %s31, 1
      %p70 = scmp.ne.s32.totalorder %s65, %s67
      %p71 = scmp.eq.s32.totalorder %s31, 0
      %p72 = por %p70, %p71
      %p73 = scmp.ne.s32.totalorder %s65, %s67
      %p74 = scmp.eq.s32.totalorder %s36, 1
      %p75 = por %p73, %p74
      %p76 = scmp.ne.s32.totalorder %s67, %s68
      %p77 = scmp.eq.s32.totalorder %s36, 0
      %p78 = por %p76, %p77
      %p79 = scmp.ne.s32.totalorder %s67, %s68
      %p80 = scmp.eq.s32.totalorder %s37, 1
      %p81 = por %p79, %p80
      %p83 = scmp.ne.s32.totalorder %s68, %s82
      %p84 = scmp.eq.s32.totalorder %s37, 0
      %p85 = por %p83, %p84
      %s87 = sadd.s32 %s86, 1
      %p90 = scmp.eq.s32.totalorder %s31, 1
      %p91 = scmp.ne.s32.totalorder %s86, %s88
      %p92 = scmp.eq.s32.totalorder %s31, 0
      %p93 = por %p91, %p92
      %p94 = scmp.ne.s32.totalorder %s86, %s88
      %p95 = scmp.eq.s32.totalorder %s36, 1
      %p96 = por %p94, %p95
      %p97 = scmp.ne.s32.totalorder %s88, %s89
      %p98 = scmp.eq.s32.totalorder %s36, 0
      %p99 = por %p97, %p98
      %p100 = scmp.ne.s32.totalorder %s88, %s89
      %p101 = scmp.eq.s32.totalorder %s37, 1
      %p102 = por %p100, %p101
      %p104 = scmp.ne.s32.totalorder %s89, %s103
      %p105 = scmp.eq.s32.totalorder %s37, 0
      %p106 = por %p104, %p105
      %s108 = sadd.s32 %s107, 1
      %p111 = scmp.eq.s32.totalorder %s31, 1
      %p112 = scmp.ne.s32.totalorder %s107, %s109
      %p113 = scmp.eq.s32.totalorder %s31, 0
      %p114 = por %p112, %p113
      %p115 = scmp.ne.s32.totalorder %s107, %s109
      %p116 = scmp.eq.s32.totalorder %s36, 1
      %p117 = por %p115, %p116
      %p118 = scmp.ne.s32.totalorder %s109, %s110
      %p119 = scmp.eq.s32.totalorder %s36, 0
      %p120 = por %p118, %p119
      %p121 = scmp.ne.s32.totalorder %s109, %s110
      %p122 = scmp.eq.s32.totalorder %s37, 1
      %p123 = por %p121, %p122
      %p125 = scmp.ne.s32.totalorder %s110, %s124
      %p126 = scmp.eq.s32.totalorder %s37, 0
      %p127 = por %p125, %p126
      %s129 = sadd.s32 %s128, 1
      %p132 = scmp.eq.s32.totalorder %s31, 1
      %p133 = scmp.ne.s32.totalorder %s128, %s130
      %p134 = scmp.eq.s32.totalorder %s31, 0
      %p135 = por %p133, %p134
      %p136 = scmp.ne.s32.totalorder %s128, %s130
      %p137 = scmp.eq.s32.totalorder %s36, 1
      %p138 = por %p136, %p137
      %p139 = scmp.ne.s32.totalorder %s130, %s131
      %p140 = scmp.eq.s32.totalorder %s36, 0
      %p141 = por %p139, %p140
      %p142 = scmp.ne.s32.totalorder %s130, %s131
      %p143 = scmp.eq.s32.totalorder %s37, 1
      %p144 = por %p142, %p143
      %p146 = scmp.ne.s32.totalorder %s131, %s145
      %p147 = scmp.eq.s32.totalorder %s37, 0
      %p148 = por %p146, %p147
      %s150 = sadd.s32 %s149, 1
      %p153 = scmp.eq.s32.totalorder %s31, 1
      %p154 = scmp.ne.s32.totalorder %s149, %s151
      %p155 = scmp.eq.s32.totalorder %s31, 0
      %p156 = por %p154, %p155
      %p157 = scmp.ne.s32.totalorder %s149, %s151
      %p158 = scmp.eq.s32.totalorder %s36, 1
      %p159 = por %p157, %p158
      %p160 = scmp.ne.s32.totalorder %s151, %s152
      %p161 = scmp.eq.s32.totalorder %s36, 0
      %p162 = por %p160, %p161
      %p163 = scmp.ne.s32.totalorder %s151, %s152
      %p164 = scmp.eq.s32.totalorder %s37, 1
      %p165 = por %p163, %p164
      %p167 = scmp.ne.s32.totalorder %s152, %s166
      %p168 = scmp.eq.s32.totalorder %s37, 0
      %p169 = por %p167, %p168
      %s171 = sadd.s32 %s170, 1
      %p174 = scmp.eq.s32.totalorder %s31, 1
      %p175 = scmp.ne.s32.totalorder %s170, %s172
      %p176 = scmp.eq.s32.totalorder %s31, 0
      %p177 = por %p175, %p176
      %p178 = scmp.ne.s32.totalorder %s170, %s172
      %p179 = scmp.eq.s32.totalorder %s36, 1
      %p180 = por %p178, %p179
      %p181 = scmp.ne.s32.totalorder %s172, %s173
      %p182 = scmp.eq.s32.totalorder %s36, 0
      %p183 = por %p181, %p182
      %p184 = scmp.ne.s32.totalorder %s172, %s173
      %p185 = scmp.eq.s32.totalorder %s37, 1
      %p186 = por %p184, %p185
      %p188 = scmp.ne.s32.totalorder %s173, %s187
      %p189 = scmp.eq.s32.totalorder %s37, 0
      %p190 = por %p188, %p189
      %s192 = sadd.s32 %s191, 1
      %p195 = scmp.eq.s32.totalorder %s31, 1
      %p196 = scmp.ne.s32.totalorder %s191, %s193
      %p197 = scmp.eq.s32.totalorder %s31, 0
      %p198 = por %p196, %p197
      %p199 = scmp.ne.s32.totalorder %s191, %s193
      %p200 = scmp.eq.s32.totalorder %s36, 1
      %p201 = por %p199, %p200
      %p202 = scmp.ne.s32.totalorder %s193, %s194
      %p203 = scmp.eq.s32.totalorder %s36, 0
      %p204 = por %p202, %p203
      %p205 = scmp.ne.s32.totalorder %s193, %s194
      %p206 = scmp.eq.s32.totalorder %s37, 1
      %p207 = por %p205, %p206
      %p209 = scmp.ne.s32.totalorder %s194, %s208
      %p210 = scmp.eq.s32.totalorder %s37, 0
      %p211 = por %p209, %p210
      %s213 = sadd.s32 %s212, 1
      %p216 = scmp.eq.s32.totalorder %s31, 1
      %p217 = scmp.ne.s32.totalorder %s212, %s214
      %p218 = scmp.eq.s32.totalorder %s31, 0
      %p219 = por %p217, %p218
      %p220 = scmp.ne.s32.totalorder %s212, %s214
      %p221 = scmp.eq.s32.totalorder %s36, 1
      %p222 = por %p220, %p221
      %p223 = scmp.ne.s32.totalorder %s214, %s215
      %p224 = scmp.eq.s32.totalorder %s36, 0
      %p225 = por %p223, %p224
      %p226 = scmp.ne.s32.totalorder %s214, %s215
      %p227 = scmp.eq.s32.totalorder %s37, 1
      %p228 = por %p226, %p227
      %p230 = scmp.ne.s32.totalorder %s215, %s229
      %p231 = scmp.eq.s32.totalorder %s37, 0
      %p232 = por %p230, %p231
      %s234 = sadd.s32 %s233, 1
      %p237 = scmp.eq.s32.totalorder %s31, 1
      %p238 = scmp.ne.s32.totalorder %s233, %s235
      %p239 = scmp.eq.s32.totalorder %s31, 0
      %p240 = por %p238, %p239
      %p241 = scmp.ne.s32.totalorder %s233, %s235
      %p242 = scmp.eq.s32.totalorder %s36, 1
      %p243 = por %p241, %p242
      %p244 = scmp.ne.s32.totalorder %s235, %s236
      %p245 = scmp.eq.s32.totalorder %s36, 0
      %p246 = por %p244, %p245
      %p247 = scmp.ne.s32.totalorder %s235, %s236
      %p248 = scmp.eq.s32.totalorder %s37, 1
      %p249 = por %p247, %p248
      %p251 = scmp.ne.s32.totalorder %s236, %s250
      %p252 = scmp.eq.s32.totalorder %s37, 0
      %p253 = por %p251, %p252
      %s255 = sadd.s32 %s254, 1
      %p258 = scmp.eq.s32.totalorder %s31, 1
      %p259 = scmp.ne.s32.totalorder %s254, %s256
      %p260 = scmp.eq.s32.totalorder %s31, 0
      %p261 = por %p259, %p260
      %p262 = scmp.ne.s32.totalorder %s254, %s256
      %p263 = scmp.eq.s32.totalorder %s36, 1
      %p264 = por %p262, %p263
      %p265 = scmp.ne.s32.totalorder %s256, %s257
      %p266 = scmp.eq.s32.totalorder %s36, 0
      %p267 = por %p265, %p266
      %p268 = scmp.ne.s32.totalorder %s256, %s257
      %p269 = scmp.eq.s32.totalorder %s37, 1
      %p270 = por %p268, %p269
      %p272 = scmp.ne.s32.totalorder %s257, %s271
      %p273 = scmp.eq.s32.totalorder %s37, 0
      %p274 = por %p272, %p273
      %s276 = sadd.s32 %s275, 1
      %p279 = scmp.eq.s32.totalorder %s31, 1
      %p280 = scmp.ne.s32.totalorder %s275, %s277
      %p281 = scmp.eq.s32.totalorder %s31, 0
      %p282 = por %p280, %p281
      %p283 = scmp.ne.s32.totalorder %s275, %s277
      %p284 = scmp.eq.s32.totalorder %s36, 1
      %p285 = por %p283, %p284
      %p286 = scmp.ne.s32.totalorder %s277, %s278
      %p287 = scmp.eq.s32.totalorder %s36, 0
      %p288 = por %p286, %p287
      %p289 = scmp.ne.s32.totalorder %s277, %s278
      %p290 = scmp.eq.s32.totalorder %s37, 1
      %p291 = por %p289, %p290
      %p293 = scmp.ne.s32.totalorder %s278, %s292
      %p294 = scmp.eq.s32.totalorder %s37, 0
      %p295 = por %p293, %p294
      %s297 = sadd.s32 %s296, 1
      %p300 = scmp.eq.s32.totalorder %s31, 1
      %p301 = scmp.ne.s32.totalorder %s296, %s298
      %p302 = scmp.eq.s32.totalorder %s31, 0
      %p303 = por %p301, %p302
      %p304 = scmp.ne.s32.totalorder %s296, %s298
      %p305 = scmp.eq.s32.totalorder %s36, 1
      %p306 = por %p304, %p305
      %p307 = scmp.ne.s32.totalorder %s298, %s299
      %p308 = scmp.eq.s32.totalorder %s36, 0
      %p309 = por %p307, %p308
      %p310 = scmp.ne.s32.totalorder %s298, %s299
      %p311 = scmp.eq.s32.totalorder %s37, 1
      %p312 = por %p310, %p311
      %p314 = scmp.ne.s32.totalorder %s299, %s313
      %p315 = scmp.eq.s32.totalorder %s37, 0
      %p316 = por %p314, %p315
      %s318 = sadd.s32 %s317, 1
      %p321 = scmp.eq.s32.totalorder %s31, 1
      %p322 = scmp.ne.s32.totalorder %s317, %s319
      %p323 = scmp.eq.s32.totalorder %s31, 0
      %p324 = por %p322, %p323
      %p325 = scmp.ne.s32.totalorder %s317, %s319
      %p326 = scmp.eq.s32.totalorder %s36, 1
      %p327 = por %p325, %p326
      %p328 = scmp.ne.s32.totalorder %s319, %s320
      %p329 = scmp.eq.s32.totalorder %s36, 0
      %p330 = por %p328, %p329
      %p331 = scmp.ne.s32.totalorder %s319, %s320
      %p332 = scmp.eq.s32.totalorder %s37, 1
      %p333 = por %p331, %p332
      %p335 = scmp.ne.s32.totalorder %s320, %s334
      %p336 = scmp.eq.s32.totalorder %s37, 0
      %p337 = por %p335, %p336
      %s339 = sadd.s32 %s338, 1
      %p342 = scmp.eq.s32.totalorder %s31, 1
      %p343 = scmp.ne.s32.totalorder %s338, %s340
      %p344 = scmp.eq.s32.totalorder %s31, 0
      %p345 = por %p343, %p344
      %p346 = scmp.ne.s32.totalorder %s338, %s340
      %p347 = scmp.eq.s32.totalorder %s36, 1
      %p348 = por %p346, %p347
      %p349 = scmp.ne.s32.totalorder %s340, %s341
      %p350 = scmp.eq.s32.totalorder %s36, 0
      %p351 = por %p349, %p350
      %p352 = scmp.ne.s32.totalorder %s340, %s341
      %p353 = scmp.eq.s32.totalorder %s37, 1
      %p354 = por %p352, %p353
      %p356 = scmp.ne.s32.totalorder %s341, %s355
      %p357 = scmp.eq.s32.totalorder %s37, 0
      %p358 = por %p356, %p357
      %s360 = sadd.s32 %s359, 1
      %p363 = scmp.eq.s32.totalorder %s31, 1
      %p364 = scmp.ne.s32.totalorder %s359, %s361
      %p365 = scmp.eq.s32.totalorder %s31, 0
      %p366 = por %p364, %p365
      %p367 = scmp.ne.s32.totalorder %s359, %s361
      %p368 = scmp.eq.s32.totalorder %s36, 1
      %p369 = por %p367, %p368
      %p370 = scmp.ne.s32.totalorder %s361, %s362
      %p371 = scmp.eq.s32.totalorder %s36, 0
      %p372 = por %p370, %p371
      %p373 = scmp.ne.s32.totalorder %s361, %s362
      %p374 = scmp.eq.s32.totalorder %s37, 1
      %p375 = por %p373, %p374
      %p377 = scmp.ne.s32.totalorder %s362, %s376
      %p378 = scmp.eq.s32.totalorder %s37, 0
      %p379 = por %p377, %p378
      %s381 = sadd.s32 %s380, 1
      %p384 = scmp.eq.s32.totalorder %s31, 1
      %p385 = scmp.ne.s32.totalorder %s380, %s382
      %p386 = scmp.eq.s32.totalorder %s31, 0
      %p387 = por %p385, %p386
      %p388 = scmp.ne.s32.totalorder %s380, %s382
      %p389 = scmp.eq.s32.totalorder %s36, 1
      %p390 = por %p388, %p389
      %p391 = scmp.ne.s32.totalorder %s382, %s383
      %p392 = scmp.eq.s32.totalorder %s36, 0
      %p393 = por %p391, %p392
      %p394 = scmp.ne.s32.totalorder %s382, %s383
      %p395 = scmp.eq.s32.totalorder %s37, 1
      %p396 = por %p394, %p395
      %p398 = scmp.ne.s32.totalorder %s383, %s397
      %p399 = scmp.eq.s32.totalorder %s37, 0
      %p400 = por %p398, %p399
      %s401 = ssub.s32 %s31, %s38
      %p402 = scmp.eq.s32.totalorder %s401, 0
      %s404 = sadd.s32 %s403, 1
      %s405 = scalar_select %p402, %s403, %s404
      %p408 = pneg %p402
      %p409 = scmp.eq.s32.totalorder %s31, 1
      %p410 = por %p408, %p409
      %p411 = scmp.ne.s32.totalorder %s403, %s406
      %p412 = scmp.eq.s32.totalorder %s31, 0
      %p413 = por %p411, %p412
      %p414 = scmp.ne.s32.totalorder %s403, %s406
      %p415 = scmp.eq.s32.totalorder %s36, 1
      %p416 = por %p414, %p415
      %p417 = scmp.ne.s32.totalorder %s406, %s407
      %p418 = scmp.eq.s32.totalorder %s36, 0
      %p419 = por %p417, %p418
      %p420 = scmp.ne.s32.totalorder %s406, %s407
      %p421 = scmp.eq.s32.totalorder %s37, 1
      %p422 = por %p420, %p421
      %p424 = scmp.ne.s32.totalorder %s407, %s423
      %p425 = scmp.eq.s32.totalorder %s37, 0
      %p426 = por %p424, %p425
      %p427 = scmp.le.s32.totalorder 1, %s31
      %p428 = scmp.lt.s32.totalorder %s31, 3
      %p429 = pnand %p427, %p428
      %p430 = pneg %p429
      // Predicated region
      $region9: #{tpu_custom_call.1} parent=5 // pred_check
        _
      $region10: #{tpu_custom_call.1} parent=5 // pred_check_branch
        %432 = sbr.rel (%p429) target = $region12
      $region11: #{tpu_custom_call.1} parent=5 // pred_region
        %s433 = ssub.s32 %s31, 1
        // Predicated region
        $region13: #{tpu_custom_call.1} parent=11 // pred_check
          %p434 = pneg %p78
        $region14: #{tpu_custom_call.1} parent=11 // pred_check_branch
          %436 = sbr.rel (%p434) target = $region16
        $region15: #{tpu_custom_call.1} parent=11 // pred_region
          %s438 = ssub.s32 32, 32
          %439 = vsyncadd [#allocation3], %s438
          %s440 = sshll.u32 [#allocation2], 4
          %s441 = int_to_ptr.vmem [resolvable:$true] %s440
          %446 = dma.hbm_to_vmem [thread:$0]  %s1, 32, %s441, [#allocation3], 16, 16, 1
        $region16: #{tpu_custom_call.1} parent=11 // pred_fallthru
          _
        // Predicated region
        $region17: #{tpu_custom_call.1} parent=11 // pred_check
          %p447 = pneg %p99
        $region18: #{tpu_custom_call.1} parent=11 // pred_check_branch
          %449 = sbr.rel (%p447) target = $region20
        $region19: #{tpu_custom_call.1} parent=11 // pred_region
          %s451 = ssub.s32 32, 32
          %452 = vsyncadd [#allocation6], %s451
          %s453 = sshll.u32 [#allocation5], 4
          %s454 = int_to_ptr.vmem [resolvable:$true] %s453
          %459 = dma.hbm_to_vmem [thread:$0]  %s2, 32, %s454, [#allocation6], 16, 16, 1
        $region20: #{tpu_custom_call.1} parent=11 // pred_fallthru
          _
        // Predicated region
        $region21: #{tpu_custom_call.1} parent=11 // pred_check
          %p460 = pneg %p120
        $region22: #{tpu_custom_call.1} parent=11 // pred_check_branch
          %462 = sbr.rel (%p460) target = $region24
        $region23: #{tpu_custom_call.1} parent=11 // pred_region
          _
        $region24: #{tpu_custom_call.1} parent=11 // pred_fallthru
          _
        // Predicated region
        $region25: #{tpu_custom_call.1} parent=11 // pred_check
          %p463 = pneg %p141
        $region26: #{tpu_custom_call.1} parent=11 // pred_check_branch
          %465 = sbr.rel (%p463) target = $region28
        $region27: #{tpu_custom_call.1} parent=11 // pred_region
          %s467 = ssub.s32 32, 32
          %468 = vsyncadd [#allocation6], %s467
          %s469 = sshll.u32 [#allocation7], 4
          %s470 = int_to_ptr.vmem [resolvable:$true] %s469
          %475 = dma.hbm_to_vmem [thread:$0]  %s4, 32, %s470, [#allocation6], 16, 16, 1
        $region28: #{tpu_custom_call.1} parent=11 // pred_fallthru
          _
        // Predicated region
        $region29: #{tpu_custom_call.1} parent=11 // pred_check
          %p476 = pneg %p162
        $region30: #{tpu_custom_call.1} parent=11 // pred_check_branch
          %478 = sbr.rel (%p476) target = $region32
        $region31: #{tpu_custom_call.1} parent=11 // pred_region
          _
        $region32: #{tpu_custom_call.1} parent=11 // pred_fallthru
          _
        // Predicated region
        $region33: #{tpu_custom_call.1} parent=11 // pred_check
          %p479 = pneg %p183
        $region34: #{tpu_custom_call.1} parent=11 // pred_check_branch
          %481 = sbr.rel (%p479) target = $region36
        $region35: #{tpu_custom_call.1} parent=11 // pred_region
          %s483 = ssub.s32 32, 32
          %484 = vsyncadd [#allocation9], %s483
          %s485 = sshll.u32 [#allocation8], 4
          %s486 = int_to_ptr.vmem [resolvable:$true] %s485
          %491 = dma.hbm_to_vmem [thread:$0]  %s6, 32, %s486, [#allocation9], 16, 16, 1
        $region36: #{tpu_custom_call.1} parent=11 // pred_fallthru
          _
        // Predicated region
        $region37: #{tpu_custom_call.1} parent=11 // pred_check
          %p492 = pneg %p204
        $region38: #{tpu_custom_call.1} parent=11 // pred_check_branch
          %494 = sbr.rel (%p492) target = $region40
        $region39: #{tpu_custom_call.1} parent=11 // pred_region
          _
        $region40: #{tpu_custom_call.1} parent=11 // pred_fallthru
          _
        // Predicated region
        $region41: #{tpu_custom_call.1} parent=11 // pred_check
          %p495 = pneg %p225
        $region42: #{tpu_custom_call.1} parent=11 // pred_check_branch
          %497 = sbr.rel (%p495) target = $region44
        $region43: #{tpu_custom_call.1} parent=11 // pred_region
          %s499 = ssub.s32 32, 32
          %500 = vsyncadd [#allocation9], %s499
          %s501 = sshll.u32 [#allocation10], 4
          %s502 = int_to_ptr.vmem [resolvable:$true] %s501
          %507 = dma.hbm_to_vmem [thread:$0]  %s8, 32, %s502, [#allocation9], 16, 16, 1
        $region44: #{tpu_custom_call.1} parent=11 // pred_fallthru
          _
        // Predicated region
        $region45: #{tpu_custom_call.1} parent=11 // pred_check
          %p508 = pneg %p246
        $region46: #{tpu_custom_call.1} parent=11 // pred_check_branch
          %510 = sbr.rel (%p508) target = $region48
        $region47: #{tpu_custom_call.1} parent=11 // pred_region
          %s512 = ssub.s32 32, 32
          %513 = vsyncadd [#allocation12], %s512
          %s514 = sshll.u32 [#allocation11], 4
          %s515 = int_to_ptr.vmem [resolvable:$true] %s514
          %520 = dma.hbm_to_vmem [thread:$0]  %s9, 32, %s515, [#allocation12], 16, 16, 1
        $region48: #{tpu_custom_call.1} parent=11 // pred_fallthru
          _
        // Predicated region
        $region49: #{tpu_custom_call.1} parent=11 // pred_check
          %p521 = pneg %p267
        $region50: #{tpu_custom_call.1} parent=11 // pred_check_branch
          %523 = sbr.rel (%p521) target = $region52
        $region51: #{tpu_custom_call.1} parent=11 // pred_region
          %s525 = ssub.s32 32, 32
          %526 = vsyncadd [#allocation12], %s525
          %s527 = sshll.u32 [#allocation13], 4
          %s528 = int_to_ptr.vmem [resolvable:$true] %s527
          %533 = dma.hbm_to_vmem [thread:$0]  %s10, 32, %s528, [#allocation12], 16, 16, 1
        $region52: #{tpu_custom_call.1} parent=11 // pred_fallthru
          _
        // Predicated region
        $region53: #{tpu_custom_call.1} parent=11 // pred_check
          %p534 = pneg %p288
        $region54: #{tpu_custom_call.1} parent=11 // pred_check_branch
          %536 = sbr.rel (%p534) target = $region56
        $region55: #{tpu_custom_call.1} parent=11 // pred_region
          _
        $region56: #{tpu_custom_call.1} parent=11 // pred_fallthru
          _
        // Predicated region
        $region57: #{tpu_custom_call.1} parent=11 // pred_check
          %p537 = pneg %p309
        $region58: #{tpu_custom_call.1} parent=11 // pred_check_branch
          %539 = sbr.rel (%p537) target = $region60
        $region59: #{tpu_custom_call.1} parent=11 // pred_region
          %s541 = ssub.s32 32, 32
          %542 = vsyncadd [#allocation15], %s541
          %s543 = sshll.u32 [#allocation14], 4
          %s544 = int_to_ptr.vmem [resolvable:$true] %s543
          %549 = dma.hbm_to_vmem [thread:$0]  %s12, 32, %s544, [#allocation15], 16, 16, 1
        $region60: #{tpu_custom_call.1} parent=11 // pred_fallthru
          _
        // Predicated region
        $region61: #{tpu_custom_call.1} parent=11 // pred_check
          %p550 = pneg %p330
        $region62: #{tpu_custom_call.1} parent=11 // pred_check_branch
          %552 = sbr.rel (%p550) target = $region64
        $region63: #{tpu_custom_call.1} parent=11 // pred_region
          _
        $region64: #{tpu_custom_call.1} parent=11 // pred_fallthru
          _
        // Predicated region
        $region65: #{tpu_custom_call.1} parent=11 // pred_check
          %p553 = pneg %p351
        $region66: #{tpu_custom_call.1} parent=11 // pred_check_branch
          %555 = sbr.rel (%p553) target = $region68
        $region67: #{tpu_custom_call.1} parent=11 // pred_region
          _
        $region68: #{tpu_custom_call.1} parent=11 // pred_fallthru
          _
        // Predicated region
        $region69: #{tpu_custom_call.1} parent=11 // pred_check
          %p556 = pneg %p372
        $region70: #{tpu_custom_call.1} parent=11 // pred_check_branch
          %558 = sbr.rel (%p556) target = $region72
        $region71: #{tpu_custom_call.1} parent=11 // pred_region
          _
        $region72: #{tpu_custom_call.1} parent=11 // pred_fallthru
          _
        // Predicated region
        $region73: #{tpu_custom_call.1} parent=11 // pred_check
          %p559 = pneg %p393
        $region74: #{tpu_custom_call.1} parent=11 // pred_check_branch
          %561 = sbr.rel (%p559) target = $region76
        $region75: #{tpu_custom_call.1} parent=11 // pred_region
          _
        $region76: #{tpu_custom_call.1} parent=11 // pred_fallthru
          _
      $region12: #{tpu_custom_call.1} parent=5 // pred_fallthru
        _
      %p562 = scmp.lt.s32.totalorder %s31, 2
      // Predicated region
      $region77: #{tpu_custom_call.1} parent=5 // pred_check
        %p563 = pneg %p562
      $region78: #{tpu_custom_call.1} parent=5 // pred_check_branch
        %565 = sbr.rel (%p563) target = $region80
      $region79: #{tpu_custom_call.1} parent=5 // pred_region
        // Predicated region
        $region81: #{tpu_custom_call.1} parent=79 // pred_check
          %p566 = pneg %p51
        $region82: #{tpu_custom_call.1} parent=79 // pred_check_branch
          %568 = sbr.rel (%p566) target = $region84
        $region83: #{tpu_custom_call.1} parent=79 // pred_region
          %s569 = smul.u32 4, %s31
          %p570 = scmp.lt.s32.totalorder %s569, 7
          %s571 = scalar_select %p570, %s569, 7
          %s572 = smul.addr %s571, 8
          %s573 = scalar_lea.vmem %s0, %s572
          %s574 = smul.u32 4, %s31
        $region84: #{tpu_custom_call.1} parent=79 // pred_fallthru
          _
      $region80: #{tpu_custom_call.1} parent=5 // pred_fallthru
        _
      %p575 = scmp.le.s32.totalorder 1, %s31
      %p576 = scmp.lt.s32.totalorder %s31, 3
      %p577 = pnand %p575, %p576
      %p578 = pneg %p577
      // Predicated region
      $region85: #{tpu_custom_call.1} parent=5 // pred_check
        _
      $region86: #{tpu_custom_call.1} parent=5 // pred_check_branch
        %580 = sbr.rel (%p577) target = $region88
      $region87: #{tpu_custom_call.1} parent=5 // pred_region
        %s581 = ssub.s32 %s31, 1
        // Predicated region
        $region89: #{tpu_custom_call.1} parent=87 // pred_check
          %p582 = pneg %p78
        $region90: #{tpu_custom_call.1} parent=87 // pred_check_branch
          %584 = sbr.rel (%p582) target = $region92
        $region91: #{tpu_custom_call.1} parent=87 // pred_region
          %585 = dma.done [#allocation3], 32
        $region92: #{tpu_custom_call.1} parent=87 // pred_fallthru
          _
        // Predicated region
        $region93: #{tpu_custom_call.1} parent=87 // pred_check
          %p586 = pneg %p99
        $region94: #{tpu_custom_call.1} parent=87 // pred_check_branch
          %588 = sbr.rel (%p586) target = $region96
        $region95: #{tpu_custom_call.1} parent=87 // pred_region
          %589 = dma.done [#allocation6], 32
        $region96: #{tpu_custom_call.1} parent=87 // pred_fallthru
          _
        // Predicated region
        $region97: #{tpu_custom_call.1} parent=87 // pred_check
          %p590 = pneg %p141
        $region98: #{tpu_custom_call.1} parent=87 // pred_check_branch
          %592 = sbr.rel (%p590) target = $region100
        $region99: #{tpu_custom_call.1} parent=87 // pred_region
          %593 = dma.done [#allocation6], 32
        $region100: #{tpu_custom_call.1} parent=87 // pred_fallthru
          _
        // Predicated region
        $region101: #{tpu_custom_call.1} parent=87 // pred_check
          %p594 = pneg %p183
        $region102: #{tpu_custom_call.1} parent=87 // pred_check_branch
          %596 = sbr.rel (%p594) target = $region104
        $region103: #{tpu_custom_call.1} parent=87 // pred_region
          %597 = dma.done [#allocation9], 32
        $region104: #{tpu_custom_call.1} parent=87 // pred_fallthru
          _
        // Predicated region
        $region105: #{tpu_custom_call.1} parent=87 // pred_check
          %p598 = pneg %p225
        $region106: #{tpu_custom_call.1} parent=87 // pred_check_branch
          %600 = sbr.rel (%p598) target = $region108
        $region107: #{tpu_custom_call.1} parent=87 // pred_region
          %601 = dma.done [#allocation9], 32
        $region108: #{tpu_custom_call.1} parent=87 // pred_fallthru
          _
        // Predicated region
        $region109: #{tpu_custom_call.1} parent=87 // pred_check
          %p602 = pneg %p246
        $region110: #{tpu_custom_call.1} parent=87 // pred_check_branch
          %604 = sbr.rel (%p602) target = $region112
        $region111: #{tpu_custom_call.1} parent=87 // pred_region
          %605 = dma.done [#allocation12], 32
        $region112: #{tpu_custom_call.1} parent=87 // pred_fallthru
          _
        // Predicated region
        $region113: #{tpu_custom_call.1} parent=87 // pred_check
          %p606 = pneg %p267
        $region114: #{tpu_custom_call.1} parent=87 // pred_check_branch
          %608 = sbr.rel (%p606) target = $region116
        $region115: #{tpu_custom_call.1} parent=87 // pred_region
          %609 = dma.done [#allocation12], 32
        $region116: #{tpu_custom_call.1} parent=87 // pred_fallthru
          _
        // Predicated region
        $region117: #{tpu_custom_call.1} parent=87 // pred_check
          %p610 = pneg %p309
        $region118: #{tpu_custom_call.1} parent=87 // pred_check_branch
          %612 = sbr.rel (%p610) target = $region120
        $region119: #{tpu_custom_call.1} parent=87 // pred_region
          %613 = dma.done [#allocation15], 32
        $region120: #{tpu_custom_call.1} parent=87 // pred_fallthru
          _
        %s614 = smul.u32 4, %s36
        %p615 = scmp.lt.s32.totalorder %s614, 7
        %s616 = scalar_select %p615, %s614, 7
        %s617 = smul.addr %s616, 8
        %s618 = scalar_lea.vmem %s0, %s617
        %p619 = pneg %p57
        %p620 = pneg %p54
        %p621 = pneg %p78
        %p622 = pneg %p75
        %p623 = pneg %p99
        %p624 = pneg %p96
        %p625 = pneg %p120
        %p626 = pneg %p117
        %p627 = pneg %p141
        %p628 = pneg %p138
        %p629 = pneg %p162
        %p630 = pneg %p159
        %p631 = pneg %p183
        %p632 = pneg %p180
        %p633 = pneg %p204
        %p634 = pneg %p201
        %p635 = pneg %p225
        %p636 = pneg %p222
        %p637 = pneg %p246
        %p638 = pneg %p243
        %p639 = pneg %p267
        %p640 = pneg %p264
        %p641 = pneg %p288
        %p642 = pneg %p285
        %p643 = pneg %p309
        %p644 = pneg %p306
        %p645 = pneg %p330
        %p646 = pneg %p327
        %p647 = pneg %p351
        %p648 = pneg %p348
        %p649 = pneg %p372
        %p650 = pneg %p369
        %p651 = pneg %p393
        %p652 = pneg %p390
        %p653 = pneg %p419
        %p654 = pneg %p416
        %s655 = sand.u32 %s406, 1
        %s656 = scalar_lea.sflag [#allocation4], %s655
        %s657 = sand.u32 %s406, 1
        %s658 = smul.addr %s657, 64
        %s659 = scalar_lea.vmem [#allocation16], %s658
        %s660 = smul.u32 4, %s36
        %p661 = scmp.lt.s32.totalorder %s660, 7
        %s662 = scalar_select %p661, %s660, 7
        %s663 = smul.addr %s662, 8
        %s664 = scalar_lea.vmem %s0, %s663
        %s665 = smul.u32 4, %s36
        %s666 = smul.u32 4, %s36
        %v667 = vld [vmem:[%s664] sm:$0xff]
        %v668 = vld [vmem:[%s664 + $0x8] sm:$0xff]
        %v669 = vld [vmem:[%s664 + $0x10] sm:$0xff]
        %v670 = vld [vmem:[%s664 + $0x18] sm:$0xff]
        %v671 = vld [vmem:[#allocation2] sm:$0x1]
        %v672 = vld [vmem:[#allocation5] sm:$0x1]
        %vm673 = vcmask 261120
        %v674 = vsel %vm673, %v667, 0.0
        %675 = vadd.xlane.f32.xlu0 %v674
        %v676 = vpop.xlane.xlu0 %675
        %v677 = vsel %vm673, %v668, 0.0
        %678 = vadd.xlane.f32.xlu0 %v677
        %v679 = vpop.xlane.xlu0 %678
        %v680 = vsel %vm673, %v669, 0.0
        %681 = vadd.xlane.f32.xlu0 %v680
        %v682 = vpop.xlane.xlu0 %681
        %v683 = vsel %vm673, %v670, 0.0
        %684 = vadd.xlane.f32.xlu0 %v683
        %v685 = vpop.xlane.xlu0 %684
        %v686 = vrcp.pop 32.0
        %v687 = vmul.f32 %v676, %v686
        %v688 = vmul.f32 %v679, %v686
        %v689 = vmul.f32 %v682, %v686
        %v690 = vmul.f32 %v685, %v686
        %v691 = vsub.f32 %v667, %v687
        %v692 = vsub.f32 %v668, %v688
        %v693 = vsub.f32 %v669, %v689
        %v694 = vsub.f32 %v670, %v690
        %v695 = vmul.f32 %v691, %v691
        %v696 = vmul.f32 %v692, %v692
        %v697 = vmul.f32 %v693, %v693
        %v698 = vmul.f32 %v694, %v694
        %v699 = vsel %vm673, %v695, 0.0
        %700 = vadd.xlane.f32.xlu0 %v699
        %v701 = vpop.xlane.xlu0 %700
        %v702 = vsel %vm673, %v696, 0.0
        %703 = vadd.xlane.f32.xlu0 %v702
        %v704 = vpop.xlane.xlu0 %703
        %v705 = vsel %vm673, %v697, 0.0
        %706 = vadd.xlane.f32.xlu0 %v705
        %v707 = vpop.xlane.xlu0 %706
        %v708 = vsel %vm673, %v698, 0.0
        %709 = vadd.xlane.f32.xlu0 %v708
        %v710 = vpop.xlane.xlu0 %709
        %v711 = vmul.f32 %v701, %v686
        %v712 = vmul.f32 %v704, %v686
        %v713 = vmul.f32 %v707, %v686
        %v714 = vmul.f32 %v710, %v686
        %v715 = vadd.f32 %v711, 1e-05
        %v716 = vadd.f32 %v712, 1e-05
        %v717 = vadd.f32 %v713, 1e-05
        %v718 = vadd.f32 %v714, 1e-05
        %v719 = vrsqrt.pop %v715
        %v720 = vrsqrt.pop %v716
        %v721 = vrsqrt.pop %v717
        %v722 = vrsqrt.pop %v718
        %v723 = vmul.f32 %v691, %v719
        %v724 = vmul.f32 %v692, %v720
        %v725 = vmul.f32 %v693, %v721
        %v726 = vmul.f32 %v694, %v722
        %v728 = vlaneseq
        %v729 = vshrl.u32 %v728, 7
        %v730 = vsub.s32 0, %v729
        %v731 = vrot.slane %v671, %v730
        %v733 = vmul.f32 %v723, %v731
        %v734 = vmul.f32 %v724, %v731
        %v735 = vmul.f32 %v725, %v731
        %v736 = vmul.f32 %v726, %v731
        %v738 = vlaneseq
        %v739 = vshrl.u32 %v738, 7
        %v740 = vsub.s32 0, %v739
        %v741 = vrot.slane %v672, %v740
        %v743 = vadd.f32 %v733, %v741
        %v744 = vadd.f32 %v734, %v741
        %v745 = vadd.f32 %v735, %v741
        %v746 = vadd.f32 %v736, %v741
        %747 = vxpose.xlu0.b32.start [1/16] %v743, 128
        %748 = vxpose.xlu0.b32.cont [2/16] 0.0, 128
        %749 = vxpose.xlu0.b32.cont [3/16] 0.0, 128
        %750 = vxpose.xlu0.b32.cont [4/16] 0.0, 128
        %751 = vxpose.xlu0.b32.cont [5/16] 0.0, 128
        %752 = vxpose.xlu0.b32.cont [6/16] 0.0, 128
        %753 = vxpose.xlu0.b32.cont [7/16] 0.0, 128
        %754 = vxpose.xlu0.b32.cont [8/16] 0.0, 128
        %755 = vxpose.xlu0.b32.cont [9/16] 0.0, 128
        %756 = vxpose.xlu0.b32.cont [10/16] 0.0, 128
        %757 = vxpose.xlu0.b32.cont [11/16] 0.0, 128
        %758 = vxpose.xlu0.b32.cont [12/16] 0.0, 128
        %759 = vxpose.xlu0.b32.cont [13/16] 0.0, 128
        %760 = vxpose.xlu0.b32.cont [14/16] 0.0, 128
        %761 = vxpose.xlu0.b32.cont [15/16] 0.0, 128
        %762 = vxpose.xlu0.b32.end [16/16] 0.0, 128
        %v763 = vpop.trf.xlu0
        %v764 = vpop.trf.xlu0
        %v765 = vpop.trf.xlu0
        %v766 = vpop.trf.xlu0
        %v767 = vpop.trf.xlu0
        %v768 = vpop.trf.xlu0
        %v769 = vpop.trf.xlu0
        %v770 = vpop.trf.xlu0
        %v771 = vpop.trf.xlu0
        %v772 = vpop.trf.xlu0
        %v773 = vpop.trf.xlu0
        %v774 = vpop.trf.xlu0
        %v775 = vpop.trf.xlu0
        %v776 = vpop.trf.xlu0
        %v777 = vpop.trf.xlu0
        %v778 = vpop.trf.xlu0
        %779 = vxpose.xlu0.b32.start [1/16] %v744, 128
        %780 = vxpose.xlu0.b32.cont [2/16] 0.0, 128
        %781 = vxpose.xlu0.b32.cont [3/16] 0.0, 128
        %782 = vxpose.xlu0.b32.cont [4/16] 0.0, 128
        %783 = vxpose.xlu0.b32.cont [5/16] 0.0, 128
        %784 = vxpose.xlu0.b32.cont [6/16] 0.0, 128
        %785 = vxpose.xlu0.b32.cont [7/16] 0.0, 128
        %786 = vxpose.xlu0.b32.cont [8/16] 0.0, 128
        %787 = vxpose.xlu0.b32.cont [9/16] 0.0, 128
        %788 = vxpose.xlu0.b32.cont [10/16] 0.0, 128
        %789 = vxpose.xlu0.b32.cont [11/16] 0.0, 128
        %790 = vxpose.xlu0.b32.cont [12/16] 0.0, 128
        %791 = vxpose.xlu0.b32.cont [13/16] 0.0, 128
        %792 = vxpose.xlu0.b32.cont [14/16] 0.0, 128
        %793 = vxpose.xlu0.b32.cont [15/16] 0.0, 128
        %794 = vxpose.xlu0.b32.end [16/16] 0.0, 128
        %v795 = vpop.trf.xlu0
        %v796 = vpop.trf.xlu0
        %v797 = vpop.trf.xlu0
        %v798 = vpop.trf.xlu0
        %v799 = vpop.trf.xlu0
        %v800 = vpop.trf.xlu0
        %v801 = vpop.trf.xlu0
        %v802 = vpop.trf.xlu0
        %v803 = vpop.trf.xlu0
        %v804 = vpop.trf.xlu0
        %v805 = vpop.trf.xlu0
        %v806 = vpop.trf.xlu0
        %v807 = vpop.trf.xlu0
        %v808 = vpop.trf.xlu0
        %v809 = vpop.trf.xlu0
        %v810 = vpop.trf.xlu0
        %811 = vxpose.xlu0.b32.start [1/16] %v745, 128
        %812 = vxpose.xlu0.b32.cont [2/16] 0.0, 128
        %813 = vxpose.xlu0.b32.cont [3/16] 0.0, 128
        %814 = vxpose.xlu0.b32.cont [4/16] 0.0, 128
        %815 = vxpose.xlu0.b32.cont [5/16] 0.0, 128
        %816 = vxpose.xlu0.b32.cont [6/16] 0.0, 128
        %817 = vxpose.xlu0.b32.cont [7/16] 0.0, 128
        %818 = vxpose.xlu0.b32.cont [8/16] 0.0, 128
        %819 = vxpose.xlu0.b32.cont [9/16] 0.0, 128
        %820 = vxpose.xlu0.b32.cont [10/16] 0.0, 128
        %821 = vxpose.xlu0.b32.cont [11/16] 0.0, 128
        %822 = vxpose.xlu0.b32.cont [12/16] 0.0, 128
        %823 = vxpose.xlu0.b32.cont [13/16] 0.0, 128
        %824 = vxpose.xlu0.b32.cont [14/16] 0.0, 128
        %825 = vxpose.xlu0.b32.cont [15/16] 0.0, 128
        %826 = vxpose.xlu0.b32.end [16/16] 0.0, 128
        %v827 = vpop.trf.xlu0
        %v828 = vpop.trf.xlu0
        %v829 = vpop.trf.xlu0
        %v830 = vpop.trf.xlu0
        %v831 = vpop.trf.xlu0
        %v832 = vpop.trf.xlu0
        %v833 = vpop.trf.xlu0
        %v834 = vpop.trf.xlu0
        %v835 = vpop.trf.xlu0
        %v836 = vpop.trf.xlu0
        %v837 = vpop.trf.xlu0
        %v838 = vpop.trf.xlu0
        %v839 = vpop.trf.xlu0
        %v840 = vpop.trf.xlu0
        %v841 = vpop.trf.xlu0
        %v842 = vpop.trf.xlu0
        %843 = vxpose.xlu0.b32.start [1/16] %v746, 128
        %844 = vxpose.xlu0.b32.cont [2/16] 0.0, 128
        %845 = vxpose.xlu0.b32.cont [3/16] 0.0, 128
        %846 = vxpose.xlu0.b32.cont [4/16] 0.0, 128
        %847 = vxpose.xlu0.b32.cont [5/16] 0.0, 128
        %848 = vxpose.xlu0.b32.cont [6/16] 0.0, 128
        %849 = vxpose.xlu0.b32.cont [7/16] 0.0, 128
        %850 = vxpose.xlu0.b32.cont [8/16] 0.0, 128
        %851 = vxpose.xlu0.b32.cont [9/16] 0.0, 128
        %852 = vxpose.xlu0.b32.cont [10/16] 0.0, 128
        %853 = vxpose.xlu0.b32.cont [11/16] 0.0, 128
        %854 = vxpose.xlu0.b32.cont [12/16] 0.0, 128
        %855 = vxpose.xlu0.b32.cont [13/16] 0.0, 128
        %856 = vxpose.xlu0.b32.cont [14/16] 0.0, 128
        %857 = vxpose.xlu0.b32.cont [15/16] 0.0, 128
        %858 = vxpose.xlu0.b32.end [16/16] 0.0, 128
        %v859 = vpop.trf.xlu0
        %v860 = vpop.trf.xlu0
        %v861 = vpop.trf.xlu0
        %v862 = vpop.trf.xlu0
        %v863 = vpop.trf.xlu0
        %v864 = vpop.trf.xlu0
        %v865 = vpop.trf.xlu0
        %v866 = vpop.trf.xlu0
        %v867 = vpop.trf.xlu0
        %v868 = vpop.trf.xlu0
        %v869 = vpop.trf.xlu0
        %v870 = vpop.trf.xlu0
        %v871 = vpop.trf.xlu0
        %v872 = vpop.trf.xlu0
        %v873 = vpop.trf.xlu0
        %v874 = vpop.trf.xlu0
        %v875 = vld [vmem:[%s3] sm:$0xff]
        %v876 = vld [vmem:[#allocation7] sm:$0x1]
        %v878 = vlaneseq
        %v879 = vshrl.u32 %v878, 7
        %v880 = vsub.s32 0, %v879
        %v881 = vrot.slane %v876, %v880
        %vm883 = vcmask 64512
        %v885 = vsel %vm883, %v763, 0
        %v888 = vsel %vm883, %v764, 0
        %v891 = vsel %vm883, %v765, 0
        %v894 = vsel %vm883, %v766, 0
        %v897 = vsel %vm883, %v795, 0
        %v900 = vsel %vm883, %v796, 0
        %v903 = vsel %vm883, %v797, 0
        %v906 = vsel %vm883, %v798, 0
        %v909 = vsel %vm883, %v827, 0
        %v912 = vsel %vm883, %v828, 0
        %v915 = vsel %vm883, %v829, 0
        %v918 = vsel %vm883, %v830, 0
        %v921 = vsel %vm883, %v859, 0
        %v924 = vsel %vm883, %v860, 0
        %v927 = vsel %vm883, %v861, 0
        %v930 = vsel %vm883, %v862, 0
        %932 = vmatprep.subr.mxu0 0.0
        %933 = vmatpush1.msra.mxu0 %v875
        %934 = vmatprep.subr.mxu0 0.0
        %935 = vmatpush1.msra.mxu0 0.0
        %936 = vmatprep.subr.mxu0 0.0
        %937 = vmatpush1.msra.mxu0 0.0
        %938 = vmatprep.subr.mxu0 0.0
        %939 = vmatpush1.msra.mxu0 0.0
        %940 = vmatprep.subr.mxu0 0.0
        %941 = vmatpush1.msra.mxu0 0.0
        %942 = vmatprep.subr.mxu0 0.0
        %943 = vmatpush1.msra.mxu0 0.0
        %944 = vmatprep.subr.mxu0 0.0
        %945 = vmatpush1.msra.mxu0 0.0
        %946 = vmatprep.subr.mxu0 0.0
        %947 = vmatpush1.msra.mxu0 0.0
        %948 = vmatprep.subr.mxu0 0.0
        %949 = vmatpush1.msra.mxu0 0.0
        %950 = vmatprep.subr.mxu0 0.0
        %951 = vmatpush1.msra.mxu0 0.0
        %952 = vmatprep.subr.mxu0 0.0
        %953 = vmatpush1.msra.mxu0 0.0
        %954 = vmatprep.subr.mxu0 0.0
        %955 = vmatpush1.msra.mxu0 0.0
        %956 = vmatprep.subr.mxu0 0.0
        %957 = vmatpush1.msra.mxu0 0.0
        %958 = vmatprep.subr.mxu0 0.0
        %959 = vmatpush1.msra.mxu0 0.0
        %960 = vmatprep.subr.mxu0 0.0
        %961 = vmatpush1.msra.mxu0 0.0
        %962 = vmatprep.subr.mxu0 0.0
        %963 = vmatpush1.msra.mxu0 0.0
        %964 = vmatprep.subr.mxu0 0.0
        %965 = vmatpush1.msra.mxu0 0.0
        %966 = vmatprep.subr.mxu0 0.0
        %967 = vmatpush1.msra.mxu0 0.0
        %968 = vmatprep.subr.mxu0 0.0
        %969 = vmatpush1.msra.mxu0 0.0
        %970 = vmatprep.subr.mxu0 0.0
        %971 = vmatpush1.msra.mxu0 0.0
        %972 = vmatprep.subr.mxu0 0.0
        %973 = vmatpush1.msra.mxu0 0.0
        %974 = vmatprep.subr.mxu0 0.0
        %975 = vmatpush1.msra.mxu0 0.0
        %976 = vmatprep.subr.mxu0 0.0
        %977 = vmatpush1.msra.mxu0 0.0
        %978 = vmatprep.subr.mxu0 0.0
        %979 = vmatpush1.msra.mxu0 0.0
        %980 = vmatprep.subr.mxu0 0.0
        %981 = vmatpush1.msra.mxu0 0.0
        %982 = vmatprep.subr.mxu0 0.0
        %983 = vmatpush1.msra.mxu0 0.0
        %984 = vmatprep.subr.mxu0 0.0
        %985 = vmatpush1.msra.mxu0 0.0
        %986 = vmatprep.subr.mxu0 0.0
        %987 = vmatpush1.msra.mxu0 0.0
        %988 = vmatprep.subr.mxu0 0.0
        %989 = vmatpush1.msra.mxu0 0.0
        %990 = vmatprep.subr.mxu0 0.0
        %991 = vmatpush1.msra.mxu0 0.0
        %992 = vmatprep.subr.mxu0 0.0
        %993 = vmatpush1.msra.mxu0 0.0
        %994 = vmatprep.subr.mxu0 0.0
        %995 = vmatpush1.msra.mxu0 0.0
        %996 = vmatprep.mubr.f32.mxu0 0.0
        %997 = vmatmul.mubr.f32.gmra.mrb[0].mxu0 %v885
        %v998 = vpop.f32.mrb[0].mxu0
        %v999 = vadd.f32 %v881, %v998
        %v1000 = vpop.f32.mrb[0].mxu0
        %1001 = vmatprep.mubr.f32.mxu0 0.0
        %1002 = vmatmul.mubr.f32.gmra.mrb[0].mxu0 %v888
        %v1003 = vpop.f32.mrb[0].mxu0
        %v1004 = vadd.f32 %v881, %v1003
        %v1005 = vpop.f32.mrb[0].mxu0
        %1006 = vmatprep.mubr.f32.mxu0 0.0
        %1007 = vmatmul.mubr.f32.gmra.mrb[0].mxu0 %v891
        %v1008 = vpop.f32.mrb[0].mxu0
        %v1009 = vadd.f32 %v881, %v1008
        %v1010 = vpop.f32.mrb[0].mxu0
        %1011 = vmatprep.mubr.f32.mxu0 0.0
        %1012 = vmatmul.mubr.f32.gmra.mrb[0].mxu0 %v894
        %v1013 = vpop.f32.mrb[0].mxu0
        %v1014 = vadd.f32 %v881, %v1013
        %v1015 = vpop.f32.mrb[0].mxu0
        %1016 = vmatprep.mubr.f32.mxu0 0.0
        %1017 = vmatmul.mubr.f32.gmra.mrb[0].mxu0 %v897
        %v1018 = vpop.f32.mrb[0].mxu0
        %v1019 = vadd.f32 %v881, %v1018
        %v1020 = vpop.f32.mrb[0].mxu0
        %1021 = vmatprep.mubr.f32.mxu0 0.0
        %1022 = vmatmul.mubr.f32.gmra.mrb[0].mxu0 %v900
        %v1023 = vpop.f32.mrb[0].mxu0
        %v1024 = vadd.f32 %v881, %v1023
        %v1025 = vpop.f32.mrb[0].mxu0
        %1026 = vmatprep.mubr.f32.mxu0 0.0
        %1027 = vmatmul.mubr.f32.gmra.mrb[0].mxu0 %v903
        %v1028 = vpop.f32.mrb[0].mxu0
        %v1029 = vadd.f32 %v881, %v1028
        %v1030 = vpop.f32.mrb[0].mxu0
        %1031 = vmatprep.mubr.f32.mxu0 0.0
        %1032 = vmatmul.mubr.f32.gmra.mrb[0].mxu0 %v906
        %v1033 = vpop.f32.mrb[0].mxu0
        %v1034 = vadd.f32 %v881, %v1033
        %v1035 = vpop.f32.mrb[0].mxu0
        %1036 = vmatprep.mubr.f32.mxu0 0.0
        %1037 = vmatmul.mubr.f32.gmra.mrb[0].mxu0 %v909
        %v1038 = vpop.f32.mrb[0].mxu0
        %v1039 = vadd.f32 %v881, %v1038
        %v1040 = vpop.f32.mrb[0].mxu0
        %1041 = vmatprep.mubr.f32.mxu0 0.0
        %1042 = vmatmul.mubr.f32.gmra.mrb[0].mxu0 %v912
        %v1043 = vpop.f32.mrb[0].mxu0
        %v1044 = vadd.f32 %v881, %v1043
        %v1045 = vpop.f32.mrb[0].mxu0
        %1046 = vmatprep.mubr.f32.mxu0 0.0
        %1047 = vmatmul.mubr.f32.gmra.mrb[0].mxu0 %v915
        %v1048 = vpop.f32.mrb[0].mxu0
        %v1049 = vadd.f32 %v881, %v1048
        %v1050 = vpop.f32.mrb[0].mxu0
        %1051 = vmatprep.mubr.f32.mxu0 0.0
        %1052 = vmatmul.mubr.f32.gmra.mrb[0].mxu0 %v918
        %v1053 = vpop.f32.mrb[0].mxu0
        %v1054 = vadd.f32 %v881, %v1053
        %v1055 = vpop.f32.mrb[0].mxu0
        %1056 = vmatprep.mubr.f32.mxu0 0.0
        %1057 = vmatmul.mubr.f32.gmra.mrb[0].mxu0 %v921
        %v1058 = vpop.f32.mrb[0].mxu0
        %v1059 = vadd.f32 %v881, %v1058
        %v1060 = vpop.f32.mrb[0].mxu0
        %1061 = vmatprep.mubr.f32.mxu0 0.0
        %1062 = vmatmul.mubr.f32.gmra.mrb[0].mxu0 %v924
        %v1063 = vpop.f32.mrb[0].mxu0
        %v1064 = vadd.f32 %v881, %v1063
        %v1065 = vpop.f32.mrb[0].mxu0
        %1066 = vmatprep.mubr.f32.mxu0 0.0
        %1067 = vmatmul.mubr.f32.gmra.mrb[0].mxu0 %v927
        %v1068 = vpop.f32.mrb[0].mxu0
        %v1069 = vadd.f32 %v881, %v1068
        %v1070 = vpop.f32.mrb[0].mxu0
        %1071 = vmatprep.mubr.f32.mxu0 0.0
        %1072 = vmatmul.mubr.f32.gmra.mrb[0].mxu0 %v930
        %v1073 = vpop.f32.mrb[0].mxu0
        %v1074 = vadd.f32 %v881, %v1073
        %v1075 = vpop.f32.mrb[0].mxu0
        %1076 = vdwg.mxu0
        %v1077 = vmul.f32 %v999, 0.5
        %v1078 = vmul.f32 %v1004, 0.5
        %v1079 = vmul.f32 %v1009, 0.5
        %v1080 = vmul.f32 %v1014, 0.5
        %v1081 = vmul.f32 %v1019, 0.5
        %v1082 = vmul.f32 %v1024, 0.5
        %v1083 = vmul.f32 %v1029, 0.5
        %v1084 = vmul.f32 %v1034, 0.5
        %v1085 = vmul.f32 %v1039, 0.5
        %v1086 = vmul.f32 %v1044, 0.5
        %v1087 = vmul.f32 %v1049, 0.5
        %v1088 = vmul.f32 %v1054, 0.5
        %v1089 = vmul.f32 %v1059, 0.5
        %v1090 = vmul.f32 %v1064, 0.5
        %v1091 = vmul.f32 %v1069, 0.5
        %v1092 = vmul.f32 %v1074, 0.5
        %v1093 = vmul.f32 %v999, 0.70710677
        %v1094 = vmul.f32 %v1004, 0.70710677
        %v1095 = vmul.f32 %v1009, 0.70710677
        %v1096 = vmul.f32 %v1014, 0.70710677
        %v1097 = vmul.f32 %v1019, 0.70710677
        %v1098 = vmul.f32 %v1024, 0.70710677
        %v1099 = vmul.f32 %v1029, 0.70710677
        %v1100 = vmul.f32 %v1034, 0.70710677
        %v1101 = vmul.f32 %v1039, 0.70710677
        %v1102 = vmul.f32 %v1044, 0.70710677
        %v1103 = vmul.f32 %v1049, 0.70710677
        %v1104 = vmul.f32 %v1054, 0.70710677
        %v1105 = vmul.f32 %v1059, 0.70710677
        %v1106 = vmul.f32 %v1064, 0.70710677
        %v1107 = vmul.f32 %v1069, 0.70710677
        %v1108 = vmul.f32 %v1074, 0.70710677
        %v1109 = verf.f32.pop %v1093
        %v1110 = verf.f32.pop %v1094
        %v1111 = verf.f32.pop %v1095
        %v1112 = verf.f32.pop %v1096
        %v1113 = verf.f32.pop %v1097
        %v1114 = verf.f32.pop %v1098
        %v1115 = verf.f32.pop %v1099
        %v1116 = verf.f32.pop %v1100
        %v1117 = verf.f32.pop %v1101
        %v1118 = verf.f32.pop %v1102
        %v1119 = verf.f32.pop %v1103
        %v1120 = verf.f32.pop %v1104
        %v1121 = verf.f32.pop %v1105
        %v1122 = verf.f32.pop %v1106
        %v1123 = verf.f32.pop %v1107
        %v1124 = verf.f32.pop %v1108
        %v1125 = vadd.f32 %v1109, 1.0
        %v1126 = vadd.f32 %v1110, 1.0
        %v1127 = vadd.f32 %v1111, 1.0
        %v1128 = vadd.f32 %v1112, 1.0
        %v1129 = vadd.f32 %v1113, 1.0
        %v1130 = vadd.f32 %v1114, 1.0
        %v1131 = vadd.f32 %v1115, 1.0
        %v1132 = vadd.f32 %v1116, 1.0
        %v1133 = vadd.f32 %v1117, 1.0
        %v1134 = vadd.f32 %v1118, 1.0
        %v1135 = vadd.f32 %v1119, 1.0
        %v1136 = vadd.f32 %v1120, 1.0
        %v1137 = vadd.f32 %v1121, 1.0
        %v1138 = vadd.f32 %v1122, 1.0
        %v1139 = vadd.f32 %v1123, 1.0
        %v1140 = vadd.f32 %v1124, 1.0
        %v1141 = vmul.f32 %v1077, %v1125
        %v1142 = vmul.f32 %v1078, %v1126
        %v1143 = vmul.f32 %v1079, %v1127
        %v1144 = vmul.f32 %v1080, %v1128
        %v1145 = vmul.f32 %v1081, %v1129
        %v1146 = vmul.f32 %v1082, %v1130
        %v1147 = vmul.f32 %v1083, %v1131
        %v1148 = vmul.f32 %v1084, %v1132
        %v1149 = vmul.f32 %v1085, %v1133
        %v1150 = vmul.f32 %v1086, %v1134
        %v1151 = vmul.f32 %v1087, %v1135
        %v1152 = vmul.f32 %v1088, %v1136
        %v1153 = vmul.f32 %v1089, %v1137
        %v1154 = vmul.f32 %v1090, %v1138
        %v1155 = vmul.f32 %v1091, %v1139
        %v1156 = vmul.f32 %v1092, %v1140
        %v1157 = vld [vmem:[%s5] sm:$0xff]
        %v1158 = vld [vmem:[%s5 + $0x8] sm:$0xff]
        %v1159 = vld [vmem:[#allocation8] sm:$0x1]
        %v1161 = vlaneseq
        %v1162 = vshrl.u32 %v1161, 7
        %v1163 = vsub.s32 0, %v1162
        %v1164 = vrot.slane %v1159, %v1163
        %vm1166 = vcmask 130048
        %v1168 = vsel %vm1166, %v1141, 0
        %v1171 = vsel %vm1166, %v1142, 0
        %v1174 = vsel %vm1166, %v1143, 0
        %v1177 = vsel %vm1166, %v1144, 0
        %v1180 = vsel %vm1166, %v1145, 0
        %v1183 = vsel %vm1166, %v1146, 0
        %v1186 = vsel %vm1166, %v1147, 0
        %v1189 = vsel %vm1166, %v1148, 0
        %v1192 = vsel %vm1166, %v1149, 0
        %v1195 = vsel %vm1166, %v1150, 0
        %v1198 = vsel %vm1166, %v1151, 0
        %v1201 = vsel %vm1166, %v1152, 0
        %v1204 = vsel %vm1166, %v1153, 0
        %v1207 = vsel %vm1166, %v1154, 0
        %v1210 = vsel %vm1166, %v1155, 0
        %v1213 = vsel %vm1166, %v1156, 0
        %1215 = vmatprep.subr.mxu0 0.0
        %1216 = vmatpush1.msra.mxu0 %v1157
        %1217 = vmatprep.subr.mxu0 0.0
        %1218 = vmatpush1.msra.mxu0 %v1158
        %1219 = vmatprep.subr.mxu0 0.0
        %1220 = vmatpush1.msra.mxu0 0.0
        %1221 = vmatprep.subr.mxu0 0.0
        %1222 = vmatpush1.msra.mxu0 0.0
        %1223 = vmatprep.subr.mxu0 0.0
        %1224 = vmatpush1.msra.mxu0 0.0
        %1225 = vmatprep.subr.mxu0 0.0
        %1226 = vmatpush1.msra.mxu0 0.0
        %1227 = vmatprep.subr.mxu0 0.0
        %1228 = vmatpush1.msra.mxu0 0.0
        %1229 = vmatprep.subr.mxu0 0.0
        %1230 = vmatpush1.msra.mxu0 0.0
        %1231 = vmatprep.subr.mxu0 0.0
        %1232 = vmatpush1.msra.mxu0 0.0
        %1233 = vmatprep.subr.mxu0 0.0
        %1234 = vmatpush1.msra.mxu0 0.0
        %1235 = vmatprep.subr.mxu0 0.0
        %1236 = vmatpush1.msra.mxu0 0.0
        %1237 = vmatprep.subr.mxu0 0.0
        %1238 = vmatpush1.msra.mxu0 0.0
        %1239 = vmatprep.subr.mxu0 0.0
        %1240 = vmatpush1.msra.mxu0 0.0
        %1241 = vmatprep.subr.mxu0 0.0
        %1242 = vmatpush1.msra.mxu0 0.0
        %1243 = vmatprep.subr.mxu0 0.0
        %1244 = vmatpush1.msra.mxu0 0.0
        %1245 = vmatprep.subr.mxu0 0.0
        %1246 = vmatpush1.msra.mxu0 0.0
        %1247 = vmatprep.subr.mxu0 0.0
        %1248 = vmatpush1.msra.mxu0 0.0
        %1249 = vmatprep.subr.mxu0 0.0
        %1250 = vmatpush1.msra.mxu0 0.0
        %1251 = vmatprep.subr.mxu0 0.0
        %1252 = vmatpush1.msra.mxu0 0.0
        %1253 = vmatprep.subr.mxu0 0.0
        %1254 = vmatpush1.msra.mxu0 0.0
        %1255 = vmatprep.subr.mxu0 0.0
        %1256 = vmatpush1.msra.mxu0 0.0
        %1257 = vmatprep.subr.mxu0 0.0
        %1258 = vmatpush1.msra.mxu0 0.0
        %1259 = vmatprep.subr.mxu0 0.0
        %1260 = vmatpush1.msra.mxu0 0.0
        %1261 = vmatprep.subr.mxu0 0.0
        %1262 = vmatpush1.msra.mxu0 0.0
        %1263 = vmatprep.subr.mxu0 0.0
        %1264 = vmatpush1.msra.mxu0 0.0
        %1265 = vmatprep.subr.mxu0 0.0
        %1266 = vmatpush1.msra.mxu0 0.0
        %1267 = vmatprep.subr.mxu0 0.0
        %1268 = vmatpush1.msra.mxu0 0.0
        %1269 = vmatprep.subr.mxu0 0.0
        %1270 = vmatpush1.msra.mxu0 0.0
        %1271 = vmatprep.subr.mxu0 0.0
        %1272 = vmatpush1.msra.mxu0 0.0
        %1273 = vmatprep.subr.mxu0 0.0
        %1274 = vmatpush1.msra.mxu0 0.0
        %1275 = vmatprep.subr.mxu0 0.0
        %1276 = vmatpush1.msra.mxu0 0.0
        %1277 = vmatprep.subr.mxu0 0.0
        %1278 = vmatpush1.msra.mxu0 0.0
        %1279 = vmatprep.mubr.f32.mxu0 0.0
        %1280 = vmatmul.mubr.f32.gmra.mrb[0].mxu0 %v1168
        %v1281 = vpop.f32.mrb[0].mxu0
        %v1282 = vadd.f32 %v1164, %v1281
        %v1283 = vpop.f32.mrb[0].mxu0
        %1284 = vmatprep.mubr.f32.mxu0 0.0
        %1285 = vmatmul.mubr.f32.gmra.mrb[0].mxu0 %v1171
        %v1286 = vpop.f32.mrb[0].mxu0
        %v1287 = vadd.f32 %v1164, %v1286
        %v1288 = vpop.f32.mrb[0].mxu0
        %1289 = vmatprep.mubr.f32.mxu0 0.0
        %1290 = vmatmul.mubr.f32.gmra.mrb[0].mxu0 %v1174
        %v1291 = vpop.f32.mrb[0].mxu0
        %v1292 = vadd.f32 %v1164, %v1291
        %v1293 = vpop.f32.mrb[0].mxu0
        %1294 = vmatprep.mubr.f32.mxu0 0.0
        %1295 = vmatmul.mubr.f32.gmra.mrb[0].mxu0 %v1177
        %v1296 = vpop.f32.mrb[0].mxu0
        %v1297 = vadd.f32 %v1164, %v1296
        %v1298 = vpop.f32.mrb[0].mxu0
        %1299 = vmatprep.mubr.f32.mxu0 0.0
        %1300 = vmatmul.mubr.f32.gmra.mrb[0].mxu0 %v1180
        %v1301 = vpop.f32.mrb[0].mxu0
        %v1302 = vadd.f32 %v1164, %v1301
        %v1303 = vpop.f32.mrb[0].mxu0
        %1304 = vmatprep.mubr.f32.mxu0 0.0
        %1305 = vmatmul.mubr.f32.gmra.mrb[0].mxu0 %v1183
        %v1306 = vpop.f32.mrb[0].mxu0
        %v1307 = vadd.f32 %v1164, %v1306
        %v1308 = vpop.f32.mrb[0].mxu0
        %1309 = vmatprep.mubr.f32.mxu0 0.0
        %1310 = vmatmul.mubr.f32.gmra.mrb[0].mxu0 %v1186
        %v1311 = vpop.f32.mrb[0].mxu0
        %v1312 = vadd.f32 %v1164, %v1311
        %v1313 = vpop.f32.mrb[0].mxu0
        %1314 = vmatprep.mubr.f32.mxu0 0.0
        %1315 = vmatmul.mubr.f32.gmra.mrb[0].mxu0 %v1189
        %v1316 = vpop.f32.mrb[0].mxu0
        %v1317 = vadd.f32 %v1164, %v1316
        %v1318 = vpop.f32.mrb[0].mxu0
        %1319 = vmatprep.mubr.f32.mxu0 0.0
        %1320 = vmatmul.mubr.f32.gmra.mrb[0].mxu0 %v1192
        %v1321 = vpop.f32.mrb[0].mxu0
        %v1322 = vadd.f32 %v1164, %v1321
        %v1323 = vpop.f32.mrb[0].mxu0
        %1324 = vmatprep.mubr.f32.mxu0 0.0
        %1325 = vmatmul.mubr.f32.gmra.mrb[0].mxu0 %v1195
        %v1326 = vpop.f32.mrb[0].mxu0
        %v1327 = vadd.f32 %v1164, %v1326
        %v1328 = vpop.f32.mrb[0].mxu0
        %1329 = vmatprep.mubr.f32.mxu0 0.0
        %1330 = vmatmul.mubr.f32.gmra.mrb[0].mxu0 %v1198
        %v1331 = vpop.f32.mrb[0].mxu0
        %v1332 = vadd.f32 %v1164, %v1331
        %v1333 = vpop.f32.mrb[0].mxu0
        %1334 = vmatprep.mubr.f32.mxu0 0.0
        %1335 = vmatmul.mubr.f32.gmra.mrb[0].mxu0 %v1201
        %v1336 = vpop.f32.mrb[0].mxu0
        %v1337 = vadd.f32 %v1164, %v1336
        %v1338 = vpop.f32.mrb[0].mxu0
        %1339 = vmatprep.mubr.f32.mxu0 0.0
        %1340 = vmatmul.mubr.f32.gmra.mrb[0].mxu0 %v1204
        %v1341 = vpop.f32.mrb[0].mxu0
        %v1342 = vadd.f32 %v1164, %v1341
        %v1343 = vpop.f32.mrb[0].mxu0
        %1344 = vmatprep.mubr.f32.mxu0 0.0
        %1345 = vmatmul.mubr.f32.gmra.mrb[0].mxu0 %v1207
        %v1346 = vpop.f32.mrb[0].mxu0
        %v1347 = vadd.f32 %v1164, %v1346
        %v1348 = vpop.f32.mrb[0].mxu0
        %1349 = vmatprep.mubr.f32.mxu0 0.0
        %1350 = vmatmul.mubr.f32.gmra.mrb[0].mxu0 %v1210
        %v1351 = vpop.f32.mrb[0].mxu0
        %v1352 = vadd.f32 %v1164, %v1351
        %v1353 = vpop.f32.mrb[0].mxu0
        %1354 = vmatprep.mubr.f32.mxu0 0.0
        %1355 = vmatmul.mubr.f32.gmra.mrb[0].mxu0 %v1213
        %v1356 = vpop.f32.mrb[0].mxu0
        %v1357 = vadd.f32 %v1164, %v1356
        %v1358 = vpop.f32.mrb[0].mxu0
        %1359 = vdwg.mxu0
        %v1360 = vld [vmem:[%s7] sm:$0xff]
        %v1361 = vld [vmem:[#allocation10] sm:$0x1]
        %v1363 = vlaneseq
        %v1364 = vshrl.u32 %v1363, 7
        %v1365 = vsub.s32 0, %v1364
        %v1366 = vrot.slane %v1361, %v1365
        %v1369 = vsel %vm883, %v1282, 0
        %v1372 = vsel %vm883, %v1287, 0
        %v1375 = vsel %vm883, %v1292, 0
        %v1378 = vsel %vm883, %v1297, 0
        %v1381 = vsel %vm883, %v1302, 0
        %v1384 = vsel %vm883, %v1307, 0
        %v1387 = vsel %vm883, %v1312, 0
        %v1390 = vsel %vm883, %v1317, 0
        %v1393 = vsel %vm883, %v1322, 0
        %v1396 = vsel %vm883, %v1327, 0
        %v1399 = vsel %vm883, %v1332, 0
        %v1402 = vsel %vm883, %v1337, 0
        %v1405 = vsel %vm883, %v1342, 0
        %v1408 = vsel %vm883, %v1347, 0
        %v1411 = vsel %vm883, %v1352, 0
        %v1414 = vsel %vm883, %v1357, 0
        %1416 = vmatprep.subr.mxu0 0.0
        %1417 = vmatpush1.msra.mxu0 %v1360
        %1418 = vmatprep.subr.mxu0 0.0
        %1419 = vmatpush1.msra.mxu0 0.0
        %1420 = vmatprep.subr.mxu0 0.0
        %1421 = vmatpush1.msra.mxu0 0.0
        %1422 = vmatprep.subr.mxu0 0.0
        %1423 = vmatpush1.msra.mxu0 0.0
        %1424 = vmatprep.subr.mxu0 0.0
        %1425 = vmatpush1.msra.mxu0 0.0
        %1426 = vmatprep.subr.mxu0 0.0
        %1427 = vmatpush1.msra.mxu0 0.0
        %1428 = vmatprep.subr.mxu0 0.0
        %1429 = vmatpush1.msra.mxu0 0.0
        %1430 = vmatprep.subr.mxu0 0.0
        %1431 = vmatpush1.msra.mxu0 0.0
        %1432 = vmatprep.subr.mxu0 0.0
        %1433 = vmatpush1.msra.mxu0 0.0
        %1434 = vmatprep.subr.mxu0 0.0
        %1435 = vmatpush1.msra.mxu0 0.0
        %1436 = vmatprep.subr.mxu0 0.0
        %1437 = vmatpush1.msra.mxu0 0.0
        %1438 = vmatprep.subr.mxu0 0.0
        %1439 = vmatpush1.msra.mxu0 0.0
        %1440 = vmatprep.subr.mxu0 0.0
        %1441 = vmatpush1.msra.mxu0 0.0
        %1442 = vmatprep.subr.mxu0 0.0
        %1443 = vmatpush1.msra.mxu0 0.0
        %1444 = vmatprep.subr.mxu0 0.0
        %1445 = vmatpush1.msra.mxu0 0.0
        %1446 = vmatprep.subr.mxu0 0.0
        %1447 = vmatpush1.msra.mxu0 0.0
        %1448 = vmatprep.subr.mxu0 0.0
        %1449 = vmatpush1.msra.mxu0 0.0
        %1450 = vmatprep.subr.mxu0 0.0
        %1451 = vmatpush1.msra.mxu0 0.0
        %1452 = vmatprep.subr.mxu0 0.0
        %1453 = vmatpush1.msra.mxu0 0.0
        %1454 = vmatprep.subr.mxu0 0.0
        %1455 = vmatpush1.msra.mxu0 0.0
        %1456 = vmatprep.subr.mxu0 0.0
        %1457 = vmatpush1.msra.mxu0 0.0
        %1458 = vmatprep.subr.mxu0 0.0
        %1459 = vmatpush1.msra.mxu0 0.0
        %1460 = vmatprep.subr.mxu0 0.0
        %1461 = vmatpush1.msra.mxu0 0.0
        %1462 = vmatprep.subr.mxu0 0.0
        %1463 = vmatpush1.msra.mxu0 0.0
        %1464 = vmatprep.subr.mxu0 0.0
        %1465 = vmatpush1.msra.mxu0 0.0
        %1466 = vmatprep.subr.mxu0 0.0
        %1467 = vmatpush1.msra.mxu0 0.0
        %1468 = vmatprep.subr.mxu0 0.0
        %1469 = vmatpush1.msra.mxu0 0.0
        %1470 = vmatprep.subr.mxu0 0.0
        %1471 = vmatpush1.msra.mxu0 0.0
        %1472 = vmatprep.subr.mxu0 0.0
        %1473 = vmatpush1.msra.mxu0 0.0
        %1474 = vmatprep.subr.mxu0 0.0
        %1475 = vmatpush1.msra.mxu0 0.0
        %1476 = vmatprep.subr.mxu0 0.0
        %1477 = vmatpush1.msra.mxu0 0.0
        %1478 = vmatprep.subr.mxu0 0.0
        %1479 = vmatpush1.msra.mxu0 0.0
        %1480 = vmatprep.mubr.f32.mxu0 0.0
        %1481 = vmatmul.mubr.f32.gmra.mrb[0].mxu0 %v1369
        %v1482 = vpop.f32.mrb[0].mxu0
        %v1483 = vadd.f32 %v1366, %v1482
        %v1484 = vpop.f32.mrb[0].mxu0
        %1485 = vmatprep.mubr.f32.mxu0 0.0
        %1486 = vmatmul.mubr.f32.gmra.mrb[0].mxu0 %v1372
        %v1487 = vpop.f32.mrb[0].mxu0
        %v1488 = vadd.f32 %v1366, %v1487
        %v1489 = vpop.f32.mrb[0].mxu0
        %1490 = vmatprep.mubr.f32.mxu0 0.0
        %1491 = vmatmul.mubr.f32.gmra.mrb[0].mxu0 %v1375
        %v1492 = vpop.f32.mrb[0].mxu0
        %v1493 = vadd.f32 %v1366, %v1492
        %v1494 = vpop.f32.mrb[0].mxu0
        %1495 = vmatprep.mubr.f32.mxu0 0.0
        %1496 = vmatmul.mubr.f32.gmra.mrb[0].mxu0 %v1378
        %v1497 = vpop.f32.mrb[0].mxu0
        %v1498 = vadd.f32 %v1366, %v1497
        %v1499 = vpop.f32.mrb[0].mxu0
        %1500 = vmatprep.mubr.f32.mxu0 0.0
        %1501 = vmatmul.mubr.f32.gmra.mrb[0].mxu0 %v1381
        %v1502 = vpop.f32.mrb[0].mxu0
        %v1503 = vadd.f32 %v1366, %v1502
        %v1504 = vpop.f32.mrb[0].mxu0
        %1505 = vmatprep.mubr.f32.mxu0 0.0
        %1506 = vmatmul.mubr.f32.gmra.mrb[0].mxu0 %v1384
        %v1507 = vpop.f32.mrb[0].mxu0
        %v1508 = vadd.f32 %v1366, %v1507
        %v1509 = vpop.f32.mrb[0].mxu0
        %1510 = vmatprep.mubr.f32.mxu0 0.0
        %1511 = vmatmul.mubr.f32.gmra.mrb[0].mxu0 %v1387
        %v1512 = vpop.f32.mrb[0].mxu0
        %v1513 = vadd.f32 %v1366, %v1512
        %v1514 = vpop.f32.mrb[0].mxu0
        %1515 = vmatprep.mubr.f32.mxu0 0.0
        %1516 = vmatmul.mubr.f32.gmra.mrb[0].mxu0 %v1390
        %v1517 = vpop.f32.mrb[0].mxu0
        %v1518 = vadd.f32 %v1366, %v1517
        %v1519 = vpop.f32.mrb[0].mxu0
        %1520 = vmatprep.mubr.f32.mxu0 0.0
        %1521 = vmatmul.mubr.f32.gmra.mrb[0].mxu0 %v1393
        %v1522 = vpop.f32.mrb[0].mxu0
        %v1523 = vadd.f32 %v1366, %v1522
        %v1524 = vpop.f32.mrb[0].mxu0
        %1525 = vmatprep.mubr.f32.mxu0 0.0
        %1526 = vmatmul.mubr.f32.gmra.mrb[0].mxu0 %v1396
        %v1527 = vpop.f32.mrb[0].mxu0
        %v1528 = vadd.f32 %v1366, %v1527
        %v1529 = vpop.f32.mrb[0].mxu0
        %1530 = vmatprep.mubr.f32.mxu0 0.0
        %1531 = vmatmul.mubr.f32.gmra.mrb[0].mxu0 %v1399
        %v1532 = vpop.f32.mrb[0].mxu0
        %v1533 = vadd.f32 %v1366, %v1532
        %v1534 = vpop.f32.mrb[0].mxu0
        %1535 = vmatprep.mubr.f32.mxu0 0.0
        %1536 = vmatmul.mubr.f32.gmra.mrb[0].mxu0 %v1402
        %v1537 = vpop.f32.mrb[0].mxu0
        %v1538 = vadd.f32 %v1366, %v1537
        %v1539 = vpop.f32.mrb[0].mxu0
        %1540 = vmatprep.mubr.f32.mxu0 0.0
        %1541 = vmatmul.mubr.f32.gmra.mrb[0].mxu0 %v1405
        %v1542 = vpop.f32.mrb[0].mxu0
        %v1543 = vadd.f32 %v1366, %v1542
        %v1544 = vpop.f32.mrb[0].mxu0
        %1545 = vmatprep.mubr.f32.mxu0 0.0
        %1546 = vmatmul.mubr.f32.gmra.mrb[0].mxu0 %v1408
        %v1547 = vpop.f32.mrb[0].mxu0
        %v1548 = vadd.f32 %v1366, %v1547
        %v1549 = vpop.f32.mrb[0].mxu0
        %1550 = vmatprep.mubr.f32.mxu0 0.0
        %1551 = vmatmul.mubr.f32.gmra.mrb[0].mxu0 %v1411
        %v1552 = vpop.f32.mrb[0].mxu0
        %v1553 = vadd.f32 %v1366, %v1552
        %v1554 = vpop.f32.mrb[0].mxu0
        %1555 = vmatprep.mubr.f32.mxu0 0.0
        %1556 = vmatmul.mubr.f32.gmra.mrb[0].mxu0 %v1414
        %v1557 = vpop.f32.mrb[0].mxu0
        %v1558 = vadd.f32 %v1366, %v1557
        %v1559 = vpop.f32.mrb[0].mxu0
        %1560 = vdwg.mxu0
        %v1561 = vsel %vm883, %v1483, -inf
        %1562 = vmax.xlane.f32.xlu0 %v1561
        %v1563 = vpop.xlane.xlu0 %1562
        %v1564 = vsel %vm883, %v1488, -inf
        %1565 = vmax.xlane.f32.xlu0 %v1564
        %v1566 = vpop.xlane.xlu0 %1565
        %v1567 = vsel %vm883, %v1493, -inf
        %1568 = vmax.xlane.f32.xlu0 %v1567
        %v1569 = vpop.xlane.xlu0 %1568
        %v1570 = vsel %vm883, %v1498, -inf
        %1571 = vmax.xlane.f32.xlu0 %v1570
        %v1572 = vpop.xlane.xlu0 %1571
        %v1573 = vsel %vm883, %v1503, -inf
        %1574 = vmax.xlane.f32.xlu0 %v1573
        %v1575 = vpop.xlane.xlu0 %1574
        %v1576 = vsel %vm883, %v1508, -inf
        %1577 = vmax.xlane.f32.xlu0 %v1576
        %v1578 = vpop.xlane.xlu0 %1577
        %v1579 = vsel %vm883, %v1513, -inf
        %1580 = vmax.xlane.f32.xlu0 %v1579
        %v1581 = vpop.xlane.xlu0 %1580
        %v1582 = vsel %vm883, %v1518, -inf
        %1583 = vmax.xlane.f32.xlu0 %v1582
        %v1584 = vpop.xlane.xlu0 %1583
        %v1585 = vsel %vm883, %v1523, -inf
        %1586 = vmax.xlane.f32.xlu0 %v1585
        %v1587 = vpop.xlane.xlu0 %1586
        %v1588 = vsel %vm883, %v1528, -inf
        %1589 = vmax.xlane.f32.xlu0 %v1588
        %v1590 = vpop.xlane.xlu0 %1589
        %v1591 = vsel %vm883, %v1533, -inf
        %1592 = vmax.xlane.f32.xlu0 %v1591
        %v1593 = vpop.xlane.xlu0 %1592
        %v1594 = vsel %vm883, %v1538, -inf
        %1595 = vmax.xlane.f32.xlu0 %v1594
        %v1596 = vpop.xlane.xlu0 %1595
        %v1597 = vsel %vm883, %v1543, -inf
        %1598 = vmax.xlane.f32.xlu0 %v1597
        %v1599 = vpop.xlane.xlu0 %1598
        %v1600 = vsel %vm883, %v1548, -inf
        %1601 = vmax.xlane.f32.xlu0 %v1600
        %v1602 = vpop.xlane.xlu0 %1601
        %v1603 = vsel %vm883, %v1553, -inf
        %1604 = vmax.xlane.f32.xlu0 %v1603
        %v1605 = vpop.xlane.xlu0 %1604
        %v1606 = vsel %vm883, %v1558, -inf
        %1607 = vmax.xlane.f32.xlu0 %v1606
        %v1608 = vpop.xlane.xlu0 %1607
        %v1609 = vsub.f32 %v1483, %v1563
        %v1610 = vsub.f32 %v1488, %v1566
        %v1611 = vsub.f32 %v1493, %v1569
        %v1612 = vsub.f32 %v1498, %v1572
        %v1613 = vsub.f32 %v1503, %v1575
        %v1614 = vsub.f32 %v1508, %v1578
        %v1615 = vsub.f32 %v1513, %v1581
        %v1616 = vsub.f32 %v1518, %v1584
        %v1617 = vsub.f32 %v1523, %v1587
        %v1618 = vsub.f32 %v1528, %v1590
        %v1619 = vsub.f32 %v1533, %v1593
        %v1620 = vsub.f32 %v1538, %v1596
        %v1621 = vsub.f32 %v1543, %v1599
        %v1622 = vsub.f32 %v1548, %v1602
        %v1623 = vsub.f32 %v1553, %v1605
        %v1624 = vsub.f32 %v1558, %v1608
        %v1625 = vmul.f32 %v1609, 1.442695
        %v1626 = vpow.pop %v1625
        %v1627 = vmul.f32 %v1610, 1.442695
        %v1628 = vpow.pop %v1627
        %v1629 = vmul.f32 %v1611, 1.442695
        %v1630 = vpow.pop %v1629
        %v1631 = vmul.f32 %v1612, 1.442695
        %v1632 = vpow.pop %v1631
        %v1633 = vmul.f32 %v1613, 1.442695
        %v1634 = vpow.pop %v1633
        %v1635 = vmul.f32 %v1614, 1.442695
        %v1636 = vpow.pop %v1635
        %v1637 = vmul.f32 %v1615, 1.442695
        %v1638 = vpow.pop %v1637
        %v1639 = vmul.f32 %v1616, 1.442695
        %v1640 = vpow.pop %v1639
        %v1641 = vmul.f32 %v1617, 1.442695
        %v1642 = vpow.pop %v1641
        %v1643 = vmul.f32 %v1618, 1.442695
        %v1644 = vpow.pop %v1643
        %v1645 = vmul.f32 %v1619, 1.442695
        %v1646 = vpow.pop %v1645
        %v1647 = vmul.f32 %v1620, 1.442695
        %v1648 = vpow.pop %v1647
        %v1649 = vmul.f32 %v1621, 1.442695
        %v1650 = vpow.pop %v1649
        %v1651 = vmul.f32 %v1622, 1.442695
        %v1652 = vpow.pop %v1651
        %v1653 = vmul.f32 %v1623, 1.442695
        %v1654 = vpow.pop %v1653
        %v1655 = vmul.f32 %v1624, 1.442695
        %v1656 = vpow.pop %v1655
        %v1657 = vsel %vm883, %v1626, 0.0
        %1658 = vadd.xlane.f32.xlu0 %v1657
        %v1659 = vpop.xlane.xlu0 %1658
        %v1660 = vsel %vm883, %v1628, 0.0
        %1661 = vadd.xlane.f32.xlu0 %v1660
        %v1662 = vpop.xlane.xlu0 %1661
        %v1663 = vsel %vm883, %v1630, 0.0
        %1664 = vadd.xlane.f32.xlu0 %v1663
        %v1665 = vpop.xlane.xlu0 %1664
        %v1666 = vsel %vm883, %v1632, 0.0
        %1667 = vadd.xlane.f32.xlu0 %v1666
        %v1668 = vpop.xlane.xlu0 %1667
        %v1669 = vsel %vm883, %v1634, 0.0
        %1670 = vadd.xlane.f32.xlu0 %v1669
        %v1671 = vpop.xlane.xlu0 %1670
        %v1672 = vsel %vm883, %v1636, 0.0
        %1673 = vadd.xlane.f32.xlu0 %v1672
        %v1674 = vpop.xlane.xlu0 %1673
        %v1675 = vsel %vm883, %v1638, 0.0
        %1676 = vadd.xlane.f32.xlu0 %v1675
        %v1677 = vpop.xlane.xlu0 %1676
        %v1678 = vsel %vm883, %v1640, 0.0
        %1679 = vadd.xlane.f32.xlu0 %v1678
        %v1680 = vpop.xlane.xlu0 %1679
        %v1681 = vsel %vm883, %v1642, 0.0
        %1682 = vadd.xlane.f32.xlu0 %v1681
        %v1683 = vpop.xlane.xlu0 %1682
        %v1684 = vsel %vm883, %v1644, 0.0
        %1685 = vadd.xlane.f32.xlu0 %v1684
        %v1686 = vpop.xlane.xlu0 %1685
        %v1687 = vsel %vm883, %v1646, 0.0
        %1688 = vadd.xlane.f32.xlu0 %v1687
        %v1689 = vpop.xlane.xlu0 %1688
        %v1690 = vsel %vm883, %v1648, 0.0
        %1691 = vadd.xlane.f32.xlu0 %v1690
        %v1692 = vpop.xlane.xlu0 %1691
        %v1693 = vsel %vm883, %v1650, 0.0
        %1694 = vadd.xlane.f32.xlu0 %v1693
        %v1695 = vpop.xlane.xlu0 %1694
        %v1696 = vsel %vm883, %v1652, 0.0
        %1697 = vadd.xlane.f32.xlu0 %v1696
        %v1698 = vpop.xlane.xlu0 %1697
        %v1699 = vsel %vm883, %v1654, 0.0
        %1700 = vadd.xlane.f32.xlu0 %v1699
        %v1701 = vpop.xlane.xlu0 %1700
        %v1702 = vsel %vm883, %v1656, 0.0
        %1703 = vadd.xlane.f32.xlu0 %v1702
        %v1704 = vpop.xlane.xlu0 %1703
        %v1705 = vrcp.pop %v1659
        %v1706 = vrcp.pop %v1662
        %v1707 = vrcp.pop %v1665
        %v1708 = vrcp.pop %v1668
        %v1709 = vrcp.pop %v1671
        %v1710 = vrcp.pop %v1674
        %v1711 = vrcp.pop %v1677
        %v1712 = vrcp.pop %v1680
        %v1713 = vrcp.pop %v1683
        %v1714 = vrcp.pop %v1686
        %v1715 = vrcp.pop %v1689
        %v1716 = vrcp.pop %v1692
        %v1717 = vrcp.pop %v1695
        %v1718 = vrcp.pop %v1698
        %v1719 = vrcp.pop %v1701
        %v1720 = vrcp.pop %v1704
        %v1721 = vmul.f32 %v1626, %v1705
        %v1722 = vmul.f32 %v1628, %v1706
        %v1723 = vmul.f32 %v1630, %v1707
        %v1724 = vmul.f32 %v1632, %v1708
        %v1725 = vmul.f32 %v1634, %v1709
        %v1726 = vmul.f32 %v1636, %v1710
        %v1727 = vmul.f32 %v1638, %v1711
        %v1728 = vmul.f32 %v1640, %v1712
        %v1729 = vmul.f32 %v1642, %v1713
        %v1730 = vmul.f32 %v1644, %v1714
        %v1731 = vmul.f32 %v1646, %v1715
        %v1732 = vmul.f32 %v1648, %v1716
        %v1733 = vmul.f32 %v1650, %v1717
        %v1734 = vmul.f32 %v1652, %v1718
        %v1735 = vmul.f32 %v1654, %v1719
        %v1736 = vmul.f32 %v1656, %v1720
        %v1737 = vmul.f32 %v1282, %v1721
        %v1738 = vmul.f32 %v1287, %v1722
        %v1739 = vmul.f32 %v1292, %v1723
        %v1740 = vmul.f32 %v1297, %v1724
        %v1741 = vmul.f32 %v1302, %v1725
        %v1742 = vmul.f32 %v1307, %v1726
        %v1743 = vmul.f32 %v1312, %v1727
        %v1744 = vmul.f32 %v1317, %v1728
        %v1745 = vmul.f32 %v1322, %v1729
        %v1746 = vmul.f32 %v1327, %v1730
        %v1747 = vmul.f32 %v1332, %v1731
        %v1748 = vmul.f32 %v1337, %v1732
        %v1749 = vmul.f32 %v1342, %v1733
        %v1750 = vmul.f32 %v1347, %v1734
        %v1751 = vmul.f32 %v1352, %v1735
        %v1752 = vmul.f32 %v1357, %v1736
        %1753 = vxpose.xlu0.b32.start [1/16] %v1737, 128
        %1754 = vxpose.xlu0.b32.cont [2/16] %v1738, 128
        %1755 = vxpose.xlu0.b32.cont [3/16] %v1739, 128
        %1756 = vxpose.xlu0.b32.cont [4/16] %v1740, 128
        %1757 = vxpose.xlu0.b32.cont [5/16] 0.0, 128
        %1758 = vxpose.xlu0.b32.cont [6/16] 0.0, 128
        %1759 = vxpose.xlu0.b32.cont [7/16] 0.0, 128
        %1760 = vxpose.xlu0.b32.cont [8/16] 0.0, 128
        %1761 = vxpose.xlu0.b32.cont [9/16] 0.0, 128
        %1762 = vxpose.xlu0.b32.cont [10/16] 0.0, 128
        %1763 = vxpose.xlu0.b32.cont [11/16] 0.0, 128
        %1764 = vxpose.xlu0.b32.cont [12/16] 0.0, 128
        %1765 = vxpose.xlu0.b32.cont [13/16] 0.0, 128
        %1766 = vxpose.xlu0.b32.cont [14/16] 0.0, 128
        %1767 = vxpose.xlu0.b32.cont [15/16] 0.0, 128
        %1768 = vxpose.xlu0.b32.end [16/16] 0.0, 128
        %v1769 = vpop.trf.xlu0
        %v1770 = vpop.trf.xlu0
        %v1771 = vpop.trf.xlu0
        %v1772 = vpop.trf.xlu0
        %v1773 = vpop.trf.xlu0
        %v1774 = vpop.trf.xlu0
        %v1775 = vpop.trf.xlu0
        %v1776 = vpop.trf.xlu0
        %v1777 = vpop.trf.xlu0
        %v1778 = vpop.trf.xlu0
        %v1779 = vpop.trf.xlu0
        %v1780 = vpop.trf.xlu0
        %v1781 = vpop.trf.xlu0
        %v1782 = vpop.trf.xlu0
        %v1783 = vpop.trf.xlu0
        %v1784 = vpop.trf.xlu0
        %1785 = vxpose.xlu0.b32.start [1/16] %v1741, 128
        %1786 = vxpose.xlu0.b32.cont [2/16] %v1742, 128
        %1787 = vxpose.xlu0.b32.cont [3/16] %v1743, 128
        %1788 = vxpose.xlu0.b32.cont [4/16] %v1744, 128
        %1789 = vxpose.xlu0.b32.cont [5/16] 0.0, 128
        %1790 = vxpose.xlu0.b32.cont [6/16] 0.0, 128
        %1791 = vxpose.xlu0.b32.cont [7/16] 0.0, 128
        %1792 = vxpose.xlu0.b32.cont [8/16] 0.0, 128
        %1793 = vxpose.xlu0.b32.cont [9/16] 0.0, 128
        %1794 = vxpose.xlu0.b32.cont [10/16] 0.0, 128
        %1795 = vxpose.xlu0.b32.cont [11/16] 0.0, 128
        %1796 = vxpose.xlu0.b32.cont [12/16] 0.0, 128
        %1797 = vxpose.xlu0.b32.cont [13/16] 0.0, 128
        %1798 = vxpose.xlu0.b32.cont [14/16] 0.0, 128
        %1799 = vxpose.xlu0.b32.cont [15/16] 0.0, 128
        %1800 = vxpose.xlu0.b32.end [16/16] 0.0, 128
        %v1801 = vpop.trf.xlu0
        %v1802 = vpop.trf.xlu0
        %v1803 = vpop.trf.xlu0
        %v1804 = vpop.trf.xlu0
        %v1805 = vpop.trf.xlu0
        %v1806 = vpop.trf.xlu0
        %v1807 = vpop.trf.xlu0
        %v1808 = vpop.trf.xlu0
        %v1809 = vpop.trf.xlu0
        %v1810 = vpop.trf.xlu0
        %v1811 = vpop.trf.xlu0
        %v1812 = vpop.trf.xlu0
        %v1813 = vpop.trf.xlu0
        %v1814 = vpop.trf.xlu0
        %v1815 = vpop.trf.xlu0
        %v1816 = vpop.trf.xlu0
        %1817 = vxpose.xlu0.b32.start [1/16] %v1745, 128
        %1818 = vxpose.xlu0.b32.cont [2/16] %v1746, 128
        %1819 = vxpose.xlu0.b32.cont [3/16] %v1747, 128
        %1820 = vxpose.xlu0.b32.cont [4/16] %v1748, 128
        %1821 = vxpose.xlu0.b32.cont [5/16] 0.0, 128
        %1822 = vxpose.xlu0.b32.cont [6/16] 0.0, 128
        %1823 = vxpose.xlu0.b32.cont [7/16] 0.0, 128
        %1824 = vxpose.xlu0.b32.cont [8/16] 0.0, 128
        %1825 = vxpose.xlu0.b32.cont [9/16] 0.0, 128
        %1826 = vxpose.xlu0.b32.cont [10/16] 0.0, 128
        %1827 = vxpose.xlu0.b32.cont [11/16] 0.0, 128
        %1828 = vxpose.xlu0.b32.cont [12/16] 0.0, 128
        %1829 = vxpose.xlu0.b32.cont [13/16] 0.0, 128
        %1830 = vxpose.xlu0.b32.cont [14/16] 0.0, 128
        %1831 = vxpose.xlu0.b32.cont [15/16] 0.0, 128
        %1832 = vxpose.xlu0.b32.end [16/16] 0.0, 128
        %v1833 = vpop.trf.xlu0
        %v1834 = vpop.trf.xlu0
        %v1835 = vpop.trf.xlu0
        %v1836 = vpop.trf.xlu0
        %v1837 = vpop.trf.xlu0
        %v1838 = vpop.trf.xlu0
        %v1839 = vpop.trf.xlu0
        %v1840 = vpop.trf.xlu0
        %v1841 = vpop.trf.xlu0
        %v1842 = vpop.trf.xlu0
        %v1843 = vpop.trf.xlu0
        %v1844 = vpop.trf.xlu0
        %v1845 = vpop.trf.xlu0
        %v1846 = vpop.trf.xlu0
        %v1847 = vpop.trf.xlu0
        %v1848 = vpop.trf.xlu0
        %1849 = vxpose.xlu0.b32.start [1/16] %v1749, 128
        %1850 = vxpose.xlu0.b32.cont [2/16] %v1750, 128
        %1851 = vxpose.xlu0.b32.cont [3/16] %v1751, 128
        %1852 = vxpose.xlu0.b32.cont [4/16] %v1752, 128
        %1853 = vxpose.xlu0.b32.cont [5/16] 0.0, 128
        %1854 = vxpose.xlu0.b32.cont [6/16] 0.0, 128
        %1855 = vxpose.xlu0.b32.cont [7/16] 0.0, 128
        %1856 = vxpose.xlu0.b32.cont [8/16] 0.0, 128
        %1857 = vxpose.xlu0.b32.cont [9/16] 0.0, 128
        %1858 = vxpose.xlu0.b32.cont [10/16] 0.0, 128
        %1859 = vxpose.xlu0.b32.cont [11/16] 0.0, 128
        %1860 = vxpose.xlu0.b32.cont [12/16] 0.0, 128
        %1861 = vxpose.xlu0.b32.cont [13/16] 0.0, 128
        %1862 = vxpose.xlu0.b32.cont [14/16] 0.0, 128
        %1863 = vxpose.xlu0.b32.cont [15/16] 0.0, 128
        %1864 = vxpose.xlu0.b32.end [16/16] 0.0, 128
        %v1865 = vpop.trf.xlu0
        %v1866 = vpop.trf.xlu0
        %v1867 = vpop.trf.xlu0
        %v1868 = vpop.trf.xlu0
        %v1869 = vpop.trf.xlu0
        %v1870 = vpop.trf.xlu0
        %v1871 = vpop.trf.xlu0
        %v1872 = vpop.trf.xlu0
        %v1873 = vpop.trf.xlu0
        %v1874 = vpop.trf.xlu0
        %v1875 = vpop.trf.xlu0
        %v1876 = vpop.trf.xlu0
        %v1877 = vpop.trf.xlu0
        %v1878 = vpop.trf.xlu0
        %v1879 = vpop.trf.xlu0
        %v1880 = vpop.trf.xlu0
        %v1881 = vadd.f32 %v1769, %v667
        %v1882 = vadd.f32 %v1801, %v668
        %v1883 = vadd.f32 %v1833, %v669
        %v1884 = vadd.f32 %v1865, %v670
        %v1885 = vld [vmem:[#allocation11] sm:$0x1]
        %v1886 = vld [vmem:[#allocation13] sm:$0x1]
        %v1887 = vsel %vm673, %v1881, 0.0
        %1888 = vadd.xlane.f32.xlu0 %v1887
        %v1889 = vpop.xlane.xlu0 %1888
        %v1890 = vsel %vm673, %v1882, 0.0
        %1891 = vadd.xlane.f32.xlu0 %v1890
        %v1892 = vpop.xlane.xlu0 %1891
        %v1893 = vsel %vm673, %v1883, 0.0
        %1894 = vadd.xlane.f32.xlu0 %v1893
        %v1895 = vpop.xlane.xlu0 %1894
        %v1896 = vsel %vm673, %v1884, 0.0
        %1897 = vadd.xlane.f32.xlu0 %v1896
        %v1898 = vpop.xlane.xlu0 %1897
        %v1899 = vmul.f32 %v1889, %v686
        %v1900 = vmul.f32 %v1892, %v686
        %v1901 = vmul.f32 %v1895, %v686
        %v1902 = vmul.f32 %v1898, %v686
        %v1903 = vsub.f32 %v1881, %v1899
        %v1904 = vsub.f32 %v1882, %v1900
        %v1905 = vsub.f32 %v1883, %v1901
        %v1906 = vsub.f32 %v1884, %v1902
        %v1907 = vmul.f32 %v1903, %v1903
        %v1908 = vmul.f32 %v1904, %v1904
        %v1909 = vmul.f32 %v1905, %v1905
        %v1910 = vmul.f32 %v1906, %v1906
        %v1911 = vsel %vm673, %v1907, 0.0
        %1912 = vadd.xlane.f32.xlu0 %v1911
        %v1913 = vpop.xlane.xlu0 %1912
        %v1914 = vsel %vm673, %v1908, 0.0
        %1915 = vadd.xlane.f32.xlu0 %v1914
        %v1916 = vpop.xlane.xlu0 %1915
        %v1917 = vsel %vm673, %v1909, 0.0
        %1918 = vadd.xlane.f32.xlu0 %v1917
        %v1919 = vpop.xlane.xlu0 %1918
        %v1920 = vsel %vm673, %v1910, 0.0
        %1921 = vadd.xlane.f32.xlu0 %v1920
        %v1922 = vpop.xlane.xlu0 %1921
        %v1923 = vmul.f32 %v1913, %v686
        %v1924 = vmul.f32 %v1916, %v686
        %v1925 = vmul.f32 %v1919, %v686
        %v1926 = vmul.f32 %v1922, %v686
        %v1927 = vadd.f32 %v1923, 1e-05
        %v1928 = vadd.f32 %v1924, 1e-05
        %v1929 = vadd.f32 %v1925, 1e-05
        %v1930 = vadd.f32 %v1926, 1e-05
        %v1931 = vrsqrt.pop %v1927
        %v1932 = vrsqrt.pop %v1928
        %v1933 = vrsqrt.pop %v1929
        %v1934 = vrsqrt.pop %v1930
        %v1935 = vmul.f32 %v1903, %v1931
        %v1936 = vmul.f32 %v1904, %v1932
        %v1937 = vmul.f32 %v1905, %v1933
        %v1938 = vmul.f32 %v1906, %v1934
        %v1940 = vlaneseq
        %v1941 = vshrl.u32 %v1940, 7
        %v1942 = vsub.s32 0, %v1941
        %v1943 = vrot.slane %v1885, %v1942
        %v1945 = vmul.f32 %v1935, %v1943
        %v1946 = vmul.f32 %v1936, %v1943
        %v1947 = vmul.f32 %v1937, %v1943
        %v1948 = vmul.f32 %v1938, %v1943
        %v1950 = vlaneseq
        %v1951 = vshrl.u32 %v1950, 7
        %v1952 = vsub.s32 0, %v1951
        %v1953 = vrot.slane %v1886, %v1952
        %v1955 = vadd.f32 %v1945, %v1953
        %v1956 = vadd.f32 %v1946, %v1953
        %v1957 = vadd.f32 %v1947, %v1953
        %v1958 = vadd.f32 %v1948, %v1953
        %v1959 = vld [vmem:[%s11] sm:$0xff]
        %v1960 = vld [vmem:[%s11 + $0x8] sm:$0xff]
        %v1961 = vld [vmem:[%s11 + $0x10] sm:$0xff]
        %v1962 = vld [vmem:[%s11 + $0x18] sm:$0xff]
        %v1963 = vld [vmem:[#allocation14] sm:$0x1]
        %v1965 = vlaneseq
        %v1966 = vshrl.u32 %v1965, 7
        %v1967 = vsub.s32 0, %v1966
        %v1968 = vrot.slane %v1963, %v1967
        %v1971 = vsel %vm673, %v1955, 0
        %v1974 = vsel %vm673, %v1956, 0
        %v1977 = vsel %vm673, %v1957, 0
        %v1980 = vsel %vm673, %v1958, 0
        %1982 = vmatprep.subr.mxu0 0.0
        %1983 = vmatpush1.msra.mxu0 %v1959
        %1984 = vmatprep.subr.mxu0 0.0
        %1985 = vmatpush1.msra.mxu0 %v1960
        %1986 = vmatprep.subr.mxu0 0.0
        %1987 = vmatpush1.msra.mxu0 %v1961
        %1988 = vmatprep.subr.mxu0 0.0
        %1989 = vmatpush1.msra.mxu0 %v1962
        %1990 = vmatprep.subr.mxu0 0.0
        %1991 = vmatpush1.msra.mxu0 0.0
        %1992 = vmatprep.subr.mxu0 0.0
        %1993 = vmatpush1.msra.mxu0 0.0
        %1994 = vmatprep.subr.mxu0 0.0
        %1995 = vmatpush1.msra.mxu0 0.0
        %1996 = vmatprep.subr.mxu0 0.0
        %1997 = vmatpush1.msra.mxu0 0.0
        %1998 = vmatprep.subr.mxu0 0.0
        %1999 = vmatpush1.msra.mxu0 0.0
        %2000 = vmatprep.subr.mxu0 0.0
        %2001 = vmatpush1.msra.mxu0 0.0
        %2002 = vmatprep.subr.mxu0 0.0
        %2003 = vmatpush1.msra.mxu0 0.0
        %2004 = vmatprep.subr.mxu0 0.0
        %2005 = vmatpush1.msra.mxu0 0.0
        %2006 = vmatprep.subr.mxu0 0.0
        %2007 = vmatpush1.msra.mxu0 0.0
        %2008 = vmatprep.subr.mxu0 0.0
        %2009 = vmatpush1.msra.mxu0 0.0
        %2010 = vmatprep.subr.mxu0 0.0
        %2011 = vmatpush1.msra.mxu0 0.0
        %2012 = vmatprep.subr.mxu0 0.0
        %2013 = vmatpush1.msra.mxu0 0.0
        %2014 = vmatprep.subr.mxu0 0.0
        %2015 = vmatpush1.msra.mxu0 0.0
        %2016 = vmatprep.subr.mxu0 0.0
        %2017 = vmatpush1.msra.mxu0 0.0
        %2018 = vmatprep.subr.mxu0 0.0
        %2019 = vmatpush1.msra.mxu0 0.0
        %2020 = vmatprep.subr.mxu0 0.0
        %2021 = vmatpush1.msra.mxu0 0.0
        %2022 = vmatprep.subr.mxu0 0.0
        %2023 = vmatpush1.msra.mxu0 0.0
        %2024 = vmatprep.subr.mxu0 0.0
        %2025 = vmatpush1.msra.mxu0 0.0
        %2026 = vmatprep.subr.mxu0 0.0
        %2027 = vmatpush1.msra.mxu0 0.0
        %2028 = vmatprep.subr.mxu0 0.0
        %2029 = vmatpush1.msra.mxu0 0.0
        %2030 = vmatprep.subr.mxu0 0.0
        %2031 = vmatpush1.msra.mxu0 0.0
        %2032 = vmatprep.subr.mxu0 0.0
        %2033 = vmatpush1.msra.mxu0 0.0
        %2034 = vmatprep.subr.mxu0 0.0
        %2035 = vmatpush1.msra.mxu0 0.0
        %2036 = vmatprep.subr.mxu0 0.0
        %2037 = vmatpush1.msra.mxu0 0.0
        %2038 = vmatprep.subr.mxu0 0.0
        %2039 = vmatpush1.msra.mxu0 0.0
        %2040 = vmatprep.subr.mxu0 0.0
        %2041 = vmatpush1.msra.mxu0 0.0
        %2042 = vmatprep.subr.mxu0 0.0
        %2043 = vmatpush1.msra.mxu0 0.0
        %2044 = vmatprep.subr.mxu0 0.0
        %2045 = vmatpush1.msra.mxu0 0.0
        %2046 = vmatprep.mubr.f32.mxu0 0.0
        %2047 = vmatmul.mubr.f32.gmra.mrb[0].mxu0 %v1971
        %v2048 = vpop.f32.mrb[0].mxu0
        %v2049 = vadd.f32 %v1968, %v2048
        %v2050 = vpop.f32.mrb[0].mxu0
        %2051 = vmatprep.mubr.f32.mxu0 0.0
        %2052 = vmatmul.mubr.f32.gmra.mrb[0].mxu0 %v1974
        %v2053 = vpop.f32.mrb[0].mxu0
        %v2054 = vadd.f32 %v1968, %v2053
        %v2055 = vpop.f32.mrb[0].mxu0
        %2056 = vmatprep.mubr.f32.mxu0 0.0
        %2057 = vmatmul.mubr.f32.gmra.mrb[0].mxu0 %v1977
        %v2058 = vpop.f32.mrb[0].mxu0
        %v2059 = vadd.f32 %v1968, %v2058
        %v2060 = vpop.f32.mrb[0].mxu0
        %2061 = vmatprep.mubr.f32.mxu0 0.0
        %2062 = vmatmul.mubr.f32.gmra.mrb[0].mxu0 %v1980
        %v2063 = vpop.f32.mrb[0].mxu0
        %v2064 = vadd.f32 %v1968, %v2063
        %v2065 = vpop.f32.mrb[0].mxu0
        %2066 = vdwg.mxu0
        %v2067 = vmul.f32 %v2049, 0.5
        %v2068 = vmul.f32 %v2054, 0.5
        %v2069 = vmul.f32 %v2059, 0.5
        %v2070 = vmul.f32 %v2064, 0.5
        %v2071 = vmul.f32 %v2049, 0.70710677
        %v2072 = vmul.f32 %v2054, 0.70710677
        %v2073 = vmul.f32 %v2059, 0.70710677
        %v2074 = vmul.f32 %v2064, 0.70710677
        %v2075 = verf.f32.pop %v2071
        %v2076 = verf.f32.pop %v2072
        %v2077 = verf.f32.pop %v2073
        %v2078 = verf.f32.pop %v2074
        %v2079 = vadd.f32 %v2075, 1.0
        %v2080 = vadd.f32 %v2076, 1.0
        %v2081 = vadd.f32 %v2077, 1.0
        %v2082 = vadd.f32 %v2078, 1.0
        %v2083 = vmul.f32 %v2067, %v2079
        %v2084 = vmul.f32 %v2068, %v2080
        %v2085 = vmul.f32 %v2069, %v2081
        %v2086 = vmul.f32 %v2070, %v2082
        %v2087 = vld [vmem:[%s13] sm:$0xff]
        %v2088 = vld [vmem:[%s13 + $0x8] sm:$0xff]
        %v2089 = vld [vmem:[%s13 + $0x10] sm:$0xff]
        %v2090 = vld [vmem:[%s13 + $0x18] sm:$0xff]
        %v2091 = vld [vmem:[%s13 + $0x20] sm:$0xff]
        %v2092 = vld [vmem:[%s13 + $0x28] sm:$0xff]
        %v2093 = vld [vmem:[%s13 + $0x30] sm:$0xff]
        %v2094 = vld [vmem:[%s13 + $0x38] sm:$0xff]
        %v2095 = vld [vmem:[%s14] sm:$0x1]
        %v2097 = vlaneseq
        %v2098 = vshrl.u32 %v2097, 7
        %v2099 = vsub.s32 0, %v2098
        %v2100 = vrot.slane %v2095, %v2099
        %vm2102 = vcmask 523264
        %v2104 = vsel %vm2102, %v2083, 0
        %v2107 = vsel %vm2102, %v2084, 0
        %v2110 = vsel %vm2102, %v2085, 0
        %v2113 = vsel %vm2102, %v2086, 0
        %2115 = vmatprep.subr.mxu0 0.0
        %2116 = vmatpush1.msra.mxu0 %v2087
        %2117 = vmatprep.subr.mxu0 0.0
        %2118 = vmatpush1.msra.mxu0 %v2088
        %2119 = vmatprep.subr.mxu0 0.0
        %2120 = vmatpush1.msra.mxu0 %v2089
        %2121 = vmatprep.subr.mxu0 0.0
        %2122 = vmatpush1.msra.mxu0 %v2090
        %2123 = vmatprep.subr.mxu0 0.0
        %2124 = vmatpush1.msra.mxu0 %v2091
        %2125 = vmatprep.subr.mxu0 0.0
        %2126 = vmatpush1.msra.mxu0 %v2092
        %2127 = vmatprep.subr.mxu0 0.0
        %2128 = vmatpush1.msra.mxu0 %v2093
        %2129 = vmatprep.subr.mxu0 0.0
        %2130 = vmatpush1.msra.mxu0 %v2094
        %2131 = vmatprep.subr.mxu0 0.0
        %2132 = vmatpush1.msra.mxu0 0.0
        %2133 = vmatprep.subr.mxu0 0.0
        %2134 = vmatpush1.msra.mxu0 0.0
        %2135 = vmatprep.subr.mxu0 0.0
        %2136 = vmatpush1.msra.mxu0 0.0
        %2137 = vmatprep.subr.mxu0 0.0
        %2138 = vmatpush1.msra.mxu0 0.0
        %2139 = vmatprep.subr.mxu0 0.0
        %2140 = vmatpush1.msra.mxu0 0.0
        %2141 = vmatprep.subr.mxu0 0.0
        %2142 = vmatpush1.msra.mxu0 0.0
        %2143 = vmatprep.subr.mxu0 0.0
        %2144 = vmatpush1.msra.mxu0 0.0
        %2145 = vmatprep.subr.mxu0 0.0
        %2146 = vmatpush1.msra.mxu0 0.0
        %2147 = vmatprep.subr.mxu0 0.0
        %2148 = vmatpush1.msra.mxu0 0.0
        %2149 = vmatprep.subr.mxu0 0.0
        %2150 = vmatpush1.msra.mxu0 0.0
        %2151 = vmatprep.subr.mxu0 0.0
        %2152 = vmatpush1.msra.mxu0 0.0
        %2153 = vmatprep.subr.mxu0 0.0
        %2154 = vmatpush1.msra.mxu0 0.0
        %2155 = vmatprep.subr.mxu0 0.0
        %2156 = vmatpush1.msra.mxu0 0.0
        %2157 = vmatprep.subr.mxu0 0.0
        %2158 = vmatpush1.msra.mxu0 0.0
        %2159 = vmatprep.subr.mxu0 0.0
        %2160 = vmatpush1.msra.mxu0 0.0
        %2161 = vmatprep.subr.mxu0 0.0
        %2162 = vmatpush1.msra.mxu0 0.0
        %2163 = vmatprep.subr.mxu0 0.0
        %2164 = vmatpush1.msra.mxu0 0.0
        %2165 = vmatprep.subr.mxu0 0.0
        %2166 = vmatpush1.msra.mxu0 0.0
        %2167 = vmatprep.subr.mxu0 0.0
        %2168 = vmatpush1.msra.mxu0 0.0
        %2169 = vmatprep.subr.mxu0 0.0
        %2170 = vmatpush1.msra.mxu0 0.0
        %2171 = vmatprep.subr.mxu0 0.0
        %2172 = vmatpush1.msra.mxu0 0.0
        %2173 = vmatprep.subr.mxu0 0.0
        %2174 = vmatpush1.msra.mxu0 0.0
        %2175 = vmatprep.subr.mxu0 0.0
        %2176 = vmatpush1.msra.mxu0 0.0
        %2177 = vmatprep.subr.mxu0 0.0
        %2178 = vmatpush1.msra.mxu0 0.0
        %2179 = vmatprep.mubr.f32.mxu0 0.0
        %2180 = vmatmul.mubr.f32.gmra.mrb[0].mxu0 %v2104
        %v2181 = vpop.f32.mrb[0].mxu0
        %v2182 = vadd.f32 %v2100, %v2181
        %v2183 = vpop.f32.mrb[0].mxu0
        %2184 = vmatprep.mubr.f32.mxu0 0.0
        %2185 = vmatmul.mubr.f32.gmra.mrb[0].mxu0 %v2107
        %v2186 = vpop.f32.mrb[0].mxu0
        %v2187 = vadd.f32 %v2100, %v2186
        %v2188 = vpop.f32.mrb[0].mxu0
        %2189 = vmatprep.mubr.f32.mxu0 0.0
        %2190 = vmatmul.mubr.f32.gmra.mrb[0].mxu0 %v2110
        %v2191 = vpop.f32.mrb[0].mxu0
        %v2192 = vadd.f32 %v2100, %v2191
        %v2193 = vpop.f32.mrb[0].mxu0
        %2194 = vmatprep.mubr.f32.mxu0 0.0
        %2195 = vmatmul.mubr.f32.gmra.mrb[0].mxu0 %v2113
        %v2196 = vpop.f32.mrb[0].mxu0
        %v2197 = vadd.f32 %v2100, %v2196
        %v2198 = vpop.f32.mrb[0].mxu0
        %2199 = vdwg.mxu0
        %v2200 = vld [vmem:[%s15] sm:$0xff]
        %v2201 = vld [vmem:[%s15 + $0x8] sm:$0xff]
        %v2202 = vld [vmem:[%s15 + $0x10] sm:$0xff]
        %v2203 = vld [vmem:[%s15 + $0x18] sm:$0xff]
        %v2204 = vld [vmem:[%s16] sm:$0x1]
        %v2206 = vlaneseq
        %v2207 = vshrl.u32 %v2206, 7
        %v2208 = vsub.s32 0, %v2207
        %v2209 = vrot.slane %v2204, %v2208
        %v2212 = vsel %vm673, %v2182, 0
        %v2215 = vsel %vm673, %v2187, 0
        %v2218 = vsel %vm673, %v2192, 0
        %v2221 = vsel %vm673, %v2197, 0
        %2223 = vmatprep.subr.mxu0 0.0
        %2224 = vmatpush1.msra.mxu0 %v2200
        %2225 = vmatprep.subr.mxu0 0.0
        %2226 = vmatpush1.msra.mxu0 %v2201
        %2227 = vmatprep.subr.mxu0 0.0
        %2228 = vmatpush1.msra.mxu0 %v2202
        %2229 = vmatprep.subr.mxu0 0.0
        %2230 = vmatpush1.msra.mxu0 %v2203
        %2231 = vmatprep.subr.mxu0 0.0
        %2232 = vmatpush1.msra.mxu0 0.0
        %2233 = vmatprep.subr.mxu0 0.0
        %2234 = vmatpush1.msra.mxu0 0.0
        %2235 = vmatprep.subr.mxu0 0.0
        %2236 = vmatpush1.msra.mxu0 0.0
        %2237 = vmatprep.subr.mxu0 0.0
        %2238 = vmatpush1.msra.mxu0 0.0
        %2239 = vmatprep.subr.mxu0 0.0
        %2240 = vmatpush1.msra.mxu0 0.0
        %2241 = vmatprep.subr.mxu0 0.0
        %2242 = vmatpush1.msra.mxu0 0.0
        %2243 = vmatprep.subr.mxu0 0.0
        %2244 = vmatpush1.msra.mxu0 0.0
        %2245 = vmatprep.subr.mxu0 0.0
        %2246 = vmatpush1.msra.mxu0 0.0
        %2247 = vmatprep.subr.mxu0 0.0
        %2248 = vmatpush1.msra.mxu0 0.0
        %2249 = vmatprep.subr.mxu0 0.0
        %2250 = vmatpush1.msra.mxu0 0.0
        %2251 = vmatprep.subr.mxu0 0.0
        %2252 = vmatpush1.msra.mxu0 0.0
        %2253 = vmatprep.subr.mxu0 0.0
        %2254 = vmatpush1.msra.mxu0 0.0
        %2255 = vmatprep.subr.mxu0 0.0
        %2256 = vmatpush1.msra.mxu0 0.0
        %2257 = vmatprep.subr.mxu0 0.0
        %2258 = vmatpush1.msra.mxu0 0.0
        %2259 = vmatprep.subr.mxu0 0.0
        %2260 = vmatpush1.msra.mxu0 0.0
        %2261 = vmatprep.subr.mxu0 0.0
        %2262 = vmatpush1.msra.mxu0 0.0
        %2263 = vmatprep.subr.mxu0 0.0
        %2264 = vmatpush1.msra.mxu0 0.0
        %2265 = vmatprep.subr.mxu0 0.0
        %2266 = vmatpush1.msra.mxu0 0.0
        %2267 = vmatprep.subr.mxu0 0.0
        %2268 = vmatpush1.msra.mxu0 0.0
        %2269 = vmatprep.subr.mxu0 0.0
        %2270 = vmatpush1.msra.mxu0 0.0
        %2271 = vmatprep.subr.mxu0 0.0
        %2272 = vmatpush1.msra.mxu0 0.0
        %2273 = vmatprep.subr.mxu0 0.0
        %2274 = vmatpush1.msra.mxu0 0.0
        %2275 = vmatprep.subr.mxu0 0.0
        %2276 = vmatpush1.msra.mxu0 0.0
        %2277 = vmatprep.subr.mxu0 0.0
        %2278 = vmatpush1.msra.mxu0 0.0
        %2279 = vmatprep.subr.mxu0 0.0
        %2280 = vmatpush1.msra.mxu0 0.0
        %2281 = vmatprep.subr.mxu0 0.0
        %2282 = vmatpush1.msra.mxu0 0.0
        %2283 = vmatprep.subr.mxu0 0.0
        %2284 = vmatpush1.msra.mxu0 0.0
        %2285 = vmatprep.subr.mxu0 0.0
        %2286 = vmatpush1.msra.mxu0 0.0
        %2287 = vmatprep.mubr.f32.mxu0 0.0
        %2288 = vmatmul.mubr.f32.gmra.mrb[0].mxu0 %v2212
        %v2289 = vpop.f32.mrb[0].mxu0
        %v2290 = vadd.f32 %v2209, %v2289
        %v2291 = vpop.f32.mrb[0].mxu0
        %2292 = vmatprep.mubr.f32.mxu0 0.0
        %2293 = vmatmul.mubr.f32.gmra.mrb[0].mxu0 %v2215
        %v2294 = vpop.f32.mrb[0].mxu0
        %v2295 = vadd.f32 %v2209, %v2294
        %v2296 = vpop.f32.mrb[0].mxu0
        %2297 = vmatprep.mubr.f32.mxu0 0.0
        %2298 = vmatmul.mubr.f32.gmra.mrb[0].mxu0 %v2218
        %v2299 = vpop.f32.mrb[0].mxu0
        %v2300 = vadd.f32 %v2209, %v2299
        %v2301 = vpop.f32.mrb[0].mxu0
        %2302 = vmatprep.mubr.f32.mxu0 0.0
        %2303 = vmatmul.mubr.f32.gmra.mrb[0].mxu0 %v2221
        %v2304 = vpop.f32.mrb[0].mxu0
        %v2305 = vadd.f32 %v2209, %v2304
        %v2306 = vpop.f32.mrb[0].mxu0
        %2307 = vdwg.mxu0
        %v2308 = vsel %vm673, %v2290, -inf
        %2309 = vmax.xlane.f32.xlu0 %v2308
        %v2310 = vpop.xlane.xlu0 %2309
        %v2311 = vsel %vm673, %v2295, -inf
        %2312 = vmax.xlane.f32.xlu0 %v2311
        %v2313 = vpop.xlane.xlu0 %2312
        %v2314 = vsel %vm673, %v2300, -inf
        %2315 = vmax.xlane.f32.xlu0 %v2314
        %v2316 = vpop.xlane.xlu0 %2315
        %v2317 = vsel %vm673, %v2305, -inf
        %2318 = vmax.xlane.f32.xlu0 %v2317
        %v2319 = vpop.xlane.xlu0 %2318
        %v2320 = vsub.f32 %v2290, %v2310
        %v2321 = vsub.f32 %v2295, %v2313
        %v2322 = vsub.f32 %v2300, %v2316
        %v2323 = vsub.f32 %v2305, %v2319
        %v2324 = vmul.f32 %v2320, 1.442695
        %v2325 = vpow.pop %v2324
        %v2326 = vmul.f32 %v2321, 1.442695
        %v2327 = vpow.pop %v2326
        %v2328 = vmul.f32 %v2322, 1.442695
        %v2329 = vpow.pop %v2328
        %v2330 = vmul.f32 %v2323, 1.442695
        %v2331 = vpow.pop %v2330
        %v2332 = vsel %vm673, %v2325, 0.0
        %2333 = vadd.xlane.f32.xlu0 %v2332
        %v2334 = vpop.xlane.xlu0 %2333
        %v2335 = vsel %vm673, %v2327, 0.0
        %2336 = vadd.xlane.f32.xlu0 %v2335
        %v2337 = vpop.xlane.xlu0 %2336
        %v2338 = vsel %vm673, %v2329, 0.0
        %2339 = vadd.xlane.f32.xlu0 %v2338
        %v2340 = vpop.xlane.xlu0 %2339
        %v2341 = vsel %vm673, %v2331, 0.0
        %2342 = vadd.xlane.f32.xlu0 %v2341
        %v2343 = vpop.xlane.xlu0 %2342
        %v2344 = vrcp.pop %v2334
        %v2345 = vrcp.pop %v2337
        %v2346 = vrcp.pop %v2340
        %v2347 = vrcp.pop %v2343
        %v2348 = vmul.f32 %v2325, %v2344
        %v2349 = vmul.f32 %v2327, %v2345
        %v2350 = vmul.f32 %v2329, %v2346
        %v2351 = vmul.f32 %v2331, %v2347
        %v2352 = vmul.f32 %v2182, %v2348
        %v2353 = vmul.f32 %v2187, %v2349
        %v2354 = vmul.f32 %v2192, %v2350
        %v2355 = vmul.f32 %v2197, %v2351
        %v2356 = vadd.f32 %v2352, %v1881
        %v2357 = vadd.f32 %v2353, %v1882
        %v2358 = vadd.f32 %v2354, %v1883
        %v2359 = vadd.f32 %v2355, %v1884
        %v2360 = vmul.f32 %v2356, %v2356
        %v2361 = vmul.f32 %v2357, %v2357
        %v2362 = vmul.f32 %v2358, %v2358
        %v2363 = vmul.f32 %v2359, %v2359
        %v2364 = vsel %vm673, %v2360, 0.0
        %2365 = vadd.xlane.f32.xlu0 %v2364
        %v2366 = vpop.xlane.xlu0 %2365
        %v2367 = vsel %vm673, %v2361, 0.0
        %2368 = vadd.xlane.f32.xlu0 %v2367
        %v2369 = vpop.xlane.xlu0 %2368
        %v2370 = vsel %vm673, %v2362, 0.0
        %2371 = vadd.xlane.f32.xlu0 %v2370
        %v2372 = vpop.xlane.xlu0 %2371
        %v2373 = vsel %vm673, %v2363, 0.0
        %2374 = vadd.xlane.f32.xlu0 %v2373
        %v2375 = vpop.xlane.xlu0 %2374
        %v2376 = vadd.f32 %v2366, 0.0001
        %v2377 = vadd.f32 %v2369, 0.0001
        %v2378 = vadd.f32 %v2372, 0.0001
        %v2379 = vadd.f32 %v2375, 0.0001
        %v2380 = vrsqrt.pop %v2376
        %v2381 = vrsqrt.pop %v2377
        %v2382 = vrsqrt.pop %v2378
        %v2383 = vrsqrt.pop %v2379
        %v2384 = vmul.f32 %v2356, %v2380
        %v2385 = vmul.f32 %v2357, %v2381
        %v2386 = vmul.f32 %v2358, %v2382
        %v2387 = vmul.f32 %v2359, %v2383
        %2388 = vst.msk [vmem:[%s659] sm:$0xff] %vm673, %v2384
        %2389 = vst.msk [vmem:[%s659 + $0x8] sm:$0xff] %vm673, %v2385
        %2390 = vst.msk [vmem:[%s659 + $0x10] sm:$0xff] %vm673, %v2386
        %2391 = vst.msk [vmem:[%s659 + $0x18] sm:$0xff] %vm673, %v2387
        %s2392 = scalar_lea.vmem [#allocation2], 1
        %v2393 = vld [vmem:[%s2392] sm:$0x1]
        %s2394 = scalar_lea.vmem [#allocation5], 1
        %v2395 = vld [vmem:[%s2394] sm:$0x1]
        %v2396 = vsel %vm673, %v2384, 0.0
        %2397 = vadd.xlane.f32.xlu0 %v2396
        %v2398 = vpop.xlane.xlu0 %2397
        %v2399 = vsel %vm673, %v2385, 0.0
        %2400 = vadd.xlane.f32.xlu0 %v2399
        %v2401 = vpop.xlane.xlu0 %2400
        %v2402 = vsel %vm673, %v2386, 0.0
        %2403 = vadd.xlane.f32.xlu0 %v2402
        %v2404 = vpop.xlane.xlu0 %2403
        %v2405 = vsel %vm673, %v2387, 0.0
        %2406 = vadd.xlane.f32.xlu0 %v2405
        %v2407 = vpop.xlane.xlu0 %2406
        %v2408 = vmul.f32 %v2398, %v686
        %v2409 = vmul.f32 %v2401, %v686
        %v2410 = vmul.f32 %v2404, %v686
        %v2411 = vmul.f32 %v2407, %v686
        %v2412 = vsub.f32 %v2384, %v2408
        %v2413 = vsub.f32 %v2385, %v2409
        %v2414 = vsub.f32 %v2386, %v2410
        %v2415 = vsub.f32 %v2387, %v2411
        %v2416 = vmul.f32 %v2412, %v2412
        %v2417 = vmul.f32 %v2413, %v2413
        %v2418 = vmul.f32 %v2414, %v2414
        %v2419 = vmul.f32 %v2415, %v2415
        %v2420 = vsel %vm673, %v2416, 0.0
        %2421 = vadd.xlane.f32.xlu0 %v2420
        %v2422 = vpop.xlane.xlu0 %2421
        %v2423 = vsel %vm673, %v2417, 0.0
        %2424 = vadd.xlane.f32.xlu0 %v2423
        %v2425 = vpop.xlane.xlu0 %2424
        %v2426 = vsel %vm673, %v2418, 0.0
        %2427 = vadd.xlane.f32.xlu0 %v2426
        %v2428 = vpop.xlane.xlu0 %2427
        %v2429 = vsel %vm673, %v2419, 0.0
        %2430 = vadd.xlane.f32.xlu0 %v2429
        %v2431 = vpop.xlane.xlu0 %2430
        %v2432 = vmul.f32 %v2422, %v686
        %v2433 = vmul.f32 %v2425, %v686
        %v2434 = vmul.f32 %v2428, %v686
        %v2435 = vmul.f32 %v2431, %v686
        %v2436 = vadd.f32 %v2432, 1e-05
        %v2437 = vadd.f32 %v2433, 1e-05
        %v2438 = vadd.f32 %v2434, 1e-05
        %v2439 = vadd.f32 %v2435, 1e-05
        %v2440 = vrsqrt.pop %v2436
        %v2441 = vrsqrt.pop %v2437
        %v2442 = vrsqrt.pop %v2438
        %v2443 = vrsqrt.pop %v2439
        %v2444 = vmul.f32 %v2412, %v2440
        %v2445 = vmul.f32 %v2413, %v2441
        %v2446 = vmul.f32 %v2414, %v2442
        %v2447 = vmul.f32 %v2415, %v2443
        %v2449 = vlaneseq
        %v2450 = vshrl.u32 %v2449, 7
        %v2451 = vsub.s32 0, %v2450
        %v2452 = vrot.slane %v2393, %v2451
        %v2454 = vmul.f32 %v2444, %v2452
        %v2455 = vmul.f32 %v2445, %v2452
        %v2456 = vmul.f32 %v2446, %v2452
        %v2457 = vmul.f32 %v2447, %v2452
        %v2459 = vlaneseq
        %v2460 = vshrl.u32 %v2459, 7
        %v2461 = vsub.s32 0, %v2460
        %v2462 = vrot.slane %v2395, %v2461
        %v2464 = vadd.f32 %v2454, %v2462
        %v2465 = vadd.f32 %v2455, %v2462
        %v2466 = vadd.f32 %v2456, %v2462
        %v2467 = vadd.f32 %v2457, %v2462
        %2468 = vxpose.xlu0.b32.start [1/16] %v2464, 128
        %2469 = vxpose.xlu0.b32.cont [2/16] 0.0, 128
        %2470 = vxpose.xlu0.b32.cont [3/16] 0.0, 128
        %2471 = vxpose.xlu0.b32.cont [4/16] 0.0, 128
        %2472 = vxpose.xlu0.b32.cont [5/16] 0.0, 128
        %2473 = vxpose.xlu0.b32.cont [6/16] 0.0, 128
        %2474 = vxpose.xlu0.b32.cont [7/16] 0.0, 128
        %2475 = vxpose.xlu0.b32.cont [8/16] 0.0, 128
        %2476 = vxpose.xlu0.b32.cont [9/16] 0.0, 128
        %2477 = vxpose.xlu0.b32.cont [10/16] 0.0, 128
        %2478 = vxpose.xlu0.b32.cont [11/16] 0.0, 128
        %2479 = vxpose.xlu0.b32.cont [12/16] 0.0, 128
        %2480 = vxpose.xlu0.b32.cont [13/16] 0.0, 128
        %2481 = vxpose.xlu0.b32.cont [14/16] 0.0, 128
        %2482 = vxpose.xlu0.b32.cont [15/16] 0.0, 128
        %2483 = vxpose.xlu0.b32.end [16/16] 0.0, 128
        %v2484 = vpop.trf.xlu0
        %v2485 = vpop.trf.xlu0
        %v2486 = vpop.trf.xlu0
        %v2487 = vpop.trf.xlu0
        %v2488 = vpop.trf.xlu0
        %v2489 = vpop.trf.xlu0
        %v2490 = vpop.trf.xlu0
        %v2491 = vpop.trf.xlu0
        %v2492 = vpop.trf.xlu0
        %v2493 = vpop.trf.xlu0
        %v2494 = vpop.trf.xlu0
        %v2495 = vpop.trf.xlu0
        %v2496 = vpop.trf.xlu0
        %v2497 = vpop.trf.xlu0
        %v2498 = vpop.trf.xlu0
        %v2499 = vpop.trf.xlu0
        %2500 = vxpose.xlu0.b32.start [1/16] %v2465, 128
        %2501 = vxpose.xlu0.b32.cont [2/16] 0.0, 128
        %2502 = vxpose.xlu0.b32.cont [3/16] 0.0, 128
        %2503 = vxpose.xlu0.b32.cont [4/16] 0.0, 128
        %2504 = vxpose.xlu0.b32.cont [5/16] 0.0, 128
        %2505 = vxpose.xlu0.b32.cont [6/16] 0.0, 128
        %2506 = vxpose.xlu0.b32.cont [7/16] 0.0, 128
        %2507 = vxpose.xlu0.b32.cont [8/16] 0.0, 128
        %2508 = vxpose.xlu0.b32.cont [9/16] 0.0, 128
        %2509 = vxpose.xlu0.b32.cont [10/16] 0.0, 128
        %2510 = vxpose.xlu0.b32.cont [11/16] 0.0, 128
        %2511 = vxpose.xlu0.b32.cont [12/16] 0.0, 128
        %2512 = vxpose.xlu0.b32.cont [13/16] 0.0, 128
        %2513 = vxpose.xlu0.b32.cont [14/16] 0.0, 128
        %2514 = vxpose.xlu0.b32.cont [15/16] 0.0, 128
        %2515 = vxpose.xlu0.b32.end [16/16] 0.0, 128
        %v2516 = vpop.trf.xlu0
        %v2517 = vpop.trf.xlu0
        %v2518 = vpop.trf.xlu0
        %v2519 = vpop.trf.xlu0
        %v2520 = vpop.trf.xlu0
        %v2521 = vpop.trf.xlu0
        %v2522 = vpop.trf.xlu0
        %v2523 = vpop.trf.xlu0
        %v2524 = vpop.trf.xlu0
        %v2525 = vpop.trf.xlu0
        %v2526 = vpop.trf.xlu0
        %v2527 = vpop.trf.xlu0
        %v2528 = vpop.trf.xlu0
        %v2529 = vpop.trf.xlu0
        %v2530 = vpop.trf.xlu0
        %v2531 = vpop.trf.xlu0
        %2532 = vxpose.xlu0.b32.start [1/16] %v2466, 128
        %2533 = vxpose.xlu0.b32.cont [2/16] 0.0, 128
        %2534 = vxpose.xlu0.b32.cont [3/16] 0.0, 128
        %2535 = vxpose.xlu0.b32.cont [4/16] 0.0, 128
        %2536 = vxpose.xlu0.b32.cont [5/16] 0.0, 128
        %2537 = vxpose.xlu0.b32.cont [6/16] 0.0, 128
        %2538 = vxpose.xlu0.b32.cont [7/16] 0.0, 128
        %2539 = vxpose.xlu0.b32.cont [8/16] 0.0, 128
        %2540 = vxpose.xlu0.b32.cont [9/16] 0.0, 128
        %2541 = vxpose.xlu0.b32.cont [10/16] 0.0, 128
        %2542 = vxpose.xlu0.b32.cont [11/16] 0.0, 128
        %2543 = vxpose.xlu0.b32.cont [12/16] 0.0, 128
        %2544 = vxpose.xlu0.b32.cont [13/16] 0.0, 128
        %2545 = vxpose.xlu0.b32.cont [14/16] 0.0, 128
        %2546 = vxpose.xlu0.b32.cont [15/16] 0.0, 128
        %2547 = vxpose.xlu0.b32.end [16/16] 0.0, 128
        %v2548 = vpop.trf.xlu0
        %v2549 = vpop.trf.xlu0
        %v2550 = vpop.trf.xlu0
        %v2551 = vpop.trf.xlu0
        %v2552 = vpop.trf.xlu0
        %v2553 = vpop.trf.xlu0
        %v2554 = vpop.trf.xlu0
        %v2555 = vpop.trf.xlu0
        %v2556 = vpop.trf.xlu0
        %v2557 = vpop.trf.xlu0
        %v2558 = vpop.trf.xlu0
        %v2559 = vpop.trf.xlu0
        %v2560 = vpop.trf.xlu0
        %v2561 = vpop.trf.xlu0
        %v2562 = vpop.trf.xlu0
        %v2563 = vpop.trf.xlu0
        %2564 = vxpose.xlu0.b32.start [1/16] %v2467, 128
        %2565 = vxpose.xlu0.b32.cont [2/16] 0.0, 128
        %2566 = vxpose.xlu0.b32.cont [3/16] 0.0, 128
        %2567 = vxpose.xlu0.b32.cont [4/16] 0.0, 128
        %2568 = vxpose.xlu0.b32.cont [5/16] 0.0, 128
        %2569 = vxpose.xlu0.b32.cont [6/16] 0.0, 128
        %2570 = vxpose.xlu0.b32.cont [7/16] 0.0, 128
        %2571 = vxpose.xlu0.b32.cont [8/16] 0.0, 128
        %2572 = vxpose.xlu0.b32.cont [9/16] 0.0, 128
        %2573 = vxpose.xlu0.b32.cont [10/16] 0.0, 128
        %2574 = vxpose.xlu0.b32.cont [11/16] 0.0, 128
        %2575 = vxpose.xlu0.b32.cont [12/16] 0.0, 128
        %2576 = vxpose.xlu0.b32.cont [13/16] 0.0, 128
        %2577 = vxpose.xlu0.b32.cont [14/16] 0.0, 128
        %2578 = vxpose.xlu0.b32.cont [15/16] 0.0, 128
        %2579 = vxpose.xlu0.b32.end [16/16] 0.0, 128
        %v2580 = vpop.trf.xlu0
        %v2581 = vpop.trf.xlu0
        %v2582 = vpop.trf.xlu0
        %v2583 = vpop.trf.xlu0
        %v2584 = vpop.trf.xlu0
        %v2585 = vpop.trf.xlu0
        %v2586 = vpop.trf.xlu0
        %v2587 = vpop.trf.xlu0
        %v2588 = vpop.trf.xlu0
        %v2589 = vpop.trf.xlu0
        %v2590 = vpop.trf.xlu0
        %v2591 = vpop.trf.xlu0
        %v2592 = vpop.trf.xlu0
        %v2593 = vpop.trf.xlu0
        %v2594 = vpop.trf.xlu0
        %v2595 = vpop.trf.xlu0
        %s2596 = scalar_lea.vmem %s3, 8
        %v2597 = vld [vmem:[%s2596] sm:$0xff]
        %s2598 = scalar_lea.vmem [#allocation7], 1
        %v2599 = vld [vmem:[%s2598] sm:$0x1]
        %v2601 = vlaneseq
        %v2602 = vshrl.u32 %v2601, 7
        %v2603 = vsub.s32 0, %v2602
        %v2604 = vrot.slane %v2599, %v2603
        %v2607 = vsel %vm883, %v2484, 0
        %v2610 = vsel %vm883, %v2485, 0
        %v2613 = vsel %vm883, %v2486, 0
        %v2616 = vsel %vm883, %v2487, 0
        %v2619 = vsel %vm883, %v2516, 0
        %v2622 = vsel %vm883, %v2517, 0
        %v2625 = vsel %vm883, %v2518, 0
        %v2628 = vsel %vm883, %v2519, 0
        %v2631 = vsel %vm883, %v2548, 0
        %v2634 = vsel %vm883, %v2549, 0
        %v2637 = vsel %vm883, %v2550, 0
        %v2640 = vsel %vm883, %v2551, 0
        %v2643 = vsel %vm883, %v2580, 0
        %v2646 = vsel %vm883, %v2581, 0
        %v2649 = vsel %vm883, %v2582, 0
        %v2652 = vsel %vm883, %v2583, 0
        %2654 = vmatprep.subr.mxu0 0.0
        %2655 = vmatpush1.msra.mxu0 %v2597
        %2656 = vmatprep.subr.mxu0 0.0
        %2657 = vmatpush1.msra.mxu0 0.0
        %2658 = vmatprep.subr.mxu0 0.0
        %2659 = vmatpush1.msra.mxu0 0.0
        %2660 = vmatprep.subr.mxu0 0.0
        %2661 = vmatpush1.msra.mxu0 0.0
        %2662 = vmatprep.subr.mxu0 0.0
        %2663 = vmatpush1.msra.mxu0 0.0
        %2664 = vmatprep.subr.mxu0 0.0
        %2665 = vmatpush1.msra.mxu0 0.0
        %2666 = vmatprep.subr.mxu0 0.0
        %2667 = vmatpush1.msra.mxu0 0.0
        %2668 = vmatprep.subr.mxu0 0.0
        %2669 = vmatpush1.msra.mxu0 0.0
        %2670 = vmatprep.subr.mxu0 0.0
        %2671 = vmatpush1.msra.mxu0 0.0
        %2672 = vmatprep.subr.mxu0 0.0
        %2673 = vmatpush1.msra.mxu0 0.0
        %2674 = vmatprep.subr.mxu0 0.0
        %2675 = vmatpush1.msra.mxu0 0.0
        %2676 = vmatprep.subr.mxu0 0.0
        %2677 = vmatpush1.msra.mxu0 0.0
        %2678 = vmatprep.subr.mxu0 0.0
        %2679 = vmatpush1.msra.mxu0 0.0
        %2680 = vmatprep.subr.mxu0 0.0
        %2681 = vmatpush1.msra.mxu0 0.0
        %2682 = vmatprep.subr.mxu0 0.0
        %2683 = vmatpush1.msra.mxu0 0.0
        %2684 = vmatprep.subr.mxu0 0.0
        %2685 = vmatpush1.msra.mxu0 0.0
        %2686 = vmatprep.subr.mxu0 0.0
        %2687 = vmatpush1.msra.mxu0 0.0
        %2688 = vmatprep.subr.mxu0 0.0
        %2689 = vmatpush1.msra.mxu0 0.0
        %2690 = vmatprep.subr.mxu0 0.0
        %2691 = vmatpush1.msra.mxu0 0.0
        %2692 = vmatprep.subr.mxu0 0.0
        %2693 = vmatpush1.msra.mxu0 0.0
        %2694 = vmatprep.subr.mxu0 0.0
        %2695 = vmatpush1.msra.mxu0 0.0
        %2696 = vmatprep.subr.mxu0 0.0
        %2697 = vmatpush1.msra.mxu0 0.0
        %2698 = vmatprep.subr.mxu0 0.0
        %2699 = vmatpush1.msra.mxu0 0.0
        %2700 = vmatprep.subr.mxu0 0.0
        %2701 = vmatpush1.msra.mxu0 0.0
        %2702 = vmatprep.subr.mxu0 0.0
        %2703 = vmatpush1.msra.mxu0 0.0
        %2704 = vmatprep.subr.mxu0 0.0
        %2705 = vmatpush1.msra.mxu0 0.0
        %2706 = vmatprep.subr.mxu0 0.0
        %2707 = vmatpush1.msra.mxu0 0.0
        %2708 = vmatprep.subr.mxu0 0.0
        %2709 = vmatpush1.msra.mxu0 0.0
        %2710 = vmatprep.subr.mxu0 0.0
        %2711 = vmatpush1.msra.mxu0 0.0
        %2712 = vmatprep.subr.mxu0 0.0
        %2713 = vmatpush1.msra.mxu0 0.0
        %2714 = vmatprep.subr.mxu0 0.0
        %2715 = vmatpush1.msra.mxu0 0.0
        %2716 = vmatprep.subr.mxu0 0.0
        %2717 = vmatpush1.msra.mxu0 0.0
        %2718 = vmatprep.mubr.f32.mxu0 0.0
        %2719 = vmatmul.mubr.f32.gmra.mrb[0].mxu0 %v2607
        %v2720 = vpop.f32.mrb[0].mxu0
        %v2721 = vadd.f32 %v2604, %v2720
        %v2722 = vpop.f32.mrb[0].mxu0
        %2723 = vmatprep.mubr.f32.mxu0 0.0
        %2724 = vmatmul.mubr.f32.gmra.mrb[0].mxu0 %v2610
        %v2725 = vpop.f32.mrb[0].mxu0
        %v2726 = vadd.f32 %v2604, %v2725
        %v2727 = vpop.f32.mrb[0].mxu0
        %2728 = vmatprep.mubr.f32.mxu0 0.0
        %2729 = vmatmul.mubr.f32.gmra.mrb[0].mxu0 %v2613
        %v2730 = vpop.f32.mrb[0].mxu0
        %v2731 = vadd.f32 %v2604, %v2730
        %v2732 = vpop.f32.mrb[0].mxu0
        %2733 = vmatprep.mubr.f32.mxu0 0.0
        %2734 = vmatmul.mubr.f32.gmra.mrb[0].mxu0 %v2616
        %v2735 = vpop.f32.mrb[0].mxu0
        %v2736 = vadd.f32 %v2604, %v2735
        %v2737 = vpop.f32.mrb[0].mxu0
        %2738 = vmatprep.mubr.f32.mxu0 0.0
        %2739 = vmatmul.mubr.f32.gmra.mrb[0].mxu0 %v2619
        %v2740 = vpop.f32.mrb[0].mxu0
        %v2741 = vadd.f32 %v2604, %v2740
        %v2742 = vpop.f32.mrb[0].mxu0
        %2743 = vmatprep.mubr.f32.mxu0 0.0
        %2744 = vmatmul.mubr.f32.gmra.mrb[0].mxu0 %v2622
        %v2745 = vpop.f32.mrb[0].mxu0
        %v2746 = vadd.f32 %v2604, %v2745
        %v2747 = vpop.f32.mrb[0].mxu0
        %2748 = vmatprep.mubr.f32.mxu0 0.0
        %2749 = vmatmul.mubr.f32.gmra.mrb[0].mxu0 %v2625
        %v2750 = vpop.f32.mrb[0].mxu0
        %v2751 = vadd.f32 %v2604, %v2750
        %v2752 = vpop.f32.mrb[0].mxu0
        %2753 = vmatprep.mubr.f32.mxu0 0.0
        %2754 = vmatmul.mubr.f32.gmra.mrb[0].mxu0 %v2628
        %v2755 = vpop.f32.mrb[0].mxu0
        %v2756 = vadd.f32 %v2604, %v2755
        %v2757 = vpop.f32.mrb[0].mxu0
        %2758 = vmatprep.mubr.f32.mxu0 0.0
        %2759 = vmatmul.mubr.f32.gmra.mrb[0].mxu0 %v2631
        %v2760 = vpop.f32.mrb[0].mxu0
        %v2761 = vadd.f32 %v2604, %v2760
        %v2762 = vpop.f32.mrb[0].mxu0
        %2763 = vmatprep.mubr.f32.mxu0 0.0
        %2764 = vmatmul.mubr.f32.gmra.mrb[0].mxu0 %v2634
        %v2765 = vpop.f32.mrb[0].mxu0
        %v2766 = vadd.f32 %v2604, %v2765
        %v2767 = vpop.f32.mrb[0].mxu0
        %2768 = vmatprep.mubr.f32.mxu0 0.0
        %2769 = vmatmul.mubr.f32.gmra.mrb[0].mxu0 %v2637
        %v2770 = vpop.f32.mrb[0].mxu0
        %v2771 = vadd.f32 %v2604, %v2770
        %v2772 = vpop.f32.mrb[0].mxu0
        %2773 = vmatprep.mubr.f32.mxu0 0.0
        %2774 = vmatmul.mubr.f32.gmra.mrb[0].mxu0 %v2640
        %v2775 = vpop.f32.mrb[0].mxu0
        %v2776 = vadd.f32 %v2604, %v2775
        %v2777 = vpop.f32.mrb[0].mxu0
        %2778 = vmatprep.mubr.f32.mxu0 0.0
        %2779 = vmatmul.mubr.f32.gmra.mrb[0].mxu0 %v2643
        %v2780 = vpop.f32.mrb[0].mxu0
        %v2781 = vadd.f32 %v2604, %v2780
        %v2782 = vpop.f32.mrb[0].mxu0
        %2783 = vmatprep.mubr.f32.mxu0 0.0
        %2784 = vmatmul.mubr.f32.gmra.mrb[0].mxu0 %v2646
        %v2785 = vpop.f32.mrb[0].mxu0
        %v2786 = vadd.f32 %v2604, %v2785
        %v2787 = vpop.f32.mrb[0].mxu0
        %2788 = vmatprep.mubr.f32.mxu0 0.0
        %2789 = vmatmul.mubr.f32.gmra.mrb[0].mxu0 %v2649
        %v2790 = vpop.f32.mrb[0].mxu0
        %v2791 = vadd.f32 %v2604, %v2790
        %v2792 = vpop.f32.mrb[0].mxu0
        %2793 = vmatprep.mubr.f32.mxu0 0.0
        %2794 = vmatmul.mubr.f32.gmra.mrb[0].mxu0 %v2652
        %v2795 = vpop.f32.mrb[0].mxu0
        %v2796 = vadd.f32 %v2604, %v2795
        %v2797 = vpop.f32.mrb[0].mxu0
        %2798 = vdwg.mxu0
        %v2799 = vmul.f32 %v2721, 0.5
        %v2800 = vmul.f32 %v2726, 0.5
        %v2801 = vmul.f32 %v2731, 0.5
        %v2802 = vmul.f32 %v2736, 0.5
        %v2803 = vmul.f32 %v2741, 0.5
        %v2804 = vmul.f32 %v2746, 0.5
        %v2805 = vmul.f32 %v2751, 0.5
        %v2806 = vmul.f32 %v2756, 0.5
        %v2807 = vmul.f32 %v2761, 0.5
        %v2808 = vmul.f32 %v2766, 0.5
        %v2809 = vmul.f32 %v2771, 0.5
        %v2810 = vmul.f32 %v2776, 0.5
        %v2811 = vmul.f32 %v2781, 0.5
        %v2812 = vmul.f32 %v2786, 0.5
        %v2813 = vmul.f32 %v2791, 0.5
        %v2814 = vmul.f32 %v2796, 0.5
        %v2815 = vmul.f32 %v2721, 0.70710677
        %v2816 = vmul.f32 %v2726, 0.70710677
        %v2817 = vmul.f32 %v2731, 0.70710677
        %v2818 = vmul.f32 %v2736, 0.70710677
        %v2819 = vmul.f32 %v2741, 0.70710677
        %v2820 = vmul.f32 %v2746, 0.70710677
        %v2821 = vmul.f32 %v2751, 0.70710677
        %v2822 = vmul.f32 %v2756, 0.70710677
        %v2823 = vmul.f32 %v2761, 0.70710677
        %v2824 = vmul.f32 %v2766, 0.70710677
        %v2825 = vmul.f32 %v2771, 0.70710677
        %v2826 = vmul.f32 %v2776, 0.70710677
        %v2827 = vmul.f32 %v2781, 0.70710677
        %v2828 = vmul.f32 %v2786, 0.70710677
        %v2829 = vmul.f32 %v2791, 0.70710677
        %v2830 = vmul.f32 %v2796, 0.70710677
        %v2831 = verf.f32.pop %v2815
        %v2832 = verf.f32.pop %v2816
        %v2833 = verf.f32.pop %v2817
        %v2834 = verf.f32.pop %v2818
        %v2835 = verf.f32.pop %v2819
        %v2836 = verf.f32.pop %v2820
        %v2837 = verf.f32.pop %v2821
        %v2838 = verf.f32.pop %v2822
        %v2839 = verf.f32.pop %v2823
        %v2840 = verf.f32.pop %v2824
        %v2841 = verf.f32.pop %v2825
        %v2842 = verf.f32.pop %v2826
        %v2843 = verf.f32.pop %v2827
        %v2844 = verf.f32.pop %v2828
        %v2845 = verf.f32.pop %v2829
        %v2846 = verf.f32.pop %v2830
        %v2847 = vadd.f32 %v2831, 1.0
        %v2848 = vadd.f32 %v2832, 1.0
        %v2849 = vadd.f32 %v2833, 1.0
        %v2850 = vadd.f32 %v2834, 1.0
        %v2851 = vadd.f32 %v2835, 1.0
        %v2852 = vadd.f32 %v2836, 1.0
        %v2853 = vadd.f32 %v2837, 1.0
        %v2854 = vadd.f32 %v2838, 1.0
        %v2855 = vadd.f32 %v2839, 1.0
        %v2856 = vadd.f32 %v2840, 1.0
        %v2857 = vadd.f32 %v2841, 1.0
        %v2858 = vadd.f32 %v2842, 1.0
        %v2859 = vadd.f32 %v2843, 1.0
        %v2860 = vadd.f32 %v2844, 1.0
        %v2861 = vadd.f32 %v2845, 1.0
        %v2862 = vadd.f32 %v2846, 1.0
        %v2863 = vmul.f32 %v2799, %v2847
        %v2864 = vmul.f32 %v2800, %v2848
        %v2865 = vmul.f32 %v2801, %v2849
        %v2866 = vmul.f32 %v2802, %v2850
        %v2867 = vmul.f32 %v2803, %v2851
        %v2868 = vmul.f32 %v2804, %v2852
        %v2869 = vmul.f32 %v2805, %v2853
        %v2870 = vmul.f32 %v2806, %v2854
        %v2871 = vmul.f32 %v2807, %v2855
        %v2872 = vmul.f32 %v2808, %v2856
        %v2873 = vmul.f32 %v2809, %v2857
        %v2874 = vmul.f32 %v2810, %v2858
        %v2875 = vmul.f32 %v2811, %v2859
        %v2876 = vmul.f32 %v2812, %v2860
        %v2877 = vmul.f32 %v2813, %v2861
        %v2878 = vmul.f32 %v2814, %v2862
        %s2879 = scalar_lea.vmem %s5, 16
        %v2880 = vld [vmem:[%s2879] sm:$0xff]
        %v2881 = vld [vmem:[%s2879 + $0x8] sm:$0xff]
        %s2882 = scalar_lea.vmem [#allocation8], 1
        %v2883 = vld [vmem:[%s2882] sm:$0x1]
        %v2885 = vlaneseq
        %v2886 = vshrl.u32 %v2885, 7
        %v2887 = vsub.s32 0, %v2886
        %v2888 = vrot.slane %v2883, %v2887
        %v2891 = vsel %vm1166, %v2863, 0
        %v2894 = vsel %vm1166, %v2864, 0
        %v2897 = vsel %vm1166, %v2865, 0
        %v2900 = vsel %vm1166, %v2866, 0
        %v2903 = vsel %vm1166, %v2867, 0
        %v2906 = vsel %vm1166, %v2868, 0
        %v2909 = vsel %vm1166, %v2869, 0
        %v2912 = vsel %vm1166, %v2870, 0
        %v2915 = vsel %vm1166, %v2871, 0
        %v2918 = vsel %vm1166, %v2872, 0
        %v2921 = vsel %vm1166, %v2873, 0
        %v2924 = vsel %vm1166, %v2874, 0
        %v2927 = vsel %vm1166, %v2875, 0
        %v2930 = vsel %vm1166, %v2876, 0
        %v2933 = vsel %vm1166, %v2877, 0
        %v2936 = vsel %vm1166, %v2878, 0
        %2938 = vmatprep.subr.mxu0 0.0
        %2939 = vmatpush1.msra.mxu0 %v2880
        %2940 = vmatprep.subr.mxu0 0.0
        %2941 = vmatpush1.msra.mxu0 %v2881
        %2942 = vmatprep.subr.mxu0 0.0
        %2943 = vmatpush1.msra.mxu0 0.0
        %2944 = vmatprep.subr.mxu0 0.0
        %2945 = vmatpush1.msra.mxu0 0.0
        %2946 = vmatprep.subr.mxu0 0.0
        %2947 = vmatpush1.msra.mxu0 0.0
        %2948 = vmatprep.subr.mxu0 0.0
        %2949 = vmatpush1.msra.mxu0 0.0
        %2950 = vmatprep.subr.mxu0 0.0
        %2951 = vmatpush1.msra.mxu0 0.0
        %2952 = vmatprep.subr.mxu0 0.0
        %2953 = vmatpush1.msra.mxu0 0.0
        %2954 = vmatprep.subr.mxu0 0.0
        %2955 = vmatpush1.msra.mxu0 0.0
        %2956 = vmatprep.subr.mxu0 0.0
        %2957 = vmatpush1.msra.mxu0 0.0
        %2958 = vmatprep.subr.mxu0 0.0
        %2959 = vmatpush1.msra.mxu0 0.0
        %2960 = vmatprep.subr.mxu0 0.0
        %2961 = vmatpush1.msra.mxu0 0.0
        %2962 = vmatprep.subr.mxu0 0.0
        %2963 = vmatpush1.msra.mxu0 0.0
        %2964 = vmatprep.subr.mxu0 0.0
        %2965 = vmatpush1.msra.mxu0 0.0
        %2966 = vmatprep.subr.mxu0 0.0
        %2967 = vmatpush1.msra.mxu0 0.0
        %2968 = vmatprep.subr.mxu0 0.0
        %2969 = vmatpush1.msra.mxu0 0.0
        %2970 = vmatprep.subr.mxu0 0.0
        %2971 = vmatpush1.msra.mxu0 0.0
        %2972 = vmatprep.subr.mxu0 0.0
        %2973 = vmatpush1.msra.mxu0 0.0
        %2974 = vmatprep.subr.mxu0 0.0
        %2975 = vmatpush1.msra.mxu0 0.0
        %2976 = vmatprep.subr.mxu0 0.0
        %2977 = vmatpush1.msra.mxu0 0.0
        %2978 = vmatprep.subr.mxu0 0.0
        %2979 = vmatpush1.msra.mxu0 0.0
        %2980 = vmatprep.subr.mxu0 0.0
        %2981 = vmatpush1.msra.mxu0 0.0
        %2982 = vmatprep.subr.mxu0 0.0
        %2983 = vmatpush1.msra.mxu0 0.0
        %2984 = vmatprep.subr.mxu0 0.0
        %2985 = vmatpush1.msra.mxu0 0.0
        %2986 = vmatprep.subr.mxu0 0.0
        %2987 = vmatpush1.msra.mxu0 0.0
        %2988 = vmatprep.subr.mxu0 0.0
        %2989 = vmatpush1.msra.mxu0 0.0
        %2990 = vmatprep.subr.mxu0 0.0
        %2991 = vmatpush1.msra.mxu0 0.0
        %2992 = vmatprep.subr.mxu0 0.0
        %2993 = vmatpush1.msra.mxu0 0.0
        %2994 = vmatprep.subr.mxu0 0.0
        %2995 = vmatpush1.msra.mxu0 0.0
        %2996 = vmatprep.subr.mxu0 0.0
        %2997 = vmatpush1.msra.mxu0 0.0
        %2998 = vmatprep.subr.mxu0 0.0
        %2999 = vmatpush1.msra.mxu0 0.0
        %3000 = vmatprep.subr.mxu0 0.0
        %3001 = vmatpush1.msra.mxu0 0.0
        %3002 = vmatprep.mubr.f32.mxu0 0.0
        %3003 = vmatmul.mubr.f32.gmra.mrb[0].mxu0 %v2891
        %v3004 = vpop.f32.mrb[0].mxu0
        %v3005 = vadd.f32 %v2888, %v3004
        %v3006 = vpop.f32.mrb[0].mxu0
        %3007 = vmatprep.mubr.f32.mxu0 0.0
        %3008 = vmatmul.mubr.f32.gmra.mrb[0].mxu0 %v2894
        %v3009 = vpop.f32.mrb[0].mxu0
        %v3010 = vadd.f32 %v2888, %v3009
        %v3011 = vpop.f32.mrb[0].mxu0
        %3012 = vmatprep.mubr.f32.mxu0 0.0
        %3013 = vmatmul.mubr.f32.gmra.mrb[0].mxu0 %v2897
        %v3014 = vpop.f32.mrb[0].mxu0
        %v3015 = vadd.f32 %v2888, %v3014
        %v3016 = vpop.f32.mrb[0].mxu0
        %3017 = vmatprep.mubr.f32.mxu0 0.0
        %3018 = vmatmul.mubr.f32.gmra.mrb[0].mxu0 %v2900
        %v3019 = vpop.f32.mrb[0].mxu0
        %v3020 = vadd.f32 %v2888, %v3019
        %v3021 = vpop.f32.mrb[0].mxu0
        %3022 = vmatprep.mubr.f32.mxu0 0.0
        %3023 = vmatmul.mubr.f32.gmra.mrb[0].mxu0 %v2903
        %v3024 = vpop.f32.mrb[0].mxu0
        %v3025 = vadd.f32 %v2888, %v3024
        %v3026 = vpop.f32.mrb[0].mxu0
        %3027 = vmatprep.mubr.f32.mxu0 0.0
        %3028 = vmatmul.mubr.f32.gmra.mrb[0].mxu0 %v2906
        %v3029 = vpop.f32.mrb[0].mxu0
        %v3030 = vadd.f32 %v2888, %v3029
        %v3031 = vpop.f32.mrb[0].mxu0
        %3032 = vmatprep.mubr.f32.mxu0 0.0
        %3033 = vmatmul.mubr.f32.gmra.mrb[0].mxu0 %v2909
        %v3034 = vpop.f32.mrb[0].mxu0
        %v3035 = vadd.f32 %v2888, %v3034
        %v3036 = vpop.f32.mrb[0].mxu0
        %3037 = vmatprep.mubr.f32.mxu0 0.0
        %3038 = vmatmul.mubr.f32.gmra.mrb[0].mxu0 %v2912
        %v3039 = vpop.f32.mrb[0].mxu0
        %v3040 = vadd.f32 %v2888, %v3039
        %v3041 = vpop.f32.mrb[0].mxu0
        %3042 = vmatprep.mubr.f32.mxu0 0.0
        %3043 = vmatmul.mubr.f32.gmra.mrb[0].mxu0 %v2915
        %v3044 = vpop.f32.mrb[0].mxu0
        %v3045 = vadd.f32 %v2888, %v3044
        %v3046 = vpop.f32.mrb[0].mxu0
        %3047 = vmatprep.mubr.f32.mxu0 0.0
        %3048 = vmatmul.mubr.f32.gmra.mrb[0].mxu0 %v2918
        %v3049 = vpop.f32.mrb[0].mxu0
        %v3050 = vadd.f32 %v2888, %v3049
        %v3051 = vpop.f32.mrb[0].mxu0
        %3052 = vmatprep.mubr.f32.mxu0 0.0
        %3053 = vmatmul.mubr.f32.gmra.mrb[0].mxu0 %v2921
        %v3054 = vpop.f32.mrb[0].mxu0
        %v3055 = vadd.f32 %v2888, %v3054
        %v3056 = vpop.f32.mrb[0].mxu0
        %3057 = vmatprep.mubr.f32.mxu0 0.0
        %3058 = vmatmul.mubr.f32.gmra.mrb[0].mxu0 %v2924
        %v3059 = vpop.f32.mrb[0].mxu0
        %v3060 = vadd.f32 %v2888, %v3059
        %v3061 = vpop.f32.mrb[0].mxu0
        %3062 = vmatprep.mubr.f32.mxu0 0.0
        %3063 = vmatmul.mubr.f32.gmra.mrb[0].mxu0 %v2927
        %v3064 = vpop.f32.mrb[0].mxu0
        %v3065 = vadd.f32 %v2888, %v3064
        %v3066 = vpop.f32.mrb[0].mxu0
        %3067 = vmatprep.mubr.f32.mxu0 0.0
        %3068 = vmatmul.mubr.f32.gmra.mrb[0].mxu0 %v2930
        %v3069 = vpop.f32.mrb[0].mxu0
        %v3070 = vadd.f32 %v2888, %v3069
        %v3071 = vpop.f32.mrb[0].mxu0
        %3072 = vmatprep.mubr.f32.mxu0 0.0
        %3073 = vmatmul.mubr.f32.gmra.mrb[0].mxu0 %v2933
        %v3074 = vpop.f32.mrb[0].mxu0
        %v3075 = vadd.f32 %v2888, %v3074
        %v3076 = vpop.f32.mrb[0].mxu0
        %3077 = vmatprep.mubr.f32.mxu0 0.0
        %3078 = vmatmul.mubr.f32.gmra.mrb[0].mxu0 %v2936
        %v3079 = vpop.f32.mrb[0].mxu0
        %v3080 = vadd.f32 %v2888, %v3079
        %v3081 = vpop.f32.mrb[0].mxu0
        %3082 = vdwg.mxu0
        %s3083 = scalar_lea.vmem %s7, 8
        %v3084 = vld [vmem:[%s3083] sm:$0xff]
        %s3085 = scalar_lea.vmem [#allocation10], 1
        %v3086 = vld [vmem:[%s3085] sm:$0x1]
        %v3088 = vlaneseq
        %v3089 = vshrl.u32 %v3088, 7
        %v3090 = vsub.s32 0, %v3089
        %v3091 = vrot.slane %v3086, %v3090
        %v3094 = vsel %vm883, %v3005, 0
        %v3097 = vsel %vm883, %v3010, 0
        %v3100 = vsel %vm883, %v3015, 0
        %v3103 = vsel %vm883, %v3020, 0
        %v3106 = vsel %vm883, %v3025, 0
        %v3109 = vsel %vm883, %v3030, 0
        %v3112 = vsel %vm883, %v3035, 0
        %v3115 = vsel %vm883, %v3040, 0
        %v3118 = vsel %vm883, %v3045, 0
        %v3121 = vsel %vm883, %v3050, 0
        %v3124 = vsel %vm883, %v3055, 0
        %v3127 = vsel %vm883, %v3060, 0
        %v3130 = vsel %vm883, %v3065, 0
        %v3133 = vsel %vm883, %v3070, 0
        %v3136 = vsel %vm883, %v3075, 0
        %v3139 = vsel %vm883, %v3080, 0
        %3141 = vmatprep.subr.mxu0 0.0
        %3142 = vmatpush1.msra.mxu0 %v3084
        %3143 = vmatprep.subr.mxu0 0.0
        %3144 = vmatpush1.msra.mxu0 0.0
        %3145 = vmatprep.subr.mxu0 0.0
        %3146 = vmatpush1.msra.mxu0 0.0
        %3147 = vmatprep.subr.mxu0 0.0
        %3148 = vmatpush1.msra.mxu0 0.0
        %3149 = vmatprep.subr.mxu0 0.0
        %3150 = vmatpush1.msra.mxu0 0.0
        %3151 = vmatprep.subr.mxu0 0.0
        %3152 = vmatpush1.msra.mxu0 0.0
        %3153 = vmatprep.subr.mxu0 0.0
        %3154 = vmatpush1.msra.mxu0 0.0
        %3155 = vmatprep.subr.mxu0 0.0
        %3156 = vmatpush1.msra.mxu0 0.0
        %3157 = vmatprep.subr.mxu0 0.0
        %3158 = vmatpush1.msra.mxu0 0.0
        %3159 = vmatprep.subr.mxu0 0.0
        %3160 = vmatpush1.msra.mxu0 0.0
        %3161 = vmatprep.subr.mxu0 0.0
        %3162 = vmatpush1.msra.mxu0 0.0
        %3163 = vmatprep.subr.mxu0 0.0
        %3164 = vmatpush1.msra.mxu0 0.0
        %3165 = vmatprep.subr.mxu0 0.0
        %3166 = vmatpush1.msra.mxu0 0.0
        %3167 = vmatprep.subr.mxu0 0.0
        %3168 = vmatpush1.msra.mxu0 0.0
        %3169 = vmatprep.subr.mxu0 0.0
        %3170 = vmatpush1.msra.mxu0 0.0
        %3171 = vmatprep.subr.mxu0 0.0
        %3172 = vmatpush1.msra.mxu0 0.0
        %3173 = vmatprep.subr.mxu0 0.0
        %3174 = vmatpush1.msra.mxu0 0.0
        %3175 = vmatprep.subr.mxu0 0.0
        %3176 = vmatpush1.msra.mxu0 0.0
        %3177 = vmatprep.subr.mxu0 0.0
        %3178 = vmatpush1.msra.mxu0 0.0
        %3179 = vmatprep.subr.mxu0 0.0
        %3180 = vmatpush1.msra.mxu0 0.0
        %3181 = vmatprep.subr.mxu0 0.0
        %3182 = vmatpush1.msra.mxu0 0.0
        %3183 = vmatprep.subr.mxu0 0.0
        %3184 = vmatpush1.msra.mxu0 0.0
        %3185 = vmatprep.subr.mxu0 0.0
        %3186 = vmatpush1.msra.mxu0 0.0
        %3187 = vmatprep.subr.mxu0 0.0
        %3188 = vmatpush1.msra.mxu0 0.0
        %3189 = vmatprep.subr.mxu0 0.0
        %3190 = vmatpush1.msra.mxu0 0.0
        %3191 = vmatprep.subr.mxu0 0.0
        %3192 = vmatpush1.msra.mxu0 0.0
        %3193 = vmatprep.subr.mxu0 0.0
        %3194 = vmatpush1.msra.mxu0 0.0
        %3195 = vmatprep.subr.mxu0 0.0
        %3196 = vmatpush1.msra.mxu0 0.0
        %3197 = vmatprep.subr.mxu0 0.0
        %3198 = vmatpush1.msra.mxu0 0.0
        %3199 = vmatprep.subr.mxu0 0.0
        %3200 = vmatpush1.msra.mxu0 0.0
        %3201 = vmatprep.subr.mxu0 0.0
        %3202 = vmatpush1.msra.mxu0 0.0
        %3203 = vmatprep.subr.mxu0 0.0
        %3204 = vmatpush1.msra.mxu0 0.0
        %3205 = vmatprep.mubr.f32.mxu0 0.0
        %3206 = vmatmul.mubr.f32.gmra.mrb[0].mxu0 %v3094
        %v3207 = vpop.f32.mrb[0].mxu0
        %v3208 = vadd.f32 %v3091, %v3207
        %v3209 = vpop.f32.mrb[0].mxu0
        %3210 = vmatprep.mubr.f32.mxu0 0.0
        %3211 = vmatmul.mubr.f32.gmra.mrb[0].mxu0 %v3097
        %v3212 = vpop.f32.mrb[0].mxu0
        %v3213 = vadd.f32 %v3091, %v3212
        %v3214 = vpop.f32.mrb[0].mxu0
        %3215 = vmatprep.mubr.f32.mxu0 0.0
        %3216 = vmatmul.mubr.f32.gmra.mrb[0].mxu0 %v3100
        %v3217 = vpop.f32.mrb[0].mxu0
        %v3218 = vadd.f32 %v3091, %v3217
        %v3219 = vpop.f32.mrb[0].mxu0
        %3220 = vmatprep.mubr.f32.mxu0 0.0
        %3221 = vmatmul.mubr.f32.gmra.mrb[0].mxu0 %v3103
        %v3222 = vpop.f32.mrb[0].mxu0
        %v3223 = vadd.f32 %v3091, %v3222
        %v3224 = vpop.f32.mrb[0].mxu0
        %3225 = vmatprep.mubr.f32.mxu0 0.0
        %3226 = vmatmul.mubr.f32.gmra.mrb[0].mxu0 %v3106
        %v3227 = vpop.f32.mrb[0].mxu0
        %v3228 = vadd.f32 %v3091, %v3227
        %v3229 = vpop.f32.mrb[0].mxu0
        %3230 = vmatprep.mubr.f32.mxu0 0.0
        %3231 = vmatmul.mubr.f32.gmra.mrb[0].mxu0 %v3109
        %v3232 = vpop.f32.mrb[0].mxu0
        %v3233 = vadd.f32 %v3091, %v3232
        %v3234 = vpop.f32.mrb[0].mxu0
        %3235 = vmatprep.mubr.f32.mxu0 0.0
        %3236 = vmatmul.mubr.f32.gmra.mrb[0].mxu0 %v3112
        %v3237 = vpop.f32.mrb[0].mxu0
        %v3238 = vadd.f32 %v3091, %v3237
        %v3239 = vpop.f32.mrb[0].mxu0
        %3240 = vmatprep.mubr.f32.mxu0 0.0
        %3241 = vmatmul.mubr.f32.gmra.mrb[0].mxu0 %v3115
        %v3242 = vpop.f32.mrb[0].mxu0
        %v3243 = vadd.f32 %v3091, %v3242
        %v3244 = vpop.f32.mrb[0].mxu0
        %3245 = vmatprep.mubr.f32.mxu0 0.0
        %3246 = vmatmul.mubr.f32.gmra.mrb[0].mxu0 %v3118
        %v3247 = vpop.f32.mrb[0].mxu0
        %v3248 = vadd.f32 %v3091, %v3247
        %v3249 = vpop.f32.mrb[0].mxu0
        %3250 = vmatprep.mubr.f32.mxu0 0.0
        %3251 = vmatmul.mubr.f32.gmra.mrb[0].mxu0 %v3121
        %v3252 = vpop.f32.mrb[0].mxu0
        %v3253 = vadd.f32 %v3091, %v3252
        %v3254 = vpop.f32.mrb[0].mxu0
        %3255 = vmatprep.mubr.f32.mxu0 0.0
        %3256 = vmatmul.mubr.f32.gmra.mrb[0].mxu0 %v3124
        %v3257 = vpop.f32.mrb[0].mxu0
        %v3258 = vadd.f32 %v3091, %v3257
        %v3259 = vpop.f32.mrb[0].mxu0
        %3260 = vmatprep.mubr.f32.mxu0 0.0
        %3261 = vmatmul.mubr.f32.gmra.mrb[0].mxu0 %v3127
        %v3262 = vpop.f32.mrb[0].mxu0
        %v3263 = vadd.f32 %v3091, %v3262
        %v3264 = vpop.f32.mrb[0].mxu0
        %3265 = vmatprep.mubr.f32.mxu0 0.0
        %3266 = vmatmul.mubr.f32.gmra.mrb[0].mxu0 %v3130
        %v3267 = vpop.f32.mrb[0].mxu0
        %v3268 = vadd.f32 %v3091, %v3267
        %v3269 = vpop.f32.mrb[0].mxu0
        %3270 = vmatprep.mubr.f32.mxu0 0.0
        %3271 = vmatmul.mubr.f32.gmra.mrb[0].mxu0 %v3133
        %v3272 = vpop.f32.mrb[0].mxu0
        %v3273 = vadd.f32 %v3091, %v3272
        %v3274 = vpop.f32.mrb[0].mxu0
        %3275 = vmatprep.mubr.f32.mxu0 0.0
        %3276 = vmatmul.mubr.f32.gmra.mrb[0].mxu0 %v3136
        %v3277 = vpop.f32.mrb[0].mxu0
        %v3278 = vadd.f32 %v3091, %v3277
        %v3279 = vpop.f32.mrb[0].mxu0
        %3280 = vmatprep.mubr.f32.mxu0 0.0
        %3281 = vmatmul.mubr.f32.gmra.mrb[0].mxu0 %v3139
        %v3282 = vpop.f32.mrb[0].mxu0
        %v3283 = vadd.f32 %v3091, %v3282
        %v3284 = vpop.f32.mrb[0].mxu0
        %3285 = vdwg.mxu0
        %v3286 = vsel %vm883, %v3208, -inf
        %3287 = vmax.xlane.f32.xlu0 %v3286
        %v3288 = vpop.xlane.xlu0 %3287
        %v3289 = vsel %vm883, %v3213, -inf
        %3290 = vmax.xlane.f32.xlu0 %v3289
        %v3291 = vpop.xlane.xlu0 %3290
        %v3292 = vsel %vm883, %v3218, -inf
        %3293 = vmax.xlane.f32.xlu0 %v3292
        %v3294 = vpop.xlane.xlu0 %3293
        %v3295 = vsel %vm883, %v3223, -inf
        %3296 = vmax.xlane.f32.xlu0 %v3295
        %v3297 = vpop.xlane.xlu0 %3296
        %v3298 = vsel %vm883, %v3228, -inf
        %3299 = vmax.xlane.f32.xlu0 %v3298
        %v3300 = vpop.xlane.xlu0 %3299
        %v3301 = vsel %vm883, %v3233, -inf
        %3302 = vmax.xlane.f32.xlu0 %v3301
        %v3303 = vpop.xlane.xlu0 %3302
        %v3304 = vsel %vm883, %v3238, -inf
        %3305 = vmax.xlane.f32.xlu0 %v3304
        %v3306 = vpop.xlane.xlu0 %3305
        %v3307 = vsel %vm883, %v3243, -inf
        %3308 = vmax.xlane.f32.xlu0 %v3307
        %v3309 = vpop.xlane.xlu0 %3308
        %v3310 = vsel %vm883, %v3248, -inf
        %3311 = vmax.xlane.f32.xlu0 %v3310
        %v3312 = vpop.xlane.xlu0 %3311
        %v3313 = vsel %vm883, %v3253, -inf
        %3314 = vmax.xlane.f32.xlu0 %v3313
        %v3315 = vpop.xlane.xlu0 %3314
        %v3316 = vsel %vm883, %v3258, -inf
        %3317 = vmax.xlane.f32.xlu0 %v3316
        %v3318 = vpop.xlane.xlu0 %3317
        %v3319 = vsel %vm883, %v3263, -inf
        %3320 = vmax.xlane.f32.xlu0 %v3319
        %v3321 = vpop.xlane.xlu0 %3320
        %v3322 = vsel %vm883, %v3268, -inf
        %3323 = vmax.xlane.f32.xlu0 %v3322
        %v3324 = vpop.xlane.xlu0 %3323
        %v3325 = vsel %vm883, %v3273, -inf
        %3326 = vmax.xlane.f32.xlu0 %v3325
        %v3327 = vpop.xlane.xlu0 %3326
        %v3328 = vsel %vm883, %v3278, -inf
        %3329 = vmax.xlane.f32.xlu0 %v3328
        %v3330 = vpop.xlane.xlu0 %3329
        %v3331 = vsel %vm883, %v3283, -inf
        %3332 = vmax.xlane.f32.xlu0 %v3331
        %v3333 = vpop.xlane.xlu0 %3332
        %v3334 = vsub.f32 %v3208, %v3288
        %v3335 = vsub.f32 %v3213, %v3291
        %v3336 = vsub.f32 %v3218, %v3294
        %v3337 = vsub.f32 %v3223, %v3297
        %v3338 = vsub.f32 %v3228, %v3300
        %v3339 = vsub.f32 %v3233, %v3303
        %v3340 = vsub.f32 %v3238, %v3306
        %v3341 = vsub.f32 %v3243, %v3309
        %v3342 = vsub.f32 %v3248, %v3312
        %v3343 = vsub.f32 %v3253, %v3315
        %v3344 = vsub.f32 %v3258, %v3318
        %v3345 = vsub.f32 %v3263, %v3321
        %v3346 = vsub.f32 %v3268, %v3324
        %v3347 = vsub.f32 %v3273, %v3327
        %v3348 = vsub.f32 %v3278, %v3330
        %v3349 = vsub.f32 %v3283, %v3333
        %v3350 = vmul.f32 %v3334, 1.442695
        %v3351 = vpow.pop %v3350
        %v3352 = vmul.f32 %v3335, 1.442695
        %v3353 = vpow.pop %v3352
        %v3354 = vmul.f32 %v3336, 1.442695
        %v3355 = vpow.pop %v3354
        %v3356 = vmul.f32 %v3337, 1.442695
        %v3357 = vpow.pop %v3356
        %v3358 = vmul.f32 %v3338, 1.442695
        %v3359 = vpow.pop %v3358
        %v3360 = vmul.f32 %v3339, 1.442695
        %v3361 = vpow.pop %v3360
        %v3362 = vmul.f32 %v3340, 1.442695
        %v3363 = vpow.pop %v3362
        %v3364 = vmul.f32 %v3341, 1.442695
        %v3365 = vpow.pop %v3364
        %v3366 = vmul.f32 %v3342, 1.442695
        %v3367 = vpow.pop %v3366
        %v3368 = vmul.f32 %v3343, 1.442695
        %v3369 = vpow.pop %v3368
        %v3370 = vmul.f32 %v3344, 1.442695
        %v3371 = vpow.pop %v3370
        %v3372 = vmul.f32 %v3345, 1.442695
        %v3373 = vpow.pop %v3372
        %v3374 = vmul.f32 %v3346, 1.442695
        %v3375 = vpow.pop %v3374
        %v3376 = vmul.f32 %v3347, 1.442695
        %v3377 = vpow.pop %v3376
        %v3378 = vmul.f32 %v3348, 1.442695
        %v3379 = vpow.pop %v3378
        %v3380 = vmul.f32 %v3349, 1.442695
        %v3381 = vpow.pop %v3380
        %v3382 = vsel %vm883, %v3351, 0.0
        %3383 = vadd.xlane.f32.xlu0 %v3382
        %v3384 = vpop.xlane.xlu0 %3383
        %v3385 = vsel %vm883, %v3353, 0.0
        %3386 = vadd.xlane.f32.xlu0 %v3385
        %v3387 = vpop.xlane.xlu0 %3386
        %v3388 = vsel %vm883, %v3355, 0.0
        %3389 = vadd.xlane.f32.xlu0 %v3388
        %v3390 = vpop.xlane.xlu0 %3389
        %v3391 = vsel %vm883, %v3357, 0.0
        %3392 = vadd.xlane.f32.xlu0 %v3391
        %v3393 = vpop.xlane.xlu0 %3392
        %v3394 = vsel %vm883, %v3359, 0.0
        %3395 = vadd.xlane.f32.xlu0 %v3394
        %v3396 = vpop.xlane.xlu0 %3395
        %v3397 = vsel %vm883, %v3361, 0.0
        %3398 = vadd.xlane.f32.xlu0 %v3397
        %v3399 = vpop.xlane.xlu0 %3398
        %v3400 = vsel %vm883, %v3363, 0.0
        %3401 = vadd.xlane.f32.xlu0 %v3400
        %v3402 = vpop.xlane.xlu0 %3401
        %v3403 = vsel %vm883, %v3365, 0.0
        %3404 = vadd.xlane.f32.xlu0 %v3403
        %v3405 = vpop.xlane.xlu0 %3404
        %v3406 = vsel %vm883, %v3367, 0.0
        %3407 = vadd.xlane.f32.xlu0 %v3406
        %v3408 = vpop.xlane.xlu0 %3407
        %v3409 = vsel %vm883, %v3369, 0.0
        %3410 = vadd.xlane.f32.xlu0 %v3409
        %v3411 = vpop.xlane.xlu0 %3410
        %v3412 = vsel %vm883, %v3371, 0.0
        %3413 = vadd.xlane.f32.xlu0 %v3412
        %v3414 = vpop.xlane.xlu0 %3413
        %v3415 = vsel %vm883, %v3373, 0.0
        %3416 = vadd.xlane.f32.xlu0 %v3415
        %v3417 = vpop.xlane.xlu0 %3416
        %v3418 = vsel %vm883, %v3375, 0.0
        %3419 = vadd.xlane.f32.xlu0 %v3418
        %v3420 = vpop.xlane.xlu0 %3419
        %v3421 = vsel %vm883, %v3377, 0.0
        %3422 = vadd.xlane.f32.xlu0 %v3421
        %v3423 = vpop.xlane.xlu0 %3422
        %v3424 = vsel %vm883, %v3379, 0.0
        %3425 = vadd.xlane.f32.xlu0 %v3424
        %v3426 = vpop.xlane.xlu0 %3425
        %v3427 = vsel %vm883, %v3381, 0.0
        %3428 = vadd.xlane.f32.xlu0 %v3427
        %v3429 = vpop.xlane.xlu0 %3428
        %v3430 = vrcp.pop %v3384
        %v3431 = vrcp.pop %v3387
        %v3432 = vrcp.pop %v3390
        %v3433 = vrcp.pop %v3393
        %v3434 = vrcp.pop %v3396
        %v3435 = vrcp.pop %v3399
        %v3436 = vrcp.pop %v3402
        %v3437 = vrcp.pop %v3405
        %v3438 = vrcp.pop %v3408
        %v3439 = vrcp.pop %v3411
        %v3440 = vrcp.pop %v3414
        %v3441 = vrcp.pop %v3417
        %v3442 = vrcp.pop %v3420
        %v3443 = vrcp.pop %v3423
        %v3444 = vrcp.pop %v3426
        %v3445 = vrcp.pop %v3429
        %v3446 = vmul.f32 %v3351, %v3430
        %v3447 = vmul.f32 %v3353, %v3431
        %v3448 = vmul.f32 %v3355, %v3432
        %v3449 = vmul.f32 %v3357, %v3433
        %v3450 = vmul.f32 %v3359, %v3434
        %v3451 = vmul.f32 %v3361, %v3435
        %v3452 = vmul.f32 %v3363, %v3436
        %v3453 = vmul.f32 %v3365, %v3437
        %v3454 = vmul.f32 %v3367, %v3438
        %v3455 = vmul.f32 %v3369, %v3439
        %v3456 = vmul.f32 %v3371, %v3440
        %v3457 = vmul.f32 %v3373, %v3441
        %v3458 = vmul.f32 %v3375, %v3442
        %v3459 = vmul.f32 %v3377, %v3443
        %v3460 = vmul.f32 %v3379, %v3444
        %v3461 = vmul.f32 %v3381, %v3445
        %v3462 = vmul.f32 %v3005, %v3446
        %v3463 = vmul.f32 %v3010, %v3447
        %v3464 = vmul.f32 %v3015, %v3448
        %v3465 = vmul.f32 %v3020, %v3449
        %v3466 = vmul.f32 %v3025, %v3450
        %v3467 = vmul.f32 %v3030, %v3451
        %v3468 = vmul.f32 %v3035, %v3452
        %v3469 = vmul.f32 %v3040, %v3453
        %v3470 = vmul.f32 %v3045, %v3454
        %v3471 = vmul.f32 %v3050, %v3455
        %v3472 = vmul.f32 %v3055, %v3456
        %v3473 = vmul.f32 %v3060, %v3457
        %v3474 = vmul.f32 %v3065, %v3458
        %v3475 = vmul.f32 %v3070, %v3459
        %v3476 = vmul.f32 %v3075, %v3460
        %v3477 = vmul.f32 %v3080, %v3461
        %3478 = vxpose.xlu0.b32.start [1/16] %v3462, 128
        %3479 = vxpose.xlu0.b32.cont [2/16] %v3463, 128
        %3480 = vxpose.xlu0.b32.cont [3/16] %v3464, 128
        %3481 = vxpose.xlu0.b32.cont [4/16] %v3465, 128
        %3482 = vxpose.xlu0.b32.cont [5/16] 0.0, 128
        %3483 = vxpose.xlu0.b32.cont [6/16] 0.0, 128
        %3484 = vxpose.xlu0.b32.cont [7/16] 0.0, 128
        %3485 = vxpose.xlu0.b32.cont [8/16] 0.0, 128
        %3486 = vxpose.xlu0.b32.cont [9/16] 0.0, 128
        %3487 = vxpose.xlu0.b32.cont [10/16] 0.0, 128
        %3488 = vxpose.xlu0.b32.cont [11/16] 0.0, 128
        %3489 = vxpose.xlu0.b32.cont [12/16] 0.0, 128
        %3490 = vxpose.xlu0.b32.cont [13/16] 0.0, 128
        %3491 = vxpose.xlu0.b32.cont [14/16] 0.0, 128
        %3492 = vxpose.xlu0.b32.cont [15/16] 0.0, 128
        %3493 = vxpose.xlu0.b32.end [16/16] 0.0, 128
        %v3494 = vpop.trf.xlu0
        %v3495 = vpop.trf.xlu0
        %v3496 = vpop.trf.xlu0
        %v3497 = vpop.trf.xlu0
        %v3498 = vpop.trf.xlu0
        %v3499 = vpop.trf.xlu0
        %v3500 = vpop.trf.xlu0
        %v3501 = vpop.trf.xlu0
        %v3502 = vpop.trf.xlu0
        %v3503 = vpop.trf.xlu0
        %v3504 = vpop.trf.xlu0
        %v3505 = vpop.trf.xlu0
        %v3506 = vpop.trf.xlu0
        %v3507 = vpop.trf.xlu0
        %v3508 = vpop.trf.xlu0
        %v3509 = vpop.trf.xlu0
        %3510 = vxpose.xlu0.b32.start [1/16] %v3466, 128
        %3511 = vxpose.xlu0.b32.cont [2/16] %v3467, 128
        %3512 = vxpose.xlu0.b32.cont [3/16] %v3468, 128
        %3513 = vxpose.xlu0.b32.cont [4/16] %v3469, 128
        %3514 = vxpose.xlu0.b32.cont [5/16] 0.0, 128
        %3515 = vxpose.xlu0.b32.cont [6/16] 0.0, 128
        %3516 = vxpose.xlu0.b32.cont [7/16] 0.0, 128
        %3517 = vxpose.xlu0.b32.cont [8/16] 0.0, 128
        %3518 = vxpose.xlu0.b32.cont [9/16] 0.0, 128
        %3519 = vxpose.xlu0.b32.cont [10/16] 0.0, 128
        %3520 = vxpose.xlu0.b32.cont [11/16] 0.0, 128
        %3521 = vxpose.xlu0.b32.cont [12/16] 0.0, 128
        %3522 = vxpose.xlu0.b32.cont [13/16] 0.0, 128
        %3523 = vxpose.xlu0.b32.cont [14/16] 0.0, 128
        %3524 = vxpose.xlu0.b32.cont [15/16] 0.0, 128
        %3525 = vxpose.xlu0.b32.end [16/16] 0.0, 128
        %v3526 = vpop.trf.xlu0
        %v3527 = vpop.trf.xlu0
        %v3528 = vpop.trf.xlu0
        %v3529 = vpop.trf.xlu0
        %v3530 = vpop.trf.xlu0
        %v3531 = vpop.trf.xlu0
        %v3532 = vpop.trf.xlu0
        %v3533 = vpop.trf.xlu0
        %v3534 = vpop.trf.xlu0
        %v3535 = vpop.trf.xlu0
        %v3536 = vpop.trf.xlu0
        %v3537 = vpop.trf.xlu0
        %v3538 = vpop.trf.xlu0
        %v3539 = vpop.trf.xlu0
        %v3540 = vpop.trf.xlu0
        %v3541 = vpop.trf.xlu0
        %3542 = vxpose.xlu0.b32.start [1/16] %v3470, 128
        %3543 = vxpose.xlu0.b32.cont [2/16] %v3471, 128
        %3544 = vxpose.xlu0.b32.cont [3/16] %v3472, 128
        %3545 = vxpose.xlu0.b32.cont [4/16] %v3473, 128
        %3546 = vxpose.xlu0.b32.cont [5/16] 0.0, 128
        %3547 = vxpose.xlu0.b32.cont [6/16] 0.0, 128
        %3548 = vxpose.xlu0.b32.cont [7/16] 0.0, 128
        %3549 = vxpose.xlu0.b32.cont [8/16] 0.0, 128
        %3550 = vxpose.xlu0.b32.cont [9/16] 0.0, 128
        %3551 = vxpose.xlu0.b32.cont [10/16] 0.0, 128
        %3552 = vxpose.xlu0.b32.cont [11/16] 0.0, 128
        %3553 = vxpose.xlu0.b32.cont [12/16] 0.0, 128
        %3554 = vxpose.xlu0.b32.cont [13/16] 0.0, 128
        %3555 = vxpose.xlu0.b32.cont [14/16] 0.0, 128
        %3556 = vxpose.xlu0.b32.cont [15/16] 0.0, 128
        %3557 = vxpose.xlu0.b32.end [16/16] 0.0, 128
        %v3558 = vpop.trf.xlu0
        %v3559 = vpop.trf.xlu0
        %v3560 = vpop.trf.xlu0
        %v3561 = vpop.trf.xlu0
        %v3562 = vpop.trf.xlu0
        %v3563 = vpop.trf.xlu0
        %v3564 = vpop.trf.xlu0
        %v3565 = vpop.trf.xlu0
        %v3566 = vpop.trf.xlu0
        %v3567 = vpop.trf.xlu0
        %v3568 = vpop.trf.xlu0
        %v3569 = vpop.trf.xlu0
        %v3570 = vpop.trf.xlu0
        %v3571 = vpop.trf.xlu0
        %v3572 = vpop.trf.xlu0
        %v3573 = vpop.trf.xlu0
        %3574 = vxpose.xlu0.b32.start [1/16] %v3474, 128
        %3575 = vxpose.xlu0.b32.cont [2/16] %v3475, 128
        %3576 = vxpose.xlu0.b32.cont [3/16] %v3476, 128
        %3577 = vxpose.xlu0.b32.cont [4/16] %v3477, 128
        %3578 = vxpose.xlu0.b32.cont [5/16] 0.0, 128
        %3579 = vxpose.xlu0.b32.cont [6/16] 0.0, 128
        %3580 = vxpose.xlu0.b32.cont [7/16] 0.0, 128
        %3581 = vxpose.xlu0.b32.cont [8/16] 0.0, 128
        %3582 = vxpose.xlu0.b32.cont [9/16] 0.0, 128
        %3583 = vxpose.xlu0.b32.cont [10/16] 0.0, 128
        %3584 = vxpose.xlu0.b32.cont [11/16] 0.0, 128
        %3585 = vxpose.xlu0.b32.cont [12/16] 0.0, 128
        %3586 = vxpose.xlu0.b32.cont [13/16] 0.0, 128
        %3587 = vxpose.xlu0.b32.cont [14/16] 0.0, 128
        %3588 = vxpose.xlu0.b32.cont [15/16] 0.0, 128
        %3589 = vxpose.xlu0.b32.end [16/16] 0.0, 128
        %v3590 = vpop.trf.xlu0
        %v3591 = vpop.trf.xlu0
        %v3592 = vpop.trf.xlu0
        %v3593 = vpop.trf.xlu0
        %v3594 = vpop.trf.xlu0
        %v3595 = vpop.trf.xlu0
        %v3596 = vpop.trf.xlu0
        %v3597 = vpop.trf.xlu0
        %v3598 = vpop.trf.xlu0
        %v3599 = vpop.trf.xlu0
        %v3600 = vpop.trf.xlu0
        %v3601 = vpop.trf.xlu0
        %v3602 = vpop.trf.xlu0
        %v3603 = vpop.trf.xlu0
        %v3604 = vpop.trf.xlu0
        %v3605 = vpop.trf.xlu0
        %v3606 = vadd.f32 %v3494, %v2384
        %v3607 = vadd.f32 %v3526, %v2385
        %v3608 = vadd.f32 %v3558, %v2386
        %v3609 = vadd.f32 %v3590, %v2387
        %s3610 = scalar_lea.vmem [#allocation11], 1
        %v3611 = vld [vmem:[%s3610] sm:$0x1]
        %s3612 = scalar_lea.vmem [#allocation13], 1
        %v3613 = vld [vmem:[%s3612] sm:$0x1]
        %v3614 = vsel %vm673, %v3606, 0.0
        %3615 = vadd.xlane.f32.xlu0 %v3614
        %v3616 = vpop.xlane.xlu0 %3615
        %v3617 = vsel %vm673, %v3607, 0.0
        %3618 = vadd.xlane.f32.xlu0 %v3617
        %v3619 = vpop.xlane.xlu0 %3618
        %v3620 = vsel %vm673, %v3608, 0.0
        %3621 = vadd.xlane.f32.xlu0 %v3620
        %v3622 = vpop.xlane.xlu0 %3621
        %v3623 = vsel %vm673, %v3609, 0.0
        %3624 = vadd.xlane.f32.xlu0 %v3623
        %v3625 = vpop.xlane.xlu0 %3624
        %v3626 = vmul.f32 %v3616, %v686
        %v3627 = vmul.f32 %v3619, %v686
        %v3628 = vmul.f32 %v3622, %v686
        %v3629 = vmul.f32 %v3625, %v686
        %v3630 = vsub.f32 %v3606, %v3626
        %v3631 = vsub.f32 %v3607, %v3627
        %v3632 = vsub.f32 %v3608, %v3628
        %v3633 = vsub.f32 %v3609, %v3629
        %v3634 = vmul.f32 %v3630, %v3630
        %v3635 = vmul.f32 %v3631, %v3631
        %v3636 = vmul.f32 %v3632, %v3632
        %v3637 = vmul.f32 %v3633, %v3633
        %v3638 = vsel %vm673, %v3634, 0.0
        %3639 = vadd.xlane.f32.xlu0 %v3638
        %v3640 = vpop.xlane.xlu0 %3639
        %v3641 = vsel %vm673, %v3635, 0.0
        %3642 = vadd.xlane.f32.xlu0 %v3641
        %v3643 = vpop.xlane.xlu0 %3642
        %v3644 = vsel %vm673, %v3636, 0.0
        %3645 = vadd.xlane.f32.xlu0 %v3644
        %v3646 = vpop.xlane.xlu0 %3645
        %v3647 = vsel %vm673, %v3637, 0.0
        %3648 = vadd.xlane.f32.xlu0 %v3647
        %v3649 = vpop.xlane.xlu0 %3648
        %v3650 = vmul.f32 %v3640, %v686
        %v3651 = vmul.f32 %v3643, %v686
        %v3652 = vmul.f32 %v3646, %v686
        %v3653 = vmul.f32 %v3649, %v686
        %v3654 = vadd.f32 %v3650, 1e-05
        %v3655 = vadd.f32 %v3651, 1e-05
        %v3656 = vadd.f32 %v3652, 1e-05
        %v3657 = vadd.f32 %v3653, 1e-05
        %v3658 = vrsqrt.pop %v3654
        %v3659 = vrsqrt.pop %v3655
        %v3660 = vrsqrt.pop %v3656
        %v3661 = vrsqrt.pop %v3657
        %v3662 = vmul.f32 %v3630, %v3658
        %v3663 = vmul.f32 %v3631, %v3659
        %v3664 = vmul.f32 %v3632, %v3660
        %v3665 = vmul.f32 %v3633, %v3661
        %v3667 = vlaneseq
        %v3668 = vshrl.u32 %v3667, 7
        %v3669 = vsub.s32 0, %v3668
        %v3670 = vrot.slane %v3611, %v3669
        %v3672 = vmul.f32 %v3662, %v3670
        %v3673 = vmul.f32 %v3663, %v3670
        %v3674 = vmul.f32 %v3664, %v3670
        %v3675 = vmul.f32 %v3665, %v3670
        %v3677 = vlaneseq
        %v3678 = vshrl.u32 %v3677, 7
        %v3679 = vsub.s32 0, %v3678
        %v3680 = vrot.slane %v3613, %v3679
        %v3682 = vadd.f32 %v3672, %v3680
        %v3683 = vadd.f32 %v3673, %v3680
        %v3684 = vadd.f32 %v3674, %v3680
        %v3685 = vadd.f32 %v3675, %v3680
        %s3686 = scalar_lea.vmem %s11, 32
        %v3687 = vld [vmem:[%s3686] sm:$0xff]
        %v3688 = vld [vmem:[%s3686 + $0x8] sm:$0xff]
        %v3689 = vld [vmem:[%s3686 + $0x10] sm:$0xff]
        %v3690 = vld [vmem:[%s3686 + $0x18] sm:$0xff]
        %s3691 = scalar_lea.vmem [#allocation14], 1
        %v3692 = vld [vmem:[%s3691] sm:$0x1]
        %v3694 = vlaneseq
        %v3695 = vshrl.u32 %v3694, 7
        %v3696 = vsub.s32 0, %v3695
        %v3697 = vrot.slane %v3692, %v3696
        %v3700 = vsel %vm673, %v3682, 0
        %v3703 = vsel %vm673, %v3683, 0
        %v3706 = vsel %vm673, %v3684, 0
        %v3709 = vsel %vm673, %v3685, 0
        %3711 = vmatprep.subr.mxu0 0.0
        %3712 = vmatpush1.msra.mxu0 %v3687
        %3713 = vmatprep.subr.mxu0 0.0
        %3714 = vmatpush1.msra.mxu0 %v3688
        %3715 = vmatprep.subr.mxu0 0.0
        %3716 = vmatpush1.msra.mxu0 %v3689
        %3717 = vmatprep.subr.mxu0 0.0
        %3718 = vmatpush1.msra.mxu0 %v3690
        %3719 = vmatprep.subr.mxu0 0.0
        %3720 = vmatpush1.msra.mxu0 0.0
        %3721 = vmatprep.subr.mxu0 0.0
        %3722 = vmatpush1.msra.mxu0 0.0
        %3723 = vmatprep.subr.mxu0 0.0
        %3724 = vmatpush1.msra.mxu0 0.0
        %3725 = vmatprep.subr.mxu0 0.0
        %3726 = vmatpush1.msra.mxu0 0.0
        %3727 = vmatprep.subr.mxu0 0.0
        %3728 = vmatpush1.msra.mxu0 0.0
        %3729 = vmatprep.subr.mxu0 0.0
        %3730 = vmatpush1.msra.mxu0 0.0
        %3731 = vmatprep.subr.mxu0 0.0
        %3732 = vmatpush1.msra.mxu0 0.0
        %3733 = vmatprep.subr.mxu0 0.0
        %3734 = vmatpush1.msra.mxu0 0.0
        %3735 = vmatprep.subr.mxu0 0.0
        %3736 = vmatpush1.msra.mxu0 0.0
        %3737 = vmatprep.subr.mxu0 0.0
        %3738 = vmatpush1.msra.mxu0 0.0
        %3739 = vmatprep.subr.mxu0 0.0
        %3740 = vmatpush1.msra.mxu0 0.0
        %3741 = vmatprep.subr.mxu0 0.0
        %3742 = vmatpush1.msra.mxu0 0.0
        %3743 = vmatprep.subr.mxu0 0.0
        %3744 = vmatpush1.msra.mxu0 0.0
        %3745 = vmatprep.subr.mxu0 0.0
        %3746 = vmatpush1.msra.mxu0 0.0
        %3747 = vmatprep.subr.mxu0 0.0
        %3748 = vmatpush1.msra.mxu0 0.0
        %3749 = vmatprep.subr.mxu0 0.0
        %3750 = vmatpush1.msra.mxu0 0.0
        %3751 = vmatprep.subr.mxu0 0.0
        %3752 = vmatpush1.msra.mxu0 0.0
        %3753 = vmatprep.subr.mxu0 0.0
        %3754 = vmatpush1.msra.mxu0 0.0
        %3755 = vmatprep.subr.mxu0 0.0
        %3756 = vmatpush1.msra.mxu0 0.0
        %3757 = vmatprep.subr.mxu0 0.0
        %3758 = vmatpush1.msra.mxu0 0.0
        %3759 = vmatprep.subr.mxu0 0.0
        %3760 = vmatpush1.msra.mxu0 0.0
        %3761 = vmatprep.subr.mxu0 0.0
        %3762 = vmatpush1.msra.mxu0 0.0
        %3763 = vmatprep.subr.mxu0 0.0
        %3764 = vmatpush1.msra.mxu0 0.0
        %3765 = vmatprep.subr.mxu0 0.0
        %3766 = vmatpush1.msra.mxu0 0.0
        %3767 = vmatprep.subr.mxu0 0.0
        %3768 = vmatpush1.msra.mxu0 0.0
        %3769 = vmatprep.subr.mxu0 0.0
        %3770 = vmatpush1.msra.mxu0 0.0
        %3771 = vmatprep.subr.mxu0 0.0
        %3772 = vmatpush1.msra.mxu0 0.0
        %3773 = vmatprep.subr.mxu0 0.0
        %3774 = vmatpush1.msra.mxu0 0.0
        %3775 = vmatprep.mubr.f32.mxu0 0.0
        %3776 = vmatmul.mubr.f32.gmra.mrb[0].mxu0 %v3700
        %v3777 = vpop.f32.mrb[0].mxu0
        %v3778 = vadd.f32 %v3697, %v3777
        %v3779 = vpop.f32.mrb[0].mxu0
        %3780 = vmatprep.mubr.f32.mxu0 0.0
        %3781 = vmatmul.mubr.f32.gmra.mrb[0].mxu0 %v3703
        %v3782 = vpop.f32.mrb[0].mxu0
        %v3783 = vadd.f32 %v3697, %v3782
        %v3784 = vpop.f32.mrb[0].mxu0
        %3785 = vmatprep.mubr.f32.mxu0 0.0
        %3786 = vmatmul.mubr.f32.gmra.mrb[0].mxu0 %v3706
        %v3787 = vpop.f32.mrb[0].mxu0
        %v3788 = vadd.f32 %v3697, %v3787
        %v3789 = vpop.f32.mrb[0].mxu0
        %3790 = vmatprep.mubr.f32.mxu0 0.0
        %3791 = vmatmul.mubr.f32.gmra.mrb[0].mxu0 %v3709
        %v3792 = vpop.f32.mrb[0].mxu0
        %v3793 = vadd.f32 %v3697, %v3792
        %v3794 = vpop.f32.mrb[0].mxu0
        %3795 = vdwg.mxu0
        %v3796 = vmul.f32 %v3778, 0.5
        %v3797 = vmul.f32 %v3783, 0.5
        %v3798 = vmul.f32 %v3788, 0.5
        %v3799 = vmul.f32 %v3793, 0.5
        %v3800 = vmul.f32 %v3778, 0.70710677
        %v3801 = vmul.f32 %v3783, 0.70710677
        %v3802 = vmul.f32 %v3788, 0.70710677
        %v3803 = vmul.f32 %v3793, 0.70710677
        %v3804 = verf.f32.pop %v3800
        %v3805 = verf.f32.pop %v3801
        %v3806 = verf.f32.pop %v3802
        %v3807 = verf.f32.pop %v3803
        %v3808 = vadd.f32 %v3804, 1.0
        %v3809 = vadd.f32 %v3805, 1.0
        %v3810 = vadd.f32 %v3806, 1.0
        %v3811 = vadd.f32 %v3807, 1.0
        %v3812 = vmul.f32 %v3796, %v3808
        %v3813 = vmul.f32 %v3797, %v3809
        %v3814 = vmul.f32 %v3798, %v3810
        %v3815 = vmul.f32 %v3799, %v3811
        %s3816 = scalar_lea.vmem %s13, 64
        %v3817 = vld [vmem:[%s3816] sm:$0xff]
        %v3818 = vld [vmem:[%s3816 + $0x8] sm:$0xff]
        %v3819 = vld [vmem:[%s3816 + $0x10] sm:$0xff]
        %v3820 = vld [vmem:[%s3816 + $0x18] sm:$0xff]
        %v3821 = vld [vmem:[%s3816 + $0x20] sm:$0xff]
        %v3822 = vld [vmem:[%s3816 + $0x28] sm:$0xff]
        %v3823 = vld [vmem:[%s3816 + $0x30] sm:$0xff]
        %v3824 = vld [vmem:[%s3816 + $0x38] sm:$0xff]
        %s3825 = scalar_lea.vmem %s14, 1
        %v3826 = vld [vmem:[%s3825] sm:$0x1]
        %v3828 = vlaneseq
        %v3829 = vshrl.u32 %v3828, 7
        %v3830 = vsub.s32 0, %v3829
        %v3831 = vrot.slane %v3826, %v3830
        %v3834 = vsel %vm2102, %v3812, 0
        %v3837 = vsel %vm2102, %v3813, 0
        %v3840 = vsel %vm2102, %v3814, 0
        %v3843 = vsel %vm2102, %v3815, 0
        %3845 = vmatprep.subr.mxu0 0.0
        %3846 = vmatpush1.msra.mxu0 %v3817
        %3847 = vmatprep.subr.mxu0 0.0
        %3848 = vmatpush1.msra.mxu0 %v3818
        %3849 = vmatprep.subr.mxu0 0.0
        %3850 = vmatpush1.msra.mxu0 %v3819
        %3851 = vmatprep.subr.mxu0 0.0
        %3852 = vmatpush1.msra.mxu0 %v3820
        %3853 = vmatprep.subr.mxu0 0.0
        %3854 = vmatpush1.msra.mxu0 %v3821
        %3855 = vmatprep.subr.mxu0 0.0
        %3856 = vmatpush1.msra.mxu0 %v3822
        %3857 = vmatprep.subr.mxu0 0.0
        %3858 = vmatpush1.msra.mxu0 %v3823
        %3859 = vmatprep.subr.mxu0 0.0
        %3860 = vmatpush1.msra.mxu0 %v3824
        %3861 = vmatprep.subr.mxu0 0.0
        %3862 = vmatpush1.msra.mxu0 0.0
        %3863 = vmatprep.subr.mxu0 0.0
        %3864 = vmatpush1.msra.mxu0 0.0
        %3865 = vmatprep.subr.mxu0 0.0
        %3866 = vmatpush1.msra.mxu0 0.0
        %3867 = vmatprep.subr.mxu0 0.0
        %3868 = vmatpush1.msra.mxu0 0.0
        %3869 = vmatprep.subr.mxu0 0.0
        %3870 = vmatpush1.msra.mxu0 0.0
        %3871 = vmatprep.subr.mxu0 0.0
        %3872 = vmatpush1.msra.mxu0 0.0
        %3873 = vmatprep.subr.mxu0 0.0
        %3874 = vmatpush1.msra.mxu0 0.0
        %3875 = vmatprep.subr.mxu0 0.0
        %3876 = vmatpush1.msra.mxu0 0.0
        %3877 = vmatprep.subr.mxu0 0.0
        %3878 = vmatpush1.msra.mxu0 0.0
        %3879 = vmatprep.subr.mxu0 0.0
        %3880 = vmatpush1.msra.mxu0 0.0
        %3881 = vmatprep.subr.mxu0 0.0
        %3882 = vmatpush1.msra.mxu0 0.0
        %3883 = vmatprep.subr.mxu0 0.0
        %3884 = vmatpush1.msra.mxu0 0.0
        %3885 = vmatprep.subr.mxu0 0.0
        %3886 = vmatpush1.msra.mxu0 0.0
        %3887 = vmatprep.subr.mxu0 0.0
        %3888 = vmatpush1.msra.mxu0 0.0
        %3889 = vmatprep.subr.mxu0 0.0
        %3890 = vmatpush1.msra.mxu0 0.0
        %3891 = vmatprep.subr.mxu0 0.0
        %3892 = vmatpush1.msra.mxu0 0.0
        %3893 = vmatprep.subr.mxu0 0.0
        %3894 = vmatpush1.msra.mxu0 0.0
        %3895 = vmatprep.subr.mxu0 0.0
        %3896 = vmatpush1.msra.mxu0 0.0
        %3897 = vmatprep.subr.mxu0 0.0
        %3898 = vmatpush1.msra.mxu0 0.0
        %3899 = vmatprep.subr.mxu0 0.0
        %3900 = vmatpush1.msra.mxu0 0.0
        %3901 = vmatprep.subr.mxu0 0.0
        %3902 = vmatpush1.msra.mxu0 0.0
        %3903 = vmatprep.subr.mxu0 0.0
        %3904 = vmatpush1.msra.mxu0 0.0
        %3905 = vmatprep.subr.mxu0 0.0
        %3906 = vmatpush1.msra.mxu0 0.0
        %3907 = vmatprep.subr.mxu0 0.0
        %3908 = vmatpush1.msra.mxu0 0.0
        %3909 = vmatprep.mubr.f32.mxu0 0.0
        %3910 = vmatmul.mubr.f32.gmra.mrb[0].mxu0 %v3834
        %v3911 = vpop.f32.mrb[0].mxu0
        %v3912 = vadd.f32 %v3831, %v3911
        %v3913 = vpop.f32.mrb[0].mxu0
        %3914 = vmatprep.mubr.f32.mxu0 0.0
        %3915 = vmatmul.mubr.f32.gmra.mrb[0].mxu0 %v3837
        %v3916 = vpop.f32.mrb[0].mxu0
        %v3917 = vadd.f32 %v3831, %v3916
        %v3918 = vpop.f32.mrb[0].mxu0
        %3919 = vmatprep.mubr.f32.mxu0 0.0
        %3920 = vmatmul.mubr.f32.gmra.mrb[0].mxu0 %v3840
        %v3921 = vpop.f32.mrb[0].mxu0
        %v3922 = vadd.f32 %v3831, %v3921
        %v3923 = vpop.f32.mrb[0].mxu0
        %3924 = vmatprep.mubr.f32.mxu0 0.0
        %3925 = vmatmul.mubr.f32.gmra.mrb[0].mxu0 %v3843
        %v3926 = vpop.f32.mrb[0].mxu0
        %v3927 = vadd.f32 %v3831, %v3926
        %v3928 = vpop.f32.mrb[0].mxu0
        %3929 = vdwg.mxu0
        %s3930 = scalar_lea.vmem %s15, 32
        %v3931 = vld [vmem:[%s3930] sm:$0xff]
        %v3932 = vld [vmem:[%s3930 + $0x8] sm:$0xff]
        %v3933 = vld [vmem:[%s3930 + $0x10] sm:$0xff]
        %v3934 = vld [vmem:[%s3930 + $0x18] sm:$0xff]
        %s3935 = scalar_lea.vmem %s16, 1
        %v3936 = vld [vmem:[%s3935] sm:$0x1]
        %v3938 = vlaneseq
        %v3939 = vshrl.u32 %v3938, 7
        %v3940 = vsub.s32 0, %v3939
        %v3941 = vrot.slane %v3936, %v3940
        %v3944 = vsel %vm673, %v3912, 0
        %v3947 = vsel %vm673, %v3917, 0
        %v3950 = vsel %vm673, %v3922, 0
        %v3953 = vsel %vm673, %v3927, 0
        %3955 = vmatprep.subr.mxu0 0.0
        %3956 = vmatpush1.msra.mxu0 %v3931
        %3957 = vmatprep.subr.mxu0 0.0
        %3958 = vmatpush1.msra.mxu0 %v3932
        %3959 = vmatprep.subr.mxu0 0.0
        %3960 = vmatpush1.msra.mxu0 %v3933
        %3961 = vmatprep.subr.mxu0 0.0
        %3962 = vmatpush1.msra.mxu0 %v3934
        %3963 = vmatprep.subr.mxu0 0.0
        %3964 = vmatpush1.msra.mxu0 0.0
        %3965 = vmatprep.subr.mxu0 0.0
        %3966 = vmatpush1.msra.mxu0 0.0
        %3967 = vmatprep.subr.mxu0 0.0
        %3968 = vmatpush1.msra.mxu0 0.0
        %3969 = vmatprep.subr.mxu0 0.0
        %3970 = vmatpush1.msra.mxu0 0.0
        %3971 = vmatprep.subr.mxu0 0.0
        %3972 = vmatpush1.msra.mxu0 0.0
        %3973 = vmatprep.subr.mxu0 0.0
        %3974 = vmatpush1.msra.mxu0 0.0
        %3975 = vmatprep.subr.mxu0 0.0
        %3976 = vmatpush1.msra.mxu0 0.0
        %3977 = vmatprep.subr.mxu0 0.0
        %3978 = vmatpush1.msra.mxu0 0.0
        %3979 = vmatprep.subr.mxu0 0.0
        %3980 = vmatpush1.msra.mxu0 0.0
        %3981 = vmatprep.subr.mxu0 0.0
        %3982 = vmatpush1.msra.mxu0 0.0
        %3983 = vmatprep.subr.mxu0 0.0
        %3984 = vmatpush1.msra.mxu0 0.0
        %3985 = vmatprep.subr.mxu0 0.0
        %3986 = vmatpush1.msra.mxu0 0.0
        %3987 = vmatprep.subr.mxu0 0.0
        %3988 = vmatpush1.msra.mxu0 0.0
        %3989 = vmatprep.subr.mxu0 0.0
        %3990 = vmatpush1.msra.mxu0 0.0
        %3991 = vmatprep.subr.mxu0 0.0
        %3992 = vmatpush1.msra.mxu0 0.0
        %3993 = vmatprep.subr.mxu0 0.0
        %3994 = vmatpush1.msra.mxu0 0.0
        %3995 = vmatprep.subr.mxu0 0.0
        %3996 = vmatpush1.msra.mxu0 0.0
        %3997 = vmatprep.subr.mxu0 0.0
        %3998 = vmatpush1.msra.mxu0 0.0
        %3999 = vmatprep.subr.mxu0 0.0
        %4000 = vmatpush1.msra.mxu0 0.0
        %4001 = vmatprep.subr.mxu0 0.0
        %4002 = vmatpush1.msra.mxu0 0.0
        %4003 = vmatprep.subr.mxu0 0.0
        %4004 = vmatpush1.msra.mxu0 0.0
        %4005 = vmatprep.subr.mxu0 0.0
        %4006 = vmatpush1.msra.mxu0 0.0
        %4007 = vmatprep.subr.mxu0 0.0
        %4008 = vmatpush1.msra.mxu0 0.0
        %4009 = vmatprep.subr.mxu0 0.0
        %4010 = vmatpush1.msra.mxu0 0.0
        %4011 = vmatprep.subr.mxu0 0.0
        %4012 = vmatpush1.msra.mxu0 0.0
        %4013 = vmatprep.subr.mxu0 0.0
        %4014 = vmatpush1.msra.mxu0 0.0
        %4015 = vmatprep.subr.mxu0 0.0
        %4016 = vmatpush1.msra.mxu0 0.0
        %4017 = vmatprep.subr.mxu0 0.0
        %4018 = vmatpush1.msra.mxu0 0.0
        %4019 = vmatprep.mubr.f32.mxu0 0.0
        %4020 = vmatmul.mubr.f32.gmra.mrb[0].mxu0 %v3944
        %v4021 = vpop.f32.mrb[0].mxu0
        %v4022 = vadd.f32 %v3941, %v4021
        %v4023 = vpop.f32.mrb[0].mxu0
        %4024 = vmatprep.mubr.f32.mxu0 0.0
        %4025 = vmatmul.mubr.f32.gmra.mrb[0].mxu0 %v3947
        %v4026 = vpop.f32.mrb[0].mxu0
        %v4027 = vadd.f32 %v3941, %v4026
        %v4028 = vpop.f32.mrb[0].mxu0
        %4029 = vmatprep.mubr.f32.mxu0 0.0
        %4030 = vmatmul.mubr.f32.gmra.mrb[0].mxu0 %v3950
        %v4031 = vpop.f32.mrb[0].mxu0
        %v4032 = vadd.f32 %v3941, %v4031
        %v4033 = vpop.f32.mrb[0].mxu0
        %4034 = vmatprep.mubr.f32.mxu0 0.0
        %4035 = vmatmul.mubr.f32.gmra.mrb[0].mxu0 %v3953
        %v4036 = vpop.f32.mrb[0].mxu0
        %v4037 = vadd.f32 %v3941, %v4036
        %v4038 = vpop.f32.mrb[0].mxu0
        %4039 = vdwg.mxu0
        %v4040 = vsel %vm673, %v4022, -inf
        %4041 = vmax.xlane.f32.xlu0 %v4040
        %v4042 = vpop.xlane.xlu0 %4041
        %v4043 = vsel %vm673, %v4027, -inf
        %4044 = vmax.xlane.f32.xlu0 %v4043
        %v4045 = vpop.xlane.xlu0 %4044
        %v4046 = vsel %vm673, %v4032, -inf
        %4047 = vmax.xlane.f32.xlu0 %v4046
        %v4048 = vpop.xlane.xlu0 %4047
        %v4049 = vsel %vm673, %v4037, -inf
        %4050 = vmax.xlane.f32.xlu0 %v4049
        %v4051 = vpop.xlane.xlu0 %4050
        %v4052 = vsub.f32 %v4022, %v4042
        %v4053 = vsub.f32 %v4027, %v4045
        %v4054 = vsub.f32 %v4032, %v4048
        %v4055 = vsub.f32 %v4037, %v4051
        %v4056 = vmul.f32 %v4052, 1.442695
        %v4057 = vpow.pop %v4056
        %v4058 = vmul.f32 %v4053, 1.442695
        %v4059 = vpow.pop %v4058
        %v4060 = vmul.f32 %v4054, 1.442695
        %v4061 = vpow.pop %v4060
        %v4062 = vmul.f32 %v4055, 1.442695
        %v4063 = vpow.pop %v4062
        %v4064 = vsel %vm673, %v4057, 0.0
        %4065 = vadd.xlane.f32.xlu0 %v4064
        %v4066 = vpop.xlane.xlu0 %4065
        %v4067 = vsel %vm673, %v4059, 0.0
        %4068 = vadd.xlane.f32.xlu0 %v4067
        %v4069 = vpop.xlane.xlu0 %4068
        %v4070 = vsel %vm673, %v4061, 0.0
        %4071 = vadd.xlane.f32.xlu0 %v4070
        %v4072 = vpop.xlane.xlu0 %4071
        %v4073 = vsel %vm673, %v4063, 0.0
        %4074 = vadd.xlane.f32.xlu0 %v4073
        %v4075 = vpop.xlane.xlu0 %4074
        %v4076 = vrcp.pop %v4066
        %v4077 = vrcp.pop %v4069
        %v4078 = vrcp.pop %v4072
        %v4079 = vrcp.pop %v4075
        %v4080 = vmul.f32 %v4057, %v4076
        %v4081 = vmul.f32 %v4059, %v4077
        %v4082 = vmul.f32 %v4061, %v4078
        %v4083 = vmul.f32 %v4063, %v4079
        %v4084 = vmul.f32 %v3912, %v4080
        %v4085 = vmul.f32 %v3917, %v4081
        %v4086 = vmul.f32 %v3922, %v4082
        %v4087 = vmul.f32 %v3927, %v4083
        %v4088 = vadd.f32 %v4084, %v3606
        %v4089 = vadd.f32 %v4085, %v3607
        %v4090 = vadd.f32 %v4086, %v3608
        %v4091 = vadd.f32 %v4087, %v3609
        %v4092 = vmul.f32 %v4088, %v4088
        %v4093 = vmul.f32 %v4089, %v4089
        %v4094 = vmul.f32 %v4090, %v4090
        %v4095 = vmul.f32 %v4091, %v4091
        %v4096 = vsel %vm673, %v4092, 0.0
        %4097 = vadd.xlane.f32.xlu0 %v4096
        %v4098 = vpop.xlane.xlu0 %4097
        %v4099 = vsel %vm673, %v4093, 0.0
        %4100 = vadd.xlane.f32.xlu0 %v4099
        %v4101 = vpop.xlane.xlu0 %4100
        %v4102 = vsel %vm673, %v4094, 0.0
        %4103 = vadd.xlane.f32.xlu0 %v4102
        %v4104 = vpop.xlane.xlu0 %4103
        %v4105 = vsel %vm673, %v4095, 0.0
        %4106 = vadd.xlane.f32.xlu0 %v4105
        %v4107 = vpop.xlane.xlu0 %4106
        %v4108 = vadd.f32 %v4098, 0.0001
        %v4109 = vadd.f32 %v4101, 0.0001
        %v4110 = vadd.f32 %v4104, 0.0001
        %v4111 = vadd.f32 %v4107, 0.0001
        %v4112 = vrsqrt.pop %v4108
        %v4113 = vrsqrt.pop %v4109
        %v4114 = vrsqrt.pop %v4110
        %v4115 = vrsqrt.pop %v4111
        %v4116 = vmul.f32 %v4088, %v4112
        %v4117 = vmul.f32 %v4089, %v4113
        %v4118 = vmul.f32 %v4090, %v4114
        %v4119 = vmul.f32 %v4091, %v4115
        %s4120 = scalar_lea.vmem %s659, 32 [#allocation16]
        %4121 = vst.msk [vmem:[%s4120] sm:$0xff] %vm673, %v4116
        %4122 = vst.msk [vmem:[%s4120 + $0x8] sm:$0xff] %vm673, %v4117
        %4123 = vst.msk [vmem:[%s4120 + $0x10] sm:$0xff] %vm673, %v4118
        %4124 = vst.msk [vmem:[%s4120 + $0x18] sm:$0xff] %vm673, %v4119
        %s4125 = sand.u32 %s406, 1
        %s4126 = scalar_lea.sflag [#allocation4], %s4125
        %s4127 = sand.u32 %s406, 1
        %s4128 = smul.addr %s4127, 64
        %s4129 = scalar_lea.vmem [#allocation16], %s4128
        // Predicated region
        $region121: #{tpu_custom_call.1} parent=87 // pred_check
          %p4130 = pneg %p416
        $region122: #{tpu_custom_call.1} parent=87 // pred_check_branch
          %4132 = sbr.rel (%p4130) target = $region124
        $region123: #{tpu_custom_call.1} parent=87 // pred_region
          #allocation18 [shape = 'u32[6]{0}', space=smem, size = 0x18, scoped, tag = 'DMA stride descriptor']
          %s4133 = smul.u32 4, %s36
          %s4135 = ssub.s32 1024, 1024
          %4136 = vsyncadd %s4126, %s4135
          %s4137 = smul.addr %s4133, 128
          %s4138 = scalar_lea.hbm %s17, %s4137
          %s4140 = sshll.u32 1, 14
          %s4141 = sxor.u32 4294967295, %s4140
          %s4144 = sshll.u32 7, 18
          %s4145 = sxor.u32 4294967295, %s4144
          %s4146 = sand.u32 0, %s4145
          %s4148 = sor.u32 %s4146, 0
          %s4150 = sshll.u32 3, 24
          %s4151 = sxor.u32 4294967295, %s4150
          %s4152 = sand.u32 %s4148, %s4151
          %s4154 = sor.u32 %s4152, 0
          %s4155 = sshll.u32 %s4129, 4
          %s4156 = int_to_ptr.vmem [resolvable:$true] %s4155
          %4162 = sst [smem:[#allocation18]] 512
          %s4163 = scalar_lea.smem [#allocation18], 1
          %4164 = sst [smem:[%s4163]] 1024
          %s4165 = scalar_lea.smem [#allocation18], 2
          %4166 = sst [smem:[%s4165]] 4
          %s4167 = scalar_lea.smem [#allocation18], 3
          %4168 = sst [smem:[%s4167]] 128
          %s4169 = scalar_lea.smem [#allocation18], 4
          %4170 = sst [smem:[%s4169]] 128
          %s4171 = scalar_lea.smem [#allocation18], 5
          %4172 = sst [smem:[%s4171]] 8
          %4174 = dma.general %s4156, 1024, %s4138, %s4126, [#allocation17], [#allocation18], %s4154, 0
        $region124: #{tpu_custom_call.1} parent=87 // pred_fallthru
          _
      $region88: #{tpu_custom_call.1} parent=5 // pred_fallthru
        _
      %p4175 = scmp.le.s32.totalorder 2, %s31
      // Predicated region
      $region125: #{tpu_custom_call.1} parent=5 // pred_check
        %p4176 = pneg %p4175
      $region126: #{tpu_custom_call.1} parent=5 // pred_check_branch
        %4178 = sbr.rel (%p4176) target = $region128
      $region127: #{tpu_custom_call.1} parent=5 // pred_region
        %s4179 = ssub.s32 %s31, 2
        // Predicated region
        $region129: #{tpu_custom_call.1} parent=127 // pred_check
          %p4180 = pneg %p422
        $region130: #{tpu_custom_call.1} parent=127 // pred_check_branch
          %4182 = sbr.rel (%p4180) target = $region132
        $region131: #{tpu_custom_call.1} parent=127 // pred_region
          %s4183 = sand.u32 %s407, 1
          %s4184 = scalar_lea.sflag [#allocation4], %s4183
          %s4185 = sand.u32 %s407, 1
          %s4186 = smul.addr %s4185, 64
          %s4187 = scalar_lea.vmem [#allocation16], %s4186
          %4188 = dma.done %s4184, 1024
        $region132: #{tpu_custom_call.1} parent=127 // pred_fallthru
          _
      $region128: #{tpu_custom_call.1} parent=5 // pred_fallthru
        _
    $region6: #{tpu_custom_call.1} parent=1 // loop_footer
      %s35 = sadd.s32 1, %s31
    $region7: #{tpu_custom_call.1} parent=1 // loop_footer_branch
      %30 = sbr.rel target = $region3
    $region8: #{tpu_custom_call.1} parent=1 // loop_exit
      _
    %4189 = vsyncpa [#allocation3], 1
    %s4190 = scalar_lea.sflag [#allocation3], 1
    %4191 = vsyncpa %s4190, 1
    %4192 = vsyncpa [#allocation6], 1
    %4193 = vsyncpa [#allocation9], 1
    %4194 = vsyncpa [#allocation12], 1
    %4195 = vsyncpa [#allocation15], 1
    %4196 = vsyncpa [#allocation4], 1
    %s4197 = scalar_lea.sflag [#allocation4], 1
    %4198 = vsyncpa %s4197, 1

</llo_original>
